<compile_context>
chip_gen: v6e
topology: v6e:2x2x1
jax: 0.10.0
libtpu: 0.0.40
codegen_flags: <defaults>
</compile_context>

<pallas_src>
import jax
import jax.numpy as jnp
from jax.experimental import pallas as pl
from jax.experimental.pallas import tpu as pltpu


# --------------------------- parameter packing --------------------------------

def _pack_rows(entries, width, dtype, row_align):
    """Pack named 2-D arrays into one (R, width) buffer.  Each block starts at
    lane 0 and at a row offset that is a multiple of `row_align` (tile-aligned
    loads).  Returns (buffer, {name: (row_off, rows, cols)})."""
    blocks, offsets, off = [], {}, 0
    for name, a in entries:
        a = jnp.asarray(a, jnp.float32)
        r, c = a.shape
        assert c <= width, (name, a.shape, width)
        rp = ((r + row_align - 1) // row_align) * row_align
        buf = jnp.zeros((rp, width), dtype)
        buf = buf.at[:r, :c].set(a.astype(dtype))
        blocks.append(buf)
        offsets[name] = (off, r, c)
        off += rp
    return jnp.concatenate(blocks, axis=0), offsets


def init_params(key, latent_dim, output_dim):
    """Random PyTorch-layout params packed ONCE into three kernel buffers."""
    ks = iter(jax.random.split(key, 64))

    def nrm(shape, s=0.1):
        return s * jax.random.normal(next(ks), shape, jnp.float32)

    w_ent, w3_ent, b_ent = [], [], []
    enc_cfg, dec_cfg = [], []

    # ---- encoder: Conv1d + BatchNorm1d (running stats folded, eval mode) ----
    L = 128
    for li, (cin, cout, k) in enumerate(
            [(6, 16, 3), (16, 32, 3), (32, 64, 3), (64, 64, 5), (64, 64, 5)]):
        w = nrm((cout, cin, k))
        b = nrm((cout,), 0.01)
        gamma = 1.0 + nrm((cout,))
        beta = nrm((cout,))
        run_mean = jnp.zeros((cout,), jnp.float32)
        run_var = jnp.ones((cout,), jnp.float32)
        scale = gamma / jnp.sqrt(run_var + 1e-5)
        w = w * scale[:, None, None]
        b = (b - run_mean) * scale + beta
        for t in range(k):
            w_ent.append((f"e{li}_t{t}", w[:, :, t]))            # (Cout, Cin)
        b_ent.append((f"e{li}_b", b.reshape(cout, 1)))
        pad = 1
        enc_cfg.append((cin, cout, k, pad, L))
        lout = L + 2 * pad - k + 1
        lh = lout // 2
        rr = jnp.arange(lout - 1)[:, None]
        cc = jnp.arange(lh)[None, :]
        # MaxPool(2,2) even-column select (applied after pairwise max).
        w_ent.append((f"pool{li}", (rr == 2 * cc).astype(jnp.float32)))
        L = lh
    assert L == 2   # Flatten() -> 64*2 = 128 features for Linear(128, latent)

    # ---- latent heads: Flatten order (f = 2*c + l) folded via even/odd split
    wzm = nrm((latent_dim, 128)); bzm = nrm((latent_dim,), 0.01)
    wzv = nrm((latent_dim, 128)); bzv = nrm((latent_dim,), 0.01)
    w_all = jnp.concatenate([wzm, wzv], axis=0)                  # (2L, 128)
    w_ent.append(("wz_e", w_all[:, 0::2]))                       # (2L, 64)
    w_ent.append(("wz_o", w_all[:, 1::2]))
    b_ent.append(("bz", jnp.concatenate([bzm, bzv]).reshape(2 * latent_dim, 1)))
    # column -> lane-dense row (sum of eye-masked broadcast), no transpose op.
    w_ent.append(("eye2l", jnp.eye(2 * latent_dim, dtype=jnp.float32)))

    # ---- decoder Linear(latent,384) + Reshape(-1,16,24) + Upsample(126) -----
    wdec = nrm((384, latent_dim))
    bdec = nrm((384,), 0.01)
    w3_ent.append(("wdecT", wdec.T))                             # (latent, 384)
    r = jnp.arange(384)
    w3_ent.append(("smat",
                   (r[None, :] // 24 == jnp.arange(16)[:, None]).astype(jnp.float32)))
    w_ent.append(("m24",
                  (r[:, None] % 24 == jnp.arange(24)[None, :]).astype(jnp.float32)))
    b_ent.append(("b24", bdec.reshape(16, 24)))                  # bias, reshaped
    src = (jnp.arange(126) * 24) // 126                          # nearest index
    w_ent.append(("ups",
                  (jnp.arange(24)[:, None] == src[None, :]).astype(jnp.float32)))

    # ---- decoder ConvTranspose1d -> equivalent regular-conv taps ------------
    Ld = 126
    for li, (cin, cout, k, pt) in enumerate(
            [(16, 16, 5, 1), (16, 16, 3, 1), (16, 6, 3, 1)]):
        wt = nrm((cin, cout, k))                                 # ConvT layout
        wconv = jnp.flip(jnp.transpose(wt, (1, 0, 2)), axis=2)   # (Cout,Cin,K)
        for t in range(k):
            w_ent.append((f"d{li}_t{t}", wconv[:, :, t]))
        b_ent.append((f"d{li}_b", nrm((cout,), 0.01).reshape(cout, 1)))
        pad = k - 1 - pt                                         # ConvT == conv
        dec_cfg.append((cin, cout, k, pad, Ld))
        Ld = Ld + 2 * pad - k + 1
    assert Ld == 128

    # ---- classifier ----------------------------------------------------------
    w_ent.append(("wc1T", nrm((32, latent_dim)).T))              # (latent, 32)
    b_ent.append(("bc1", nrm((32,), 0.01).reshape(1, 32)))
    w_ent.append(("wc2T", nrm((output_dim, 32)).T))              # (32, out)
    b_ent.append(("bc2", nrm((output_dim,), 0.01).reshape(1, output_dim)))

    pw, offw = _pack_rows(w_ent, 128, jnp.bfloat16, 16)    # bf16 tile: 16 rows
    pw3, offw3 = _pack_rows(w3_ent, 384, jnp.bfloat16, 16)
    pb, offb = _pack_rows(b_ent, 128, jnp.float32, 8)      # f32 tile: 8 rows

    packed = {"pw": pw, "pw3": pw3, "pb": pb}
    meta = {"offw": offw, "offw3": offw3, "offb": offb,
            "latent": latent_dim, "out_dim": output_dim,
            "enc_cfg": enc_cfg, "dec_cfg": dec_cfg}
    return packed, meta


# ------------------------------ fused forward ---------------------------------

def make_forward(meta, samples_per_step=1):
    offw, offw3, offb = meta["offw"], meta["offw3"], meta["offb"]
    latent, out_dim = meta["latent"], meta["out_dim"]
    enc_cfg, dec_cfg = meta["enc_cfg"], meta["dec_cfg"]
    S = int(samples_per_step)
    STATS_W = 128
    assert 2 * latent + out_dim <= STATS_W

    f32, bf16 = jnp.float32, jnp.bfloat16

    def kernel(x_ref, eps_ref, pw_ref, pw3_ref, pb_ref,
               dec_ref, stats_ref, scr):

        def W(name):                       # bf16 weights (width-128 buffer)
            o, r, c = offw[name]
            return pw_ref[o:o + r, 0:c]

        def W3(name):                      # bf16 weights (width-384 buffer)
            o, r, c = offw3[name]
            return pw3_ref[o:o + r, 0:c]

        def Bv(name):                      # f32 biases / constants
            o, r, c = offb[name]
            return pb_ref[o:o + r, 0:c]

        def leaky(a):
            return jnp.where(a >= 0.0, a, 0.01 * a)

        def conv(x, prefix, cfg, lrelu):
            """Conv1d (stride 1) on a (Cin, Lin) f32 activation via K tap
            matmuls; zero padding via slice stores into the shared scratch."""
            cin, cout, k, pad, lin = cfg
            assert x.shape == (cin, lin)
            lp = lin + 2 * pad
            lout = lp - k + 1
            if pad:
                zedge = jnp.zeros((cin, pad), f32)
                scr[0:cin, 0:pad] = zedge
                scr[0:cin, lin + pad:lp] = zedge
            scr[0:cin, pad:pad + lin] = x
            acc = jnp.zeros((cout, lout), f32)
            for t in range(k):
                xt = scr[0:cin, t:t + lout].astype(bf16)
                acc = acc + jnp.dot(W(f"{prefix}_t{t}"), xt,
                                    preferred_element_type=f32)
            acc = acc + Bv(f"{prefix}_b")
            if lrelu:
                acc = leaky(acc)
            return acc, lout

        for s in range(S):                              # static unroll
            x = x_ref[s]                                # (6, 128) f32
            eps = eps_ref[s]                            # (1, latent) f32

            # -------- encoder: 5 x (Conv + BN(folded) + LeakyReLU + MaxPool)
            h = x
            for li, cfg in enumerate(enc_cfg):
                a, lout = conv(h, f"e{li}", cfg, lrelu=True)
                y2 = jnp.maximum(a[:, :lout - 1], a[:, 1:lout])   # pairwise max
                h = jnp.dot(y2.astype(bf16), W(f"pool{li}"),      # even select
                            preferred_element_type=f32)
            # h: (64, 2); Flatten order f = 2*c + l is folded into wz_e / wz_o.

            # -------- latent heads + reparameterize ------------------------
            zz = (jnp.dot(W("wz_e"), h[:, 0:1].astype(bf16),
                          preferred_element_type=f32)
                  + jnp.dot(W("wz_o"), h[:, 1:2].astype(bf16),
                            preferred_element_type=f32)
                  + Bv("bz"))                                     # (2L, 1)
            # Column -> lane-dense row: eye-masked broadcast + sublane sum.
            zz_row = jnp.sum(W("eye2l") * zz, axis=0, keepdims=True)  # (1, 2L)
            zm = zz_row[:, 0:latent]
            zlv = zz_row[:, latent:2 * latent]
            z = zm + eps * jnp.exp(0.5 * zlv)                     # (1, latent)
            zb = z.astype(bf16)

            # -------- decoder -----------------------------------------------
            dec = jnp.dot(zb, W3("wdecT"),
                          preferred_element_type=f32)             # (1, 384)
            smd = (W3("smat") * dec).astype(bf16)                 # (16, 384)
            d24 = jnp.dot(smd, W("m24"),
                          preferred_element_type=f32) + Bv("b24")  # (16, 24)
            d = jnp.dot(d24.astype(bf16), W("ups"),
                        preferred_element_type=f32)               # (16, 126)
            n_dec = len(dec_cfg)
            for li, cfg in enumerate(dec_cfg):
                d, _ = conv(d, f"d{li}", cfg, lrelu=(li < n_dec - 1))
            dec_ref[s] = d                                        # (6, 128)

            # -------- classifier --------------------------------------------
            c1 = leaky(jnp.dot(zb, W("wc1T"),
                               preferred_element_type=f32) + Bv("bc1"))  # (1,32)
            # Dropout(0.25): identity in eval-mode forward.
            logits = jnp.dot(c1.astype(bf16), W("wc2T"),
                             preferred_element_type=f32) + Bv("bc2")     # (1,out)
            logits = logits - jnp.max(logits, axis=-1, keepdims=True)
            e = jnp.exp(logits)
            probs = e / jnp.sum(e, axis=-1, keepdims=True)

            # -------- lane-dense small outputs: [zm | zlv | probs | 0...] ----
            stats_ref[s] = jnp.zeros((1, STATS_W), f32)
            stats_ref[s, :, 0:latent] = zm
            stats_ref[s, :, latent:2 * latent] = zlv
            stats_ref[s, :, 2 * latent:2 * latent + out_dim] = probs

    def forward(packed, x, eps):
        B = x.shape[0]
        assert x.shape[2] == 128, "encoder Flatten() -> Linear(128) needs L=128"
        assert B % S == 0
        pw, pw3, pb = packed["pw"], packed["pw3"], packed["pb"]

        def batch_spec(shape):
            nd = len(shape)
            return pl.BlockSpec((S,) + tuple(shape[1:]),
                                lambda i, _nd=nd: (i,) + (0,) * (_nd - 1))

        def full_spec(a):
            nd = a.ndim
            return pl.BlockSpec(tuple(a.shape),
                                lambda i, _nd=nd: (0,) * _nd)

        out_shape = (jax.ShapeDtypeStruct((B, 6, 128), jnp.float32),
                     jax.ShapeDtypeStruct((B, 1, STATS_W), jnp.float32))

        decoded, stats = pl.pallas_call(
            kernel,
            grid=(B // S,),
            in_specs=[batch_spec(x.shape), batch_spec(eps.shape),
                      full_spec(pw), full_spec(pw3), full_spec(pb)],
            out_specs=(batch_spec((B, 6, 128)),
                       batch_spec((B, 1, STATS_W))),
            out_shape=out_shape,
            scratch_shapes=[pltpu.VMEM((64, 132), jnp.float32)],  # pad scratch
            compiler_params=pltpu.CompilerParams(
                dimension_semantics=("parallel",)),
        )(x, eps, pw, pw3, pb)

        z_mean = stats[:, 0, 0:latent]
        z_log_var = stats[:, 0, latent:2 * latent]
        class_probs = stats[:, 0, 2 * latent:2 * latent + out_dim]
        return decoded, z_mean, z_log_var, class_probs

    return forward


def _single_tensorcore_device():
    """True for v5e / v6e (1 TensorCore per chip): fold batch into one grid
    step.  On v7x (2 TCs) keep one sample per 'parallel' grid step."""
    try:
        kind = jax.devices()[0].device_kind.lower()
    except Exception:
        return False
    return ("v5e" in kind) or ("v5 lite" in kind) or ("v5lite" in kind) \
        or ("v6" in kind)


# ----------------------------------- main -------------------------------------

if __name__ == "__main__":
    latent_dim, output_dim = 16, 8
    B, L = 2, 128     # encoder Flatten() -> Linear(128, latent) requires L=128

    root = jax.random.PRNGKey(0)
    kp, kx, ke = jax.random.split(root, 3)

    packed, meta = init_params(kp, latent_dim, output_dim)
    S = B if _single_tensorcore_device() else 1
    fwd = jax.jit(make_forward(meta, samples_per_step=S))

    x = jax.random.normal(kx, (B, 6, L), jnp.float32)
    eps = jax.random.normal(ke, (B, 1, latent_dim), jnp.float32)  # reparam noise

    decoded, z_mean, z_log_var, class_probs = fwd(packed, x, eps)
    jax.block_until_ready((decoded, z_mean, z_log_var, class_probs))

    assert decoded.shape == (B, 6, 128)
    assert z_mean.shape == (B, latent_dim)
    assert z_log_var.shape == (B, latent_dim)
    assert class_probs.shape == (B, output_dim)
    assert bool(jnp.all(jnp.isfinite(decoded)))
    assert bool(jnp.all(jnp.isfinite(class_probs)))
    assert bool(jnp.allclose(jnp.sum(class_probs, axis=1), 1.0, atol=1e-4))

    print("KERNEL_OK")
</pallas_src>

<mosaic_0001>
module attributes {stable_mosaic.version = 11 : i64} {
  func.func @kernel(%arg0: i32, %arg1: memref<1x6x128xf32, #tpu.memory_space<vmem>>, %arg2: memref<1x1x16xf32, #tpu.memory_space<vmem>>, %arg3: memref<1968x128xbf16, #tpu.memory_space<vmem>>, %arg4: memref<32x384xbf16, #tpu.memory_space<vmem>>, %arg5: memref<344x128xf32, #tpu.memory_space<vmem>>, %arg6: memref<1x6x128xf32, #tpu.memory_space<vmem>>, %arg7: memref<1x1x128xf32, #tpu.memory_space<vmem>>, %arg8: memref<64x132xf32, #tpu.memory_space<vmem>>) attributes {dimension_semantics = [#tpu.dimension_semantics<parallel>], iteration_bounds = array<i64: 2>, scalar_prefetch = 0 : i64, scratch_operands = 1 : i64, tpu.core_type = #tpu.core_type<tc>, window_params = [{transform_indices = @transform_0, window_bounds = array<i64: 1, 6, 128>}, {transform_indices = @transform_1, window_bounds = array<i64: 1, 1, 16>}, {pipeline_mode = #tpu.pipeline_mode<synchronous>, transform_indices = @transform_2, window_bounds = array<i64: 1968, 128>}, {pipeline_mode = #tpu.pipeline_mode<synchronous>, transform_indices = @transform_3, window_bounds = array<i64: 32, 384>}, {pipeline_mode = #tpu.pipeline_mode<synchronous>, transform_indices = @transform_4, window_bounds = array<i64: 344, 128>}, {transform_indices = @transform_5, window_bounds = array<i64: 1, 6, 128>}, {transform_indices = @transform_6, window_bounds = array<i64: 1, 1, 128>}]} {
    %c0 = arith.constant 0 : index
    %c0_0 = arith.constant 0 : index
    %c0_1 = arith.constant 0 : index
    %0 = vector.load %arg1[%c0, %c0_0, %c0_1] : memref<1x6x128xf32, #tpu.memory_space<vmem>>, vector<1x6x128xf32>
    %1 = vector.shape_cast %0 : vector<1x6x128xf32> to vector<6x128xf32>
    %c0_2 = arith.constant 0 : index
    %c0_3 = arith.constant 0 : index
    %c0_4 = arith.constant 0 : index
    %2 = vector.load %arg2[%c0_2, %c0_3, %c0_4] : memref<1x1x16xf32, #tpu.memory_space<vmem>>, vector<1x1x16xf32>
    %3 = vector.shape_cast %2 : vector<1x1x16xf32> to vector<1x16xf32>
    %cst = arith.constant 0.000000e+00 : f32
    %4 = vector.broadcast %cst : f32 to vector<6x1xf32>
    %c0_5 = arith.constant 0 : index
    %c0_6 = arith.constant 0 : index
    %5 = vector.load %arg8[%c0_5, %c0_6] : memref<64x132xf32, #tpu.memory_space<vmem>>, vector<6x1xf32>
    tpu.vector_store %arg8[%c0_5, %c0_6], %4 {strides = array<i32>} : memref<64x132xf32, #tpu.memory_space<vmem>>, vector<6x1xf32>,
    %c0_7 = arith.constant 0 : index
    %c129 = arith.constant 129 : index
    %6 = vector.load %arg8[%c0_7, %c129] : memref<64x132xf32, #tpu.memory_space<vmem>>, vector<6x1xf32>
    tpu.vector_store %arg8[%c0_7, %c129], %4 {strides = array<i32>} : memref<64x132xf32, #tpu.memory_space<vmem>>, vector<6x1xf32>,
    %c0_8 = arith.constant 0 : index
    %c1 = arith.constant 1 : index
    %7 = vector.load %arg8[%c0_8, %c1] : memref<64x132xf32, #tpu.memory_space<vmem>>, vector<6x128xf32>
    tpu.vector_store %arg8[%c0_8, %c1], %1 {strides = array<i32>} : memref<64x132xf32, #tpu.memory_space<vmem>>, vector<6x128xf32>,
    %cst_9 = arith.constant 0.000000e+00 : f32
    %8 = vector.broadcast %cst_9 : f32 to vector<16x128xf32>
    %c0_10 = arith.constant 0 : index
    %c0_11 = arith.constant 0 : index
    %9 = vector.load %arg8[%c0_10, %c0_11] : memref<64x132xf32, #tpu.memory_space<vmem>>, vector<6x128xf32>
    %10 = arith.truncf %9 : vector<6x128xf32> to vector<6x128xbf16>
    %c0_12 = arith.constant 0 : index
    %c0_13 = arith.constant 0 : index
    %11 = vector.load %arg3[%c0_12, %c0_13] : memref<1968x128xbf16, #tpu.memory_space<vmem>>, vector<16x6xbf16>
    %cst_14 = arith.constant dense<0.000000e+00> : vector<16x128xf32>
    %12 = tpu.matmul %11, %10, %cst_14 {dimension_numbers = #tpu.dot_dimension_numbers<[1], [0], [0], [1], [0, 0, 1, 1], [], []>} : vector<16x6xbf16>, vector<6x128xbf16>, vector<16x128xf32> -> vector<16x128xf32>
    %13 = arith.addf %8, %12 : vector<16x128xf32>
    %c0_15 = arith.constant 0 : index
    %c1_16 = arith.constant 1 : index
    %14 = vector.load %arg8[%c0_15, %c1_16] : memref<64x132xf32, #tpu.memory_space<vmem>>, vector<6x128xf32>
    %15 = arith.truncf %14 : vector<6x128xf32> to vector<6x128xbf16>
    %c16 = arith.constant 16 : index
    %c0_17 = arith.constant 0 : index
    %16 = vector.load %arg3[%c16, %c0_17] : memref<1968x128xbf16, #tpu.memory_space<vmem>>, vector<16x6xbf16>
    %cst_18 = arith.constant dense<0.000000e+00> : vector<16x128xf32>
    %17 = tpu.matmul %16, %15, %cst_18 {dimension_numbers = #tpu.dot_dimension_numbers<[1], [0], [0], [1], [0, 0, 1, 1], [], []>} : vector<16x6xbf16>, vector<6x128xbf16>, vector<16x128xf32> -> vector<16x128xf32>
    %18 = arith.addf %13, %17 : vector<16x128xf32>
    %c0_19 = arith.constant 0 : index
    %c2 = arith.constant 2 : index
    %19 = vector.load %arg8[%c0_19, %c2] : memref<64x132xf32, #tpu.memory_space<vmem>>, vector<6x128xf32>
    %20 = arith.truncf %19 : vector<6x128xf32> to vector<6x128xbf16>
    %c32 = arith.constant 32 : index
    %c0_20 = arith.constant 0 : index
    %21 = vector.load %arg3[%c32, %c0_20] : memref<1968x128xbf16, #tpu.memory_space<vmem>>, vector<16x6xbf16>
    %cst_21 = arith.constant dense<0.000000e+00> : vector<16x128xf32>
    %22 = tpu.matmul %21, %20, %cst_21 {dimension_numbers = #tpu.dot_dimension_numbers<[1], [0], [0], [1], [0, 0, 1, 1], [], []>} : vector<16x6xbf16>, vector<6x128xbf16>, vector<16x128xf32> -> vector<16x128xf32>
    %23 = arith.addf %18, %22 : vector<16x128xf32>
    %c0_22 = arith.constant 0 : index
    %c0_23 = arith.constant 0 : index
    %24 = vector.load %arg5[%c0_22, %c0_23] : memref<344x128xf32, #tpu.memory_space<vmem>>, vector<16x1xf32>
    %25 = vector.broadcast %24 : vector<16x1xf32> to vector<16x128xf32>
    %26 = arith.addf %23, %25 : vector<16x128xf32>
    %cst_24 = arith.constant 0.000000e+00 : f32
    %27 = vector.broadcast %cst_24 : f32 to vector<16x128xf32>
    %28 = arith.cmpf oge, %26, %27 : vector<16x128xf32>
    %cst_25 = arith.constant 0.00999999977 : f32
    %29 = vector.broadcast %cst_25 : f32 to vector<16x128xf32>
    %30 = arith.mulf %29, %26 : vector<16x128xf32>
    %31 = arith.select %28, %26, %30 : vector<16x128xi1>, vector<16x128xf32>
    %32 = vector.extract_strided_slice %31 {offsets = [0, 0], sizes = [16, 127], strides = [1, 1]} : vector<16x128xf32> to vector<16x127xf32>
    %33 = vector.extract_strided_slice %31 {offsets = [0, 1], sizes = [16, 127], strides = [1, 1]} : vector<16x128xf32> to vector<16x127xf32>
    %34 = arith.maximumf %32, %33 : vector<16x127xf32>
    %35 = arith.truncf %34 : vector<16x127xf32> to vector<16x127xbf16>
    %c48 = arith.constant 48 : index
    %c0_26 = arith.constant 0 : index
    %36 = vector.load %arg3[%c48, %c0_26] : memref<1968x128xbf16, #tpu.memory_space<vmem>>, vector<127x64xbf16>
    %cst_27 = arith.constant dense<0.000000e+00> : vector<16x64xf32>
    %37 = tpu.matmul %35, %36, %cst_27 {dimension_numbers = #tpu.dot_dimension_numbers<[1], [0], [0], [1], [0, 0, 1, 1], [], []>} : vector<16x127xbf16>, vector<127x64xbf16>, vector<16x64xf32> -> vector<16x64xf32>
    %cst_28 = arith.constant 0.000000e+00 : f32
    %38 = vector.broadcast %cst_28 : f32 to vector<16x1xf32>
    %c0_29 = arith.constant 0 : index
    %c0_30 = arith.constant 0 : index
    %39 = vector.load %arg8[%c0_29, %c0_30] : memref<64x132xf32, #tpu.memory_space<vmem>>, vector<16x1xf32>
    tpu.vector_store %arg8[%c0_29, %c0_30], %38 {strides = array<i32>} : memref<64x132xf32, #tpu.memory_space<vmem>>, vector<16x1xf32>,
    %c0_31 = arith.constant 0 : index
    %c65 = arith.constant 65 : index
    %40 = vector.load %arg8[%c0_31, %c65] : memref<64x132xf32, #tpu.memory_space<vmem>>, vector<16x1xf32>
    tpu.vector_store %arg8[%c0_31, %c65], %38 {strides = array<i32>} : memref<64x132xf32, #tpu.memory_space<vmem>>, vector<16x1xf32>,
    %c0_32 = arith.constant 0 : index
    %c1_33 = arith.constant 1 : index
    %41 = vector.load %arg8[%c0_32, %c1_33] : memref<64x132xf32, #tpu.memory_space<vmem>>, vector<16x64xf32>
    tpu.vector_store %arg8[%c0_32, %c1_33], %37 {strides = array<i32>} : memref<64x132xf32, #tpu.memory_space<vmem>>, vector<16x64xf32>,
    %cst_34 = arith.constant 0.000000e+00 : f32
    %42 = vector.broadcast %cst_34 : f32 to vector<32x64xf32>
    %c0_35 = arith.constant 0 : index
    %c0_36 = arith.constant 0 : index
    %43 = vector.load %arg8[%c0_35, %c0_36] : memref<64x132xf32, #tpu.memory_space<vmem>>, vector<16x64xf32>
    %44 = arith.truncf %43 : vector<16x64xf32> to vector<16x64xbf16>
    %c176 = arith.constant 176 : index
    %c0_37 = arith.constant 0 : index
    %45 = vector.load %arg3[%c176, %c0_37] : memref<1968x128xbf16, #tpu.memory_space<vmem>>, vector<32x16xbf16>
    %cst_38 = arith.constant dense<0.000000e+00> : vector<32x64xf32>
    %46 = tpu.matmul %45, %44, %cst_38 {dimension_numbers = #tpu.dot_dimension_numbers<[1], [0], [0], [1], [0, 0, 1, 1], [], []>} : vector<32x16xbf16>, vector<16x64xbf16>, vector<32x64xf32> -> vector<32x64xf32>
    %47 = arith.addf %42, %46 : vector<32x64xf32>
    %c0_39 = arith.constant 0 : index
    %c1_40 = arith.constant 1 : index
    %48 = vector.load %arg8[%c0_39, %c1_40] : memref<64x132xf32, #tpu.memory_space<vmem>>, vector<16x64xf32>
    %49 = arith.truncf %48 : vector<16x64xf32> to vector<16x64xbf16>
    %c208 = arith.constant 208 : index
    %c0_41 = arith.constant 0 : index
    %50 = vector.load %arg3[%c208, %c0_41] : memref<1968x128xbf16, #tpu.memory_space<vmem>>, vector<32x16xbf16>
    %cst_42 = arith.constant dense<0.000000e+00> : vector<32x64xf32>
    %51 = tpu.matmul %50, %49, %cst_42 {dimension_numbers = #tpu.dot_dimension_numbers<[1], [0], [0], [1], [0, 0, 1, 1], [], []>} : vector<32x16xbf16>, vector<16x64xbf16>, vector<32x64xf32> -> vector<32x64xf32>
    %52 = arith.addf %47, %51 : vector<32x64xf32>
    %c0_43 = arith.constant 0 : index
    %c2_44 = arith.constant 2 : index
    %53 = vector.load %arg8[%c0_43, %c2_44] : memref<64x132xf32, #tpu.memory_space<vmem>>, vector<16x64xf32>
    %54 = arith.truncf %53 : vector<16x64xf32> to vector<16x64xbf16>
    %c240 = arith.constant 240 : index
    %c0_45 = arith.constant 0 : index
    %55 = vector.load %arg3[%c240, %c0_45] : memref<1968x128xbf16, #tpu.memory_space<vmem>>, vector<32x16xbf16>
    %cst_46 = arith.constant dense<0.000000e+00> : vector<32x64xf32>
    %56 = tpu.matmul %55, %54, %cst_46 {dimension_numbers = #tpu.dot_dimension_numbers<[1], [0], [0], [1], [0, 0, 1, 1], [], []>} : vector<32x16xbf16>, vector<16x64xbf16>, vector<32x64xf32> -> vector<32x64xf32>
    %57 = arith.addf %52, %56 : vector<32x64xf32>
    %c16_47 = arith.constant 16 : index
    %c0_48 = arith.constant 0 : index
    %58 = vector.load %arg5[%c16_47, %c0_48] : memref<344x128xf32, #tpu.memory_space<vmem>>, vector<32x1xf32>
    %59 = vector.broadcast %58 : vector<32x1xf32> to vector<32x64xf32>
    %60 = arith.addf %57, %59 : vector<32x64xf32>
    %cst_49 = arith.constant 0.000000e+00 : f32
    %61 = vector.broadcast %cst_49 : f32 to vector<32x64xf32>
    %62 = arith.cmpf oge, %60, %61 : vector<32x64xf32>
    %cst_50 = arith.constant 0.00999999977 : f32
    %63 = vector.broadcast %cst_50 : f32 to vector<32x64xf32>
    %64 = arith.mulf %63, %60 : vector<32x64xf32>
    %65 = arith.select %62, %60, %64 : vector<32x64xi1>, vector<32x64xf32>
    %66 = vector.extract_strided_slice %65 {offsets = [0, 0], sizes = [32, 63], strides = [1, 1]} : vector<32x64xf32> to vector<32x63xf32>
    %67 = vector.extract_strided_slice %65 {offsets = [0, 1], sizes = [32, 63], strides = [1, 1]} : vector<32x64xf32> to vector<32x63xf32>
    %68 = arith.maximumf %66, %67 : vector<32x63xf32>
    %69 = arith.truncf %68 : vector<32x63xf32> to vector<32x63xbf16>
    %c272 = arith.constant 272 : index
    %c0_51 = arith.constant 0 : index
    %70 = vector.load %arg3[%c272, %c0_51] : memref<1968x128xbf16, #tpu.memory_space<vmem>>, vector<63x32xbf16>
    %cst_52 = arith.constant dense<0.000000e+00> : vector<32x32xf32>
    %71 = tpu.matmul %69, %70, %cst_52 {dimension_numbers = #tpu.dot_dimension_numbers<[1], [0], [0], [1], [0, 0, 1, 1], [], []>} : vector<32x63xbf16>, vector<63x32xbf16>, vector<32x32xf32> -> vector<32x32xf32>
    %cst_53 = arith.constant 0.000000e+00 : f32
    %72 = vector.broadcast %cst_53 : f32 to vector<32x1xf32>
    %c0_54 = arith.constant 0 : index
    %c0_55 = arith.constant 0 : index
    %73 = vector.load %arg8[%c0_54, %c0_55] : memref<64x132xf32, #tpu.memory_space<vmem>>, vector<32x1xf32>
    tpu.vector_store %arg8[%c0_54, %c0_55], %72 {strides = array<i32>} : memref<64x132xf32, #tpu.memory_space<vmem>>, vector<32x1xf32>,
    %c0_56 = arith.constant 0 : index
    %c33 = arith.constant 33 : index
    %74 = vector.load %arg8[%c0_56, %c33] : memref<64x132xf32, #tpu.memory_space<vmem>>, vector<32x1xf32>
    tpu.vector_store %arg8[%c0_56, %c33], %72 {strides = array<i32>} : memref<64x132xf32, #tpu.memory_space<vmem>>, vector<32x1xf32>,
    %c0_57 = arith.constant 0 : index
    %c1_58 = arith.constant 1 : index
    %75 = vector.load %arg8[%c0_57, %c1_58] : memref<64x132xf32, #tpu.memory_space<vmem>>, vector<32x32xf32>
    tpu.vector_store %arg8[%c0_57, %c1_58], %71 {strides = array<i32>} : memref<64x132xf32, #tpu.memory_space<vmem>>, vector<32x32xf32>,
    %cst_59 = arith.constant 0.000000e+00 : f32
    %76 = vector.broadcast %cst_59 : f32 to vector<64x32xf32>
    %c0_60 = arith.constant 0 : index
    %c0_61 = arith.constant 0 : index
    %77 = vector.load %arg8[%c0_60, %c0_61] : memref<64x132xf32, #tpu.memory_space<vmem>>, vector<32x32xf32>
    %78 = arith.truncf %77 : vector<32x32xf32> to vector<32x32xbf16>
    %c336 = arith.constant 336 : index
    %c0_62 = arith.constant 0 : index
    %79 = vector.load %arg3[%c336, %c0_62] : memref<1968x128xbf16, #tpu.memory_space<vmem>>, vector<64x32xbf16>
    %cst_63 = arith.constant dense<0.000000e+00> : vector<64x32xf32>
    %80 = tpu.matmul %79, %78, %cst_63 {dimension_numbers = #tpu.dot_dimension_numbers<[1], [0], [0], [1], [0, 0, 1, 1], [], []>} : vector<64x32xbf16>, vector<32x32xbf16>, vector<64x32xf32> -> vector<64x32xf32>
    %81 = arith.addf %76, %80 : vector<64x32xf32>
    %c0_64 = arith.constant 0 : index
    %c1_65 = arith.constant 1 : index
    %82 = vector.load %arg8[%c0_64, %c1_65] : memref<64x132xf32, #tpu.memory_space<vmem>>, vector<32x32xf32>
    %83 = arith.truncf %82 : vector<32x32xf32> to vector<32x32xbf16>
    %c400 = arith.constant 400 : index
    %c0_66 = arith.constant 0 : index
    %84 = vector.load %arg3[%c400, %c0_66] : memref<1968x128xbf16, #tpu.memory_space<vmem>>, vector<64x32xbf16>
    %cst_67 = arith.constant dense<0.000000e+00> : vector<64x32xf32>
    %85 = tpu.matmul %84, %83, %cst_67 {dimension_numbers = #tpu.dot_dimension_numbers<[1], [0], [0], [1], [0, 0, 1, 1], [], []>} : vector<64x32xbf16>, vector<32x32xbf16>, vector<64x32xf32> -> vector<64x32xf32>
    %86 = arith.addf %81, %85 : vector<64x32xf32>
    %c0_68 = arith.constant 0 : index
    %c2_69 = arith.constant 2 : index
    %87 = vector.load %arg8[%c0_68, %c2_69] : memref<64x132xf32, #tpu.memory_space<vmem>>, vector<32x32xf32>
    %88 = arith.truncf %87 : vector<32x32xf32> to vector<32x32xbf16>
    %c464 = arith.constant 464 : index
    %c0_70 = arith.constant 0 : index
    %89 = vector.load %arg3[%c464, %c0_70] : memref<1968x128xbf16, #tpu.memory_space<vmem>>, vector<64x32xbf16>
    %cst_71 = arith.constant dense<0.000000e+00> : vector<64x32xf32>
    %90 = tpu.matmul %89, %88, %cst_71 {dimension_numbers = #tpu.dot_dimension_numbers<[1], [0], [0], [1], [0, 0, 1, 1], [], []>} : vector<64x32xbf16>, vector<32x32xbf16>, vector<64x32xf32> -> vector<64x32xf32>
    %91 = arith.addf %86, %90 : vector<64x32xf32>
    %c48_72 = arith.constant 48 : index
    %c0_73 = arith.constant 0 : index
    %92 = vector.load %arg5[%c48_72, %c0_73] : memref<344x128xf32, #tpu.memory_space<vmem>>, vector<64x1xf32>
    %93 = vector.broadcast %92 : vector<64x1xf32> to vector<64x32xf32>
    %94 = arith.addf %91, %93 : vector<64x32xf32>
    %cst_74 = arith.constant 0.000000e+00 : f32
    %95 = vector.broadcast %cst_74 : f32 to vector<64x32xf32>
    %96 = arith.cmpf oge, %94, %95 : vector<64x32xf32>
    %cst_75 = arith.constant 0.00999999977 : f32
    %97 = vector.broadcast %cst_75 : f32 to vector<64x32xf32>
    %98 = arith.mulf %97, %94 : vector<64x32xf32>
    %99 = arith.select %96, %94, %98 : vector<64x32xi1>, vector<64x32xf32>
    %100 = vector.extract_strided_slice %99 {offsets = [0, 0], sizes = [64, 31], strides = [1, 1]} : vector<64x32xf32> to vector<64x31xf32>
    %101 = vector.extract_strided_slice %99 {offsets = [0, 1], sizes = [64, 31], strides = [1, 1]} : vector<64x32xf32> to vector<64x31xf32>
    %102 = arith.maximumf %100, %101 : vector<64x31xf32>
    %103 = arith.truncf %102 : vector<64x31xf32> to vector<64x31xbf16>
    %c528 = arith.constant 528 : index
    %c0_76 = arith.constant 0 : index
    %104 = vector.load %arg3[%c528, %c0_76] : memref<1968x128xbf16, #tpu.memory_space<vmem>>, vector<31x16xbf16>
    %cst_77 = arith.constant dense<0.000000e+00> : vector<64x16xf32>
    %105 = tpu.matmul %103, %104, %cst_77 {dimension_numbers = #tpu.dot_dimension_numbers<[1], [0], [0], [1], [0, 0, 1, 1], [], []>} : vector<64x31xbf16>, vector<31x16xbf16>, vector<64x16xf32> -> vector<64x16xf32>
    %cst_78 = arith.constant 0.000000e+00 : f32
    %106 = vector.broadcast %cst_78 : f32 to vector<64x1xf32>
    %c0_79 = arith.constant 0 : index
    %c0_80 = arith.constant 0 : index
    %107 = vector.load %arg8[%c0_79, %c0_80] : memref<64x132xf32, #tpu.memory_space<vmem>>, vector<64x1xf32>
    tpu.vector_store %arg8[%c0_79, %c0_80], %106 {strides = array<i32>} : memref<64x132xf32, #tpu.memory_space<vmem>>, vector<64x1xf32>,
    %c0_81 = arith.constant 0 : index
    %c17 = arith.constant 17 : index
    %108 = vector.load %arg8[%c0_81, %c17] : memref<64x132xf32, #tpu.memory_space<vmem>>, vector<64x1xf32>
    tpu.vector_store %arg8[%c0_81, %c17], %106 {strides = array<i32>} : memref<64x132xf32, #tpu.memory_space<vmem>>, vector<64x1xf32>,
    %c0_82 = arith.constant 0 : index
    %c1_83 = arith.constant 1 : index
    %109 = vector.load %arg8[%c0_82, %c1_83] : memref<64x132xf32, #tpu.memory_space<vmem>>, vector<64x16xf32>
    tpu.vector_store %arg8[%c0_82, %c1_83], %105 {strides = array<i32>} : memref<64x132xf32, #tpu.memory_space<vmem>>, vector<64x16xf32>,
    %cst_84 = arith.constant 0.000000e+00 : f32
    %110 = vector.broadcast %cst_84 : f32 to vector<64x14xf32>
    %c0_85 = arith.constant 0 : index
    %c0_86 = arith.constant 0 : index
    %111 = vector.load %arg8[%c0_85, %c0_86] : memref<64x132xf32, #tpu.memory_space<vmem>>, vector<64x14xf32>
    %112 = arith.truncf %111 : vector<64x14xf32> to vector<64x14xbf16>
    %c560 = arith.constant 560 : index
    %c0_87 = arith.constant 0 : index
    %113 = vector.load %arg3[%c560, %c0_87] : memref<1968x128xbf16, #tpu.memory_space<vmem>>, vector<64x64xbf16>
    %cst_88 = arith.constant dense<0.000000e+00> : vector<64x14xf32>
    %114 = tpu.matmul %113, %112, %cst_88 {dimension_numbers = #tpu.dot_dimension_numbers<[1], [0], [0], [1], [0, 0, 1, 1], [], []>} : vector<64x64xbf16>, vector<64x14xbf16>, vector<64x14xf32> -> vector<64x14xf32>
    %115 = arith.addf %110, %114 : vector<64x14xf32>
    %c0_89 = arith.constant 0 : index
    %c1_90 = arith.constant 1 : index
    %116 = vector.load %arg8[%c0_89, %c1_90] : memref<64x132xf32, #tpu.memory_space<vmem>>, vector<64x14xf32>
    %117 = arith.truncf %116 : vector<64x14xf32> to vector<64x14xbf16>
    %c624 = arith.constant 624 : index
    %c0_91 = arith.constant 0 : index
    %118 = vector.load %arg3[%c624, %c0_91] : memref<1968x128xbf16, #tpu.memory_space<vmem>>, vector<64x64xbf16>
    %cst_92 = arith.constant dense<0.000000e+00> : vector<64x14xf32>
    %119 = tpu.matmul %118, %117, %cst_92 {dimension_numbers = #tpu.dot_dimension_numbers<[1], [0], [0], [1], [0, 0, 1, 1], [], []>} : vector<64x64xbf16>, vector<64x14xbf16>, vector<64x14xf32> -> vector<64x14xf32>
    %120 = arith.addf %115, %119 : vector<64x14xf32>
    %c0_93 = arith.constant 0 : index
    %c2_94 = arith.constant 2 : index
    %121 = vector.load %arg8[%c0_93, %c2_94] : memref<64x132xf32, #tpu.memory_space<vmem>>, vector<64x14xf32>
    %122 = arith.truncf %121 : vector<64x14xf32> to vector<64x14xbf16>
    %c688 = arith.constant 688 : index
    %c0_95 = arith.constant 0 : index
    %123 = vector.load %arg3[%c688, %c0_95] : memref<1968x128xbf16, #tpu.memory_space<vmem>>, vector<64x64xbf16>
    %cst_96 = arith.constant dense<0.000000e+00> : vector<64x14xf32>
    %124 = tpu.matmul %123, %122, %cst_96 {dimension_numbers = #tpu.dot_dimension_numbers<[1], [0], [0], [1], [0, 0, 1, 1], [], []>} : vector<64x64xbf16>, vector<64x14xbf16>, vector<64x14xf32> -> vector<64x14xf32>
    %125 = arith.addf %120, %124 : vector<64x14xf32>
    %c0_97 = arith.constant 0 : index
    %c3 = arith.constant 3 : index
    %126 = vector.load %arg8[%c0_97, %c3] : memref<64x132xf32, #tpu.memory_space<vmem>>, vector<64x14xf32>
    %127 = arith.truncf %126 : vector<64x14xf32> to vector<64x14xbf16>
    %c752 = arith.constant 752 : index
    %c0_98 = arith.constant 0 : index
    %128 = vector.load %arg3[%c752, %c0_98] : memref<1968x128xbf16, #tpu.memory_space<vmem>>, vector<64x64xbf16>
    %cst_99 = arith.constant dense<0.000000e+00> : vector<64x14xf32>
    %129 = tpu.matmul %128, %127, %cst_99 {dimension_numbers = #tpu.dot_dimension_numbers<[1], [0], [0], [1], [0, 0, 1, 1], [], []>} : vector<64x64xbf16>, vector<64x14xbf16>, vector<64x14xf32> -> vector<64x14xf32>
    %130 = arith.addf %125, %129 : vector<64x14xf32>
    %c0_100 = arith.constant 0 : index
    %c4 = arith.constant 4 : index
    %131 = vector.load %arg8[%c0_100, %c4] : memref<64x132xf32, #tpu.memory_space<vmem>>, vector<64x14xf32>
    %132 = arith.truncf %131 : vector<64x14xf32> to vector<64x14xbf16>
    %c816 = arith.constant 816 : index
    %c0_101 = arith.constant 0 : index
    %133 = vector.load %arg3[%c816, %c0_101] : memref<1968x128xbf16, #tpu.memory_space<vmem>>, vector<64x64xbf16>
    %cst_102 = arith.constant dense<0.000000e+00> : vector<64x14xf32>
    %134 = tpu.matmul %133, %132, %cst_102 {dimension_numbers = #tpu.dot_dimension_numbers<[1], [0], [0], [1], [0, 0, 1, 1], [], []>} : vector<64x64xbf16>, vector<64x14xbf16>, vector<64x14xf32> -> vector<64x14xf32>
    %135 = arith.addf %130, %134 : vector<64x14xf32>
    %c112 = arith.constant 112 : index
    %c0_103 = arith.constant 0 : index
    %136 = vector.load %arg5[%c112, %c0_103] : memref<344x128xf32, #tpu.memory_space<vmem>>, vector<64x1xf32>
    %137 = vector.broadcast %136 : vector<64x1xf32> to vector<64x14xf32>
    %138 = arith.addf %135, %137 : vector<64x14xf32>
    %cst_104 = arith.constant 0.000000e+00 : f32
    %139 = vector.broadcast %cst_104 : f32 to vector<64x14xf32>
    %140 = arith.cmpf oge, %138, %139 : vector<64x14xf32>
    %cst_105 = arith.constant 0.00999999977 : f32
    %141 = vector.broadcast %cst_105 : f32 to vector<64x14xf32>
    %142 = arith.mulf %141, %138 : vector<64x14xf32>
    %143 = arith.select %140, %138, %142 : vector<64x14xi1>, vector<64x14xf32>
    %144 = vector.extract_strided_slice %143 {offsets = [0, 0], sizes = [64, 13], strides = [1, 1]} : vector<64x14xf32> to vector<64x13xf32>
    %145 = vector.extract_strided_slice %143 {offsets = [0, 1], sizes = [64, 13], strides = [1, 1]} : vector<64x14xf32> to vector<64x13xf32>
    %146 = arith.maximumf %144, %145 : vector<64x13xf32>
    %147 = arith.truncf %146 : vector<64x13xf32> to vector<64x13xbf16>
    %c880 = arith.constant 880 : index
    %c0_106 = arith.constant 0 : index
    %148 = vector.load %arg3[%c880, %c0_106] : memref<1968x128xbf16, #tpu.memory_space<vmem>>, vector<13x7xbf16>
    %cst_107 = arith.constant dense<0.000000e+00> : vector<64x7xf32>
    %149 = tpu.matmul %147, %148, %cst_107 {dimension_numbers = #tpu.dot_dimension_numbers<[1], [0], [0], [1], [0, 0, 1, 1], [], []>} : vector<64x13xbf16>, vector<13x7xbf16>, vector<64x7xf32> -> vector<64x7xf32>
    %cst_108 = arith.constant 0.000000e+00 : f32
    %150 = vector.broadcast %cst_108 : f32 to vector<64x1xf32>
    %c0_109 = arith.constant 0 : index
    %c0_110 = arith.constant 0 : index
    %151 = vector.load %arg8[%c0_109, %c0_110] : memref<64x132xf32, #tpu.memory_space<vmem>>, vector<64x1xf32>
    tpu.vector_store %arg8[%c0_109, %c0_110], %150 {strides = array<i32>} : memref<64x132xf32, #tpu.memory_space<vmem>>, vector<64x1xf32>,
    %c0_111 = arith.constant 0 : index
    %c8 = arith.constant 8 : index
    %152 = vector.load %arg8[%c0_111, %c8] : memref<64x132xf32, #tpu.memory_space<vmem>>, vector<64x1xf32>
    tpu.vector_store %arg8[%c0_111, %c8], %150 {strides = array<i32>} : memref<64x132xf32, #tpu.memory_space<vmem>>, vector<64x1xf32>,
    %c0_112 = arith.constant 0 : index
    %c1_113 = arith.constant 1 : index
    %153 = vector.load %arg8[%c0_112, %c1_113] : memref<64x132xf32, #tpu.memory_space<vmem>>, vector<64x7xf32>
    tpu.vector_store %arg8[%c0_112, %c1_113], %149 {strides = array<i32>} : memref<64x132xf32, #tpu.memory_space<vmem>>, vector<64x7xf32>,
    %cst_114 = arith.constant 0.000000e+00 : f32
    %154 = vector.broadcast %cst_114 : f32 to vector<64x5xf32>
    %c0_115 = arith.constant 0 : index
    %c0_116 = arith.constant 0 : index
    %155 = vector.load %arg8[%c0_115, %c0_116] : memref<64x132xf32, #tpu.memory_space<vmem>>, vector<64x5xf32>
    %156 = arith.truncf %155 : vector<64x5xf32> to vector<64x5xbf16>
    %c896 = arith.constant 896 : index
    %c0_117 = arith.constant 0 : index
    %157 = vector.load %arg3[%c896, %c0_117] : memref<1968x128xbf16, #tpu.memory_space<vmem>>, vector<64x64xbf16>
    %cst_118 = arith.constant dense<0.000000e+00> : vector<64x5xf32>
    %158 = tpu.matmul %157, %156, %cst_118 {dimension_numbers = #tpu.dot_dimension_numbers<[1], [0], [0], [1], [0, 0, 1, 1], [], []>} : vector<64x64xbf16>, vector<64x5xbf16>, vector<64x5xf32> -> vector<64x5xf32>
    %159 = arith.addf %154, %158 : vector<64x5xf32>
    %c0_119 = arith.constant 0 : index
    %c1_120 = arith.constant 1 : index
    %160 = vector.load %arg8[%c0_119, %c1_120] : memref<64x132xf32, #tpu.memory_space<vmem>>, vector<64x5xf32>
    %161 = arith.truncf %160 : vector<64x5xf32> to vector<64x5xbf16>
    %c960 = arith.constant 960 : index
    %c0_121 = arith.constant 0 : index
    %162 = vector.load %arg3[%c960, %c0_121] : memref<1968x128xbf16, #tpu.memory_space<vmem>>, vector<64x64xbf16>
    %cst_122 = arith.constant dense<0.000000e+00> : vector<64x5xf32>
    %163 = tpu.matmul %162, %161, %cst_122 {dimension_numbers = #tpu.dot_dimension_numbers<[1], [0], [0], [1], [0, 0, 1, 1], [], []>} : vector<64x64xbf16>, vector<64x5xbf16>, vector<64x5xf32> -> vector<64x5xf32>
    %164 = arith.addf %159, %163 : vector<64x5xf32>
    %c0_123 = arith.constant 0 : index
    %c2_124 = arith.constant 2 : index
    %165 = vector.load %arg8[%c0_123, %c2_124] : memref<64x132xf32, #tpu.memory_space<vmem>>, vector<64x5xf32>
    %166 = arith.truncf %165 : vector<64x5xf32> to vector<64x5xbf16>
    %c1024 = arith.constant 1024 : index
    %c0_125 = arith.constant 0 : index
    %167 = vector.load %arg3[%c1024, %c0_125] : memref<1968x128xbf16, #tpu.memory_space<vmem>>, vector<64x64xbf16>
    %cst_126 = arith.constant dense<0.000000e+00> : vector<64x5xf32>
    %168 = tpu.matmul %167, %166, %cst_126 {dimension_numbers = #tpu.dot_dimension_numbers<[1], [0], [0], [1], [0, 0, 1, 1], [], []>} : vector<64x64xbf16>, vector<64x5xbf16>, vector<64x5xf32> -> vector<64x5xf32>
    %169 = arith.addf %164, %168 : vector<64x5xf32>
    %c0_127 = arith.constant 0 : index
    %c3_128 = arith.constant 3 : index
    %170 = vector.load %arg8[%c0_127, %c3_128] : memref<64x132xf32, #tpu.memory_space<vmem>>, vector<64x5xf32>
    %171 = arith.truncf %170 : vector<64x5xf32> to vector<64x5xbf16>
    %c1088 = arith.constant 1088 : index
    %c0_129 = arith.constant 0 : index
    %172 = vector.load %arg3[%c1088, %c0_129] : memref<1968x128xbf16, #tpu.memory_space<vmem>>, vector<64x64xbf16>
    %cst_130 = arith.constant dense<0.000000e+00> : vector<64x5xf32>
    %173 = tpu.matmul %172, %171, %cst_130 {dimension_numbers = #tpu.dot_dimension_numbers<[1], [0], [0], [1], [0, 0, 1, 1], [], []>} : vector<64x64xbf16>, vector<64x5xbf16>, vector<64x5xf32> -> vector<64x5xf32>
    %174 = arith.addf %169, %173 : vector<64x5xf32>
    %c0_131 = arith.constant 0 : index
    %c4_132 = arith.constant 4 : index
    %175 = vector.load %arg8[%c0_131, %c4_132] : memref<64x132xf32, #tpu.memory_space<vmem>>, vector<64x5xf32>
    %176 = arith.truncf %175 : vector<64x5xf32> to vector<64x5xbf16>
    %c1152 = arith.constant 1152 : index
    %c0_133 = arith.constant 0 : index
    %177 = vector.load %arg3[%c1152, %c0_133] : memref<1968x128xbf16, #tpu.memory_space<vmem>>, vector<64x64xbf16>
    %cst_134 = arith.constant dense<0.000000e+00> : vector<64x5xf32>
    %178 = tpu.matmul %177, %176, %cst_134 {dimension_numbers = #tpu.dot_dimension_numbers<[1], [0], [0], [1], [0, 0, 1, 1], [], []>} : vector<64x64xbf16>, vector<64x5xbf16>, vector<64x5xf32> -> vector<64x5xf32>
    %179 = arith.addf %174, %178 : vector<64x5xf32>
    %c176_135 = arith.constant 176 : index
    %c0_136 = arith.constant 0 : index
    %180 = vector.load %arg5[%c176_135, %c0_136] : memref<344x128xf32, #tpu.memory_space<vmem>>, vector<64x1xf32>
    %181 = vector.broadcast %180 : vector<64x1xf32> to vector<64x5xf32>
    %182 = arith.addf %179, %181 : vector<64x5xf32>
    %cst_137 = arith.constant 0.000000e+00 : f32
    %183 = vector.broadcast %cst_137 : f32 to vector<64x5xf32>
    %184 = arith.cmpf oge, %182, %183 : vector<64x5xf32>
    %cst_138 = arith.constant 0.00999999977 : f32
    %185 = vector.broadcast %cst_138 : f32 to vector<64x5xf32>
    %186 = arith.mulf %185, %182 : vector<64x5xf32>
    %187 = arith.select %184, %182, %186 : vector<64x5xi1>, vector<64x5xf32>
    %188 = vector.extract_strided_slice %187 {offsets = [0, 0], sizes = [64, 4], strides = [1, 1]} : vector<64x5xf32> to vector<64x4xf32>
    %189 = vector.extract_strided_slice %187 {offsets = [0, 1], sizes = [64, 4], strides = [1, 1]} : vector<64x5xf32> to vector<64x4xf32>
    %190 = arith.maximumf %188, %189 : vector<64x4xf32>
    %191 = arith.truncf %190 : vector<64x4xf32> to vector<64x4xbf16>
    %c1216 = arith.constant 1216 : index
    %c0_139 = arith.constant 0 : index
    %192 = vector.load %arg3[%c1216, %c0_139] : memref<1968x128xbf16, #tpu.memory_space<vmem>>, vector<4x2xbf16>
    %cst_140 = arith.constant dense<0.000000e+00> : vector<64x2xf32>
    %193 = tpu.matmul %191, %192, %cst_140 {dimension_numbers = #tpu.dot_dimension_numbers<[1], [0], [0], [1], [0, 0, 1, 1], [], []>} : vector<64x4xbf16>, vector<4x2xbf16>, vector<64x2xf32> -> vector<64x2xf32>
    %c1232 = arith.constant 1232 : index
    %c0_141 = arith.constant 0 : index
    %194 = vector.load %arg3[%c1232, %c0_141] : memref<1968x128xbf16, #tpu.memory_space<vmem>>, vector<32x64xbf16>
    %195 = vector.extract_strided_slice %193 {offsets = [0, 0], sizes = [64, 1], strides = [1, 1]} : vector<64x2xf32> to vector<64x1xf32>
    %196 = arith.truncf %195 : vector<64x1xf32> to vector<64x1xbf16>
    %cst_142 = arith.constant dense<0.000000e+00> : vector<32x1xf32>
    %197 = tpu.matmul %194, %196, %cst_142 {dimension_numbers = #tpu.dot_dimension_numbers<[1], [0], [0], [1], [0, 0, 1, 1], [], []>} : vector<32x64xbf16>, vector<64x1xbf16>, vector<32x1xf32> -> vector<32x1xf32>
    %c1264 = arith.constant 1264 : index
    %c0_143 = arith.constant 0 : index
    %198 = vector.load %arg3[%c1264, %c0_143] : memref<1968x128xbf16, #tpu.memory_space<vmem>>, vector<32x64xbf16>
    %199 = vector.extract_strided_slice %193 {offsets = [0, 1], sizes = [64, 1], strides = [1, 1]} : vector<64x2xf32> to vector<64x1xf32>
    %200 = arith.truncf %199 : vector<64x1xf32> to vector<64x1xbf16>
    %cst_144 = arith.constant dense<0.000000e+00> : vector<32x1xf32>
    %201 = tpu.matmul %198, %200, %cst_144 {dimension_numbers = #tpu.dot_dimension_numbers<[1], [0], [0], [1], [0, 0, 1, 1], [], []>} : vector<32x64xbf16>, vector<64x1xbf16>, vector<32x1xf32> -> vector<32x1xf32>
    %202 = arith.addf %197, %201 : vector<32x1xf32>
    %c240_145 = arith.constant 240 : index
    %c0_146 = arith.constant 0 : index
    %203 = vector.load %arg5[%c240_145, %c0_146] : memref<344x128xf32, #tpu.memory_space<vmem>>, vector<32x1xf32>
    %204 = arith.addf %202, %203 : vector<32x1xf32>
    %c1296 = arith.constant 1296 : index
    %c0_147 = arith.constant 0 : index
    %205 = vector.load %arg3[%c1296, %c0_147] : memref<1968x128xbf16, #tpu.memory_space<vmem>>, vector<32x32xbf16>
    %206 = arith.extf %205 : vector<32x32xbf16> to vector<32x32xf32>
    %207 = vector.broadcast %204 : vector<32x1xf32> to vector<32x32xf32>
    %208 = arith.mulf %206, %207 : vector<32x32xf32>
    %cst_148 = arith.constant dense<0.000000e+00> : vector<32xf32>
    %209 = vector.multi_reduction <add>, %208, %cst_148 [0] : vector<32x32xf32> to vector<32xf32>
    %210 = vector.shape_cast %209 : vector<32xf32> to vector<1x32xf32>
    %211 = vector.extract_strided_slice %210 {offsets = [0, 0], sizes = [1, 16], strides = [1, 1]} : vector<1x32xf32> to vector<1x16xf32>
    %212 = vector.extract_strided_slice %210 {offsets = [0, 16], sizes = [1, 16], strides = [1, 1]} : vector<1x32xf32> to vector<1x16xf32>
    %cst_149 = arith.constant 5.000000e-01 : f32
    %213 = vector.broadcast %cst_149 : f32 to vector<1x16xf32>
    %214 = arith.mulf %213, %212 : vector<1x16xf32>
    %215 = math.exp %214 : vector<1x16xf32>
    %216 = arith.mulf %3, %215 : vector<1x16xf32>
    %217 = arith.addf %211, %216 : vector<1x16xf32>
    %218 = arith.truncf %217 : vector<1x16xf32> to vector<1x16xbf16>
    %c0_150 = arith.constant 0 : index
    %c0_151 = arith.constant 0 : index
    %219 = vector.load %arg4[%c0_150, %c0_151] : memref<32x384xbf16, #tpu.memory_space<vmem>>, vector<16x384xbf16>
    %cst_152 = arith.constant dense<0.000000e+00> : vector<1x384xf32>
    %220 = tpu.matmul %218, %219, %cst_152 {dimension_numbers = #tpu.dot_dimension_numbers<[1], [0], [0], [1], [0, 0, 1, 1], [], []>} : vector<1x16xbf16>, vector<16x384xbf16>, vector<1x384xf32> -> vector<1x384xf32>
    %c16_153 = arith.constant 16 : index
    %c0_154 = arith.constant 0 : index
    %221 = vector.load %arg4[%c16_153, %c0_154] : memref<32x384xbf16, #tpu.memory_space<vmem>>, vector<16x384xbf16>
    %222 = arith.extf %221 : vector<16x384xbf16> to vector<16x384xf32>
    %223 = vector.broadcast %220 : vector<1x384xf32> to vector<16x384xf32>
    %224 = arith.mulf %222, %223 : vector<16x384xf32>
    %225 = arith.truncf %224 : vector<16x384xf32> to vector<16x384xbf16>
    %c1328 = arith.constant 1328 : index
    %c0_155 = arith.constant 0 : index
    %226 = vector.load %arg3[%c1328, %c0_155] : memref<1968x128xbf16, #tpu.memory_space<vmem>>, vector<384x24xbf16>
    %cst_156 = arith.constant dense<0.000000e+00> : vector<16x24xf32>
    %227 = tpu.matmul %225, %226, %cst_156 {dimension_numbers = #tpu.dot_dimension_numbers<[1], [0], [0], [1], [0, 0, 1, 1], [], []>} : vector<16x384xbf16>, vector<384x24xbf16>, vector<16x24xf32> -> vector<16x24xf32>
    %c272_157 = arith.constant 272 : index
    %c0_158 = arith.constant 0 : index
    %228 = vector.load %arg5[%c272_157, %c0_158] : memref<344x128xf32, #tpu.memory_space<vmem>>, vector<16x24xf32>
    %229 = arith.addf %227, %228 : vector<16x24xf32>
    %230 = arith.truncf %229 : vector<16x24xf32> to vector<16x24xbf16>
    %c1712 = arith.constant 1712 : index
    %c0_159 = arith.constant 0 : index
    %231 = vector.load %arg3[%c1712, %c0_159] : memref<1968x128xbf16, #tpu.memory_space<vmem>>, vector<24x126xbf16>
    %cst_160 = arith.constant dense<0.000000e+00> : vector<16x126xf32>
    %232 = tpu.matmul %230, %231, %cst_160 {dimension_numbers = #tpu.dot_dimension_numbers<[1], [0], [0], [1], [0, 0, 1, 1], [], []>} : vector<16x24xbf16>, vector<24x126xbf16>, vector<16x126xf32> -> vector<16x126xf32>
    %cst_161 = arith.constant 0.000000e+00 : f32
    %233 = vector.broadcast %cst_161 : f32 to vector<16x3xf32>
    %c0_162 = arith.constant 0 : index
    %c0_163 = arith.constant 0 : index
    %234 = vector.load %arg8[%c0_162, %c0_163] : memref<64x132xf32, #tpu.memory_space<vmem>>, vector<16x3xf32>
    tpu.vector_store %arg8[%c0_162, %c0_163], %233 {strides = array<i32>} : memref<64x132xf32, #tpu.memory_space<vmem>>, vector<16x3xf32>,
    %c0_164 = arith.constant 0 : index
    %c129_165 = arith.constant 129 : index
    %235 = vector.load %arg8[%c0_164, %c129_165] : memref<64x132xf32, #tpu.memory_space<vmem>>, vector<16x3xf32>
    tpu.vector_store %arg8[%c0_164, %c129_165], %233 {strides = array<i32>} : memref<64x132xf32, #tpu.memory_space<vmem>>, vector<16x3xf32>,
    %c0_166 = arith.constant 0 : index
    %c3_167 = arith.constant 3 : index
    %236 = vector.load %arg8[%c0_166, %c3_167] : memref<64x132xf32, #tpu.memory_space<vmem>>, vector<16x126xf32>
    tpu.vector_store %arg8[%c0_166, %c3_167], %232 {strides = array<i32>} : memref<64x132xf32, #tpu.memory_space<vmem>>, vector<16x126xf32>,
    %cst_168 = arith.constant 0.000000e+00 : f32
    %237 = vector.broadcast %cst_168 : f32 to vector<16x128xf32>
    %c0_169 = arith.constant 0 : index
    %c0_170 = arith.constant 0 : index
    %238 = vector.load %arg8[%c0_169, %c0_170] : memref<64x132xf32, #tpu.memory_space<vmem>>, vector<16x128xf32>
    %239 = arith.truncf %238 : vector<16x128xf32> to vector<16x128xbf16>
    %c1744 = arith.constant 1744 : index
    %c0_171 = arith.constant 0 : index
    %240 = vector.load %arg3[%c1744, %c0_171] : memref<1968x128xbf16, #tpu.memory_space<vmem>>, vector<16x16xbf16>
    %cst_172 = arith.constant dense<0.000000e+00> : vector<16x128xf32>
    %241 = tpu.matmul %240, %239, %cst_172 {dimension_numbers = #tpu.dot_dimension_numbers<[1], [0], [0], [1], [0, 0, 1, 1], [], []>} : vector<16x16xbf16>, vector<16x128xbf16>, vector<16x128xf32> -> vector<16x128xf32>
    %242 = arith.addf %237, %241 : vector<16x128xf32>
    %c0_173 = arith.constant 0 : index
    %c1_174 = arith.constant 1 : index
    %243 = vector.load %arg8[%c0_173, %c1_174] : memref<64x132xf32, #tpu.memory_space<vmem>>, vector<16x128xf32>
    %244 = arith.truncf %243 : vector<16x128xf32> to vector<16x128xbf16>
    %c1760 = arith.constant 1760 : index
    %c0_175 = arith.constant 0 : index
    %245 = vector.load %arg3[%c1760, %c0_175] : memref<1968x128xbf16, #tpu.memory_space<vmem>>, vector<16x16xbf16>
    %cst_176 = arith.constant dense<0.000000e+00> : vector<16x128xf32>
    %246 = tpu.matmul %245, %244, %cst_176 {dimension_numbers = #tpu.dot_dimension_numbers<[1], [0], [0], [1], [0, 0, 1, 1], [], []>} : vector<16x16xbf16>, vector<16x128xbf16>, vector<16x128xf32> -> vector<16x128xf32>
    %247 = arith.addf %242, %246 : vector<16x128xf32>
    %c0_177 = arith.constant 0 : index
    %c2_178 = arith.constant 2 : index
    %248 = vector.load %arg8[%c0_177, %c2_178] : memref<64x132xf32, #tpu.memory_space<vmem>>, vector<16x128xf32>
    %249 = arith.truncf %248 : vector<16x128xf32> to vector<16x128xbf16>
    %c1776 = arith.constant 1776 : index
    %c0_179 = arith.constant 0 : index
    %250 = vector.load %arg3[%c1776, %c0_179] : memref<1968x128xbf16, #tpu.memory_space<vmem>>, vector<16x16xbf16>
    %cst_180 = arith.constant dense<0.000000e+00> : vector<16x128xf32>
    %251 = tpu.matmul %250, %249, %cst_180 {dimension_numbers = #tpu.dot_dimension_numbers<[1], [0], [0], [1], [0, 0, 1, 1], [], []>} : vector<16x16xbf16>, vector<16x128xbf16>, vector<16x128xf32> -> vector<16x128xf32>
    %252 = arith.addf %247, %251 : vector<16x128xf32>
    %c0_181 = arith.constant 0 : index
    %c3_182 = arith.constant 3 : index
    %253 = vector.load %arg8[%c0_181, %c3_182] : memref<64x132xf32, #tpu.memory_space<vmem>>, vector<16x128xf32>
    %254 = arith.truncf %253 : vector<16x128xf32> to vector<16x128xbf16>
    %c1792 = arith.constant 1792 : index
    %c0_183 = arith.constant 0 : index
    %255 = vector.load %arg3[%c1792, %c0_183] : memref<1968x128xbf16, #tpu.memory_space<vmem>>, vector<16x16xbf16>
    %cst_184 = arith.constant dense<0.000000e+00> : vector<16x128xf32>
    %256 = tpu.matmul %255, %254, %cst_184 {dimension_numbers = #tpu.dot_dimension_numbers<[1], [0], [0], [1], [0, 0, 1, 1], [], []>} : vector<16x16xbf16>, vector<16x128xbf16>, vector<16x128xf32> -> vector<16x128xf32>
    %257 = arith.addf %252, %256 : vector<16x128xf32>
    %c0_185 = arith.constant 0 : index
    %c4_186 = arith.constant 4 : index
    %258 = vector.load %arg8[%c0_185, %c4_186] : memref<64x132xf32, #tpu.memory_space<vmem>>, vector<16x128xf32>
    %259 = arith.truncf %258 : vector<16x128xf32> to vector<16x128xbf16>
    %c1808 = arith.constant 1808 : index
    %c0_187 = arith.constant 0 : index
    %260 = vector.load %arg3[%c1808, %c0_187] : memref<1968x128xbf16, #tpu.memory_space<vmem>>, vector<16x16xbf16>
    %cst_188 = arith.constant dense<0.000000e+00> : vector<16x128xf32>
    %261 = tpu.matmul %260, %259, %cst_188 {dimension_numbers = #tpu.dot_dimension_numbers<[1], [0], [0], [1], [0, 0, 1, 1], [], []>} : vector<16x16xbf16>, vector<16x128xbf16>, vector<16x128xf32> -> vector<16x128xf32>
    %262 = arith.addf %257, %261 : vector<16x128xf32>
    %c288 = arith.constant 288 : index
    %c0_189 = arith.constant 0 : index
    %263 = vector.load %arg5[%c288, %c0_189] : memref<344x128xf32, #tpu.memory_space<vmem>>, vector<16x1xf32>
    %264 = vector.broadcast %263 : vector<16x1xf32> to vector<16x128xf32>
    %265 = arith.addf %262, %264 : vector<16x128xf32>
    %cst_190 = arith.constant 0.000000e+00 : f32
    %266 = vector.broadcast %cst_190 : f32 to vector<16x128xf32>
    %267 = arith.cmpf oge, %265, %266 : vector<16x128xf32>
    %cst_191 = arith.constant 0.00999999977 : f32
    %268 = vector.broadcast %cst_191 : f32 to vector<16x128xf32>
    %269 = arith.mulf %268, %265 : vector<16x128xf32>
    %270 = arith.select %267, %265, %269 : vector<16x128xi1>, vector<16x128xf32>
    %cst_192 = arith.constant 0.000000e+00 : f32
    %271 = vector.broadcast %cst_192 : f32 to vector<16x1xf32>
    %c0_193 = arith.constant 0 : index
    %c0_194 = arith.constant 0 : index
    %272 = vector.load %arg8[%c0_193, %c0_194] : memref<64x132xf32, #tpu.memory_space<vmem>>, vector<16x1xf32>
    tpu.vector_store %arg8[%c0_193, %c0_194], %271 {strides = array<i32>} : memref<64x132xf32, #tpu.memory_space<vmem>>, vector<16x1xf32>,
    %c0_195 = arith.constant 0 : index
    %c129_196 = arith.constant 129 : index
    %273 = vector.load %arg8[%c0_195, %c129_196] : memref<64x132xf32, #tpu.memory_space<vmem>>, vector<16x1xf32>
    tpu.vector_store %arg8[%c0_195, %c129_196], %271 {strides = array<i32>} : memref<64x132xf32, #tpu.memory_space<vmem>>, vector<16x1xf32>,
    %c0_197 = arith.constant 0 : index
    %c1_198 = arith.constant 1 : index
    %274 = vector.load %arg8[%c0_197, %c1_198] : memref<64x132xf32, #tpu.memory_space<vmem>>, vector<16x128xf32>
    tpu.vector_store %arg8[%c0_197, %c1_198], %270 {strides = array<i32>} : memref<64x132xf32, #tpu.memory_space<vmem>>, vector<16x128xf32>,
    %cst_199 = arith.constant 0.000000e+00 : f32
    %275 = vector.broadcast %cst_199 : f32 to vector<16x128xf32>
    %c0_200 = arith.constant 0 : index
    %c0_201 = arith.constant 0 : index
    %276 = vector.load %arg8[%c0_200, %c0_201] : memref<64x132xf32, #tpu.memory_space<vmem>>, vector<16x128xf32>
    %277 = arith.truncf %276 : vector<16x128xf32> to vector<16x128xbf16>
    %c1824 = arith.constant 1824 : index
    %c0_202 = arith.constant 0 : index
    %278 = vector.load %arg3[%c1824, %c0_202] : memref<1968x128xbf16, #tpu.memory_space<vmem>>, vector<16x16xbf16>
    %cst_203 = arith.constant dense<0.000000e+00> : vector<16x128xf32>
    %279 = tpu.matmul %278, %277, %cst_203 {dimension_numbers = #tpu.dot_dimension_numbers<[1], [0], [0], [1], [0, 0, 1, 1], [], []>} : vector<16x16xbf16>, vector<16x128xbf16>, vector<16x128xf32> -> vector<16x128xf32>
    %280 = arith.addf %275, %279 : vector<16x128xf32>
    %c0_204 = arith.constant 0 : index
    %c1_205 = arith.constant 1 : index
    %281 = vector.load %arg8[%c0_204, %c1_205] : memref<64x132xf32, #tpu.memory_space<vmem>>, vector<16x128xf32>
    %282 = arith.truncf %281 : vector<16x128xf32> to vector<16x128xbf16>
    %c1840 = arith.constant 1840 : index
    %c0_206 = arith.constant 0 : index
    %283 = vector.load %arg3[%c1840, %c0_206] : memref<1968x128xbf16, #tpu.memory_space<vmem>>, vector<16x16xbf16>
    %cst_207 = arith.constant dense<0.000000e+00> : vector<16x128xf32>
    %284 = tpu.matmul %283, %282, %cst_207 {dimension_numbers = #tpu.dot_dimension_numbers<[1], [0], [0], [1], [0, 0, 1, 1], [], []>} : vector<16x16xbf16>, vector<16x128xbf16>, vector<16x128xf32> -> vector<16x128xf32>
    %285 = arith.addf %280, %284 : vector<16x128xf32>
    %c0_208 = arith.constant 0 : index
    %c2_209 = arith.constant 2 : index
    %286 = vector.load %arg8[%c0_208, %c2_209] : memref<64x132xf32, #tpu.memory_space<vmem>>, vector<16x128xf32>
    %287 = arith.truncf %286 : vector<16x128xf32> to vector<16x128xbf16>
    %c1856 = arith.constant 1856 : index
    %c0_210 = arith.constant 0 : index
    %288 = vector.load %arg3[%c1856, %c0_210] : memref<1968x128xbf16, #tpu.memory_space<vmem>>, vector<16x16xbf16>
    %cst_211 = arith.constant dense<0.000000e+00> : vector<16x128xf32>
    %289 = tpu.matmul %288, %287, %cst_211 {dimension_numbers = #tpu.dot_dimension_numbers<[1], [0], [0], [1], [0, 0, 1, 1], [], []>} : vector<16x16xbf16>, vector<16x128xbf16>, vector<16x128xf32> -> vector<16x128xf32>
    %290 = arith.addf %285, %289 : vector<16x128xf32>
    %c304 = arith.constant 304 : index
    %c0_212 = arith.constant 0 : index
    %291 = vector.load %arg5[%c304, %c0_212] : memref<344x128xf32, #tpu.memory_space<vmem>>, vector<16x1xf32>
    %292 = vector.broadcast %291 : vector<16x1xf32> to vector<16x128xf32>
    %293 = arith.addf %290, %292 : vector<16x128xf32>
    %cst_213 = arith.constant 0.000000e+00 : f32
    %294 = vector.broadcast %cst_213 : f32 to vector<16x128xf32>
    %295 = arith.cmpf oge, %293, %294 : vector<16x128xf32>
    %cst_214 = arith.constant 0.00999999977 : f32
    %296 = vector.broadcast %cst_214 : f32 to vector<16x128xf32>
    %297 = arith.mulf %296, %293 : vector<16x128xf32>
    %298 = arith.select %295, %293, %297 : vector<16x128xi1>, vector<16x128xf32>
    %cst_215 = arith.constant 0.000000e+00 : f32
    %299 = vector.broadcast %cst_215 : f32 to vector<16x1xf32>
    %c0_216 = arith.constant 0 : index
    %c0_217 = arith.constant 0 : index
    %300 = vector.load %arg8[%c0_216, %c0_217] : memref<64x132xf32, #tpu.memory_space<vmem>>, vector<16x1xf32>
    tpu.vector_store %arg8[%c0_216, %c0_217], %299 {strides = array<i32>} : memref<64x132xf32, #tpu.memory_space<vmem>>, vector<16x1xf32>,
    %c0_218 = arith.constant 0 : index
    %c129_219 = arith.constant 129 : index
    %301 = vector.load %arg8[%c0_218, %c129_219] : memref<64x132xf32, #tpu.memory_space<vmem>>, vector<16x1xf32>
    tpu.vector_store %arg8[%c0_218, %c129_219], %299 {strides = array<i32>} : memref<64x132xf32, #tpu.memory_space<vmem>>, vector<16x1xf32>,
    %c0_220 = arith.constant 0 : index
    %c1_221 = arith.constant 1 : index
    %302 = vector.load %arg8[%c0_220, %c1_221] : memref<64x132xf32, #tpu.memory_space<vmem>>, vector<16x128xf32>
    tpu.vector_store %arg8[%c0_220, %c1_221], %298 {strides = array<i32>} : memref<64x132xf32, #tpu.memory_space<vmem>>, vector<16x128xf32>,
    %cst_222 = arith.constant 0.000000e+00 : f32
    %303 = vector.broadcast %cst_222 : f32 to vector<6x128xf32>
    %c0_223 = arith.constant 0 : index
    %c0_224 = arith.constant 0 : index
    %304 = vector.load %arg8[%c0_223, %c0_224] : memref<64x132xf32, #tpu.memory_space<vmem>>, vector<16x128xf32>
    %305 = arith.truncf %304 : vector<16x128xf32> to vector<16x128xbf16>
    %c1872 = arith.constant 1872 : index
    %c0_225 = arith.constant 0 : index
    %306 = vector.load %arg3[%c1872, %c0_225] : memref<1968x128xbf16, #tpu.memory_space<vmem>>, vector<6x16xbf16>
    %cst_226 = arith.constant dense<0.000000e+00> : vector<6x128xf32>
    %307 = tpu.matmul %306, %305, %cst_226 {dimension_numbers = #tpu.dot_dimension_numbers<[1], [0], [0], [1], [0, 0, 1, 1], [], []>} : vector<6x16xbf16>, vector<16x128xbf16>, vector<6x128xf32> -> vector<6x128xf32>
    %308 = arith.addf %303, %307 : vector<6x128xf32>
    %c0_227 = arith.constant 0 : index
    %c1_228 = arith.constant 1 : index
    %309 = vector.load %arg8[%c0_227, %c1_228] : memref<64x132xf32, #tpu.memory_space<vmem>>, vector<16x128xf32>
    %310 = arith.truncf %309 : vector<16x128xf32> to vector<16x128xbf16>
    %c1888 = arith.constant 1888 : index
    %c0_229 = arith.constant 0 : index
    %311 = vector.load %arg3[%c1888, %c0_229] : memref<1968x128xbf16, #tpu.memory_space<vmem>>, vector<6x16xbf16>
    %cst_230 = arith.constant dense<0.000000e+00> : vector<6x128xf32>
    %312 = tpu.matmul %311, %310, %cst_230 {dimension_numbers = #tpu.dot_dimension_numbers<[1], [0], [0], [1], [0, 0, 1, 1], [], []>} : vector<6x16xbf16>, vector<16x128xbf16>, vector<6x128xf32> -> vector<6x128xf32>
    %313 = arith.addf %308, %312 : vector<6x128xf32>
    %c0_231 = arith.constant 0 : index
    %c2_232 = arith.constant 2 : index
    %314 = vector.load %arg8[%c0_231, %c2_232] : memref<64x132xf32, #tpu.memory_space<vmem>>, vector<16x128xf32>
    %315 = arith.truncf %314 : vector<16x128xf32> to vector<16x128xbf16>
    %c1904 = arith.constant 1904 : index
    %c0_233 = arith.constant 0 : index
    %316 = vector.load %arg3[%c1904, %c0_233] : memref<1968x128xbf16, #tpu.memory_space<vmem>>, vector<6x16xbf16>
    %cst_234 = arith.constant dense<0.000000e+00> : vector<6x128xf32>
    %317 = tpu.matmul %316, %315, %cst_234 {dimension_numbers = #tpu.dot_dimension_numbers<[1], [0], [0], [1], [0, 0, 1, 1], [], []>} : vector<6x16xbf16>, vector<16x128xbf16>, vector<6x128xf32> -> vector<6x128xf32>
    %318 = arith.addf %313, %317 : vector<6x128xf32>
    %c320 = arith.constant 320 : index
    %c0_235 = arith.constant 0 : index
    %319 = vector.load %arg5[%c320, %c0_235] : memref<344x128xf32, #tpu.memory_space<vmem>>, vector<6x1xf32>
    %320 = vector.broadcast %319 : vector<6x1xf32> to vector<6x128xf32>
    %321 = arith.addf %318, %320 : vector<6x128xf32>
    %c0_236 = arith.constant 0 : index
    %c0_237 = arith.constant 0 : index
    %c0_238 = arith.constant 0 : index
    %322 = vector.load %arg6[%c0_236, %c0_237, %c0_238] : memref<1x6x128xf32, #tpu.memory_space<vmem>>, vector<1x6x128xf32>
    %323 = vector.shape_cast %322 : vector<1x6x128xf32> to vector<6x128xf32>
    %324 = vector.shape_cast %321 : vector<6x128xf32> to vector<1x6x128xf32>
    tpu.vector_store %arg6[%c0_236, %c0_237, %c0_238], %324 {strides = array<i32>} : memref<1x6x128xf32, #tpu.memory_space<vmem>>, vector<1x6x128xf32>,
    %c1920 = arith.constant 1920 : index
    %c0_239 = arith.constant 0 : index
    %325 = vector.load %arg3[%c1920, %c0_239] : memref<1968x128xbf16, #tpu.memory_space<vmem>>, vector<16x32xbf16>
    %cst_240 = arith.constant dense<0.000000e+00> : vector<1x32xf32>
    %326 = tpu.matmul %218, %325, %cst_240 {dimension_numbers = #tpu.dot_dimension_numbers<[1], [0], [0], [1], [0, 0, 1, 1], [], []>} : vector<1x16xbf16>, vector<16x32xbf16>, vector<1x32xf32> -> vector<1x32xf32>
    %c328 = arith.constant 328 : index
    %c0_241 = arith.constant 0 : index
    %327 = vector.load %arg5[%c328, %c0_241] : memref<344x128xf32, #tpu.memory_space<vmem>>, vector<1x32xf32>
    %328 = arith.addf %326, %327 : vector<1x32xf32>
    %cst_242 = arith.constant 0.000000e+00 : f32
    %329 = vector.broadcast %cst_242 : f32 to vector<1x32xf32>
    %330 = arith.cmpf oge, %328, %329 : vector<1x32xf32>
    %cst_243 = arith.constant 0.00999999977 : f32
    %331 = vector.broadcast %cst_243 : f32 to vector<1x32xf32>
    %332 = arith.mulf %331, %328 : vector<1x32xf32>
    %333 = arith.select %330, %328, %332 : vector<1x32xi1>, vector<1x32xf32>
    %334 = arith.truncf %333 : vector<1x32xf32> to vector<1x32xbf16>
    %c1936 = arith.constant 1936 : index
    %c0_244 = arith.constant 0 : index
    %335 = vector.load %arg3[%c1936, %c0_244] : memref<1968x128xbf16, #tpu.memory_space<vmem>>, vector<32x8xbf16>
    %cst_245 = arith.constant dense<0.000000e+00> : vector<1x8xf32>
    %336 = tpu.matmul %334, %335, %cst_245 {dimension_numbers = #tpu.dot_dimension_numbers<[1], [0], [0], [1], [0, 0, 1, 1], [], []>} : vector<1x32xbf16>, vector<32x8xbf16>, vector<1x8xf32> -> vector<1x8xf32>
    %c336_246 = arith.constant 336 : index
    %c0_247 = arith.constant 0 : index
    %337 = vector.load %arg5[%c336_246, %c0_247] : memref<344x128xf32, #tpu.memory_space<vmem>>, vector<1x8xf32>
    %338 = arith.addf %336, %337 : vector<1x8xf32>
    %cst_248 = arith.constant dense<0xFF800000> : vector<1xf32>
    %339 = vector.multi_reduction <maximumf>, %338, %cst_248 [1] : vector<1x8xf32> to vector<1xf32>
    %340 = vector.shape_cast %339 : vector<1xf32> to vector<1x1xf32>
    %341 = vector.broadcast %340 : vector<1x1xf32> to vector<1x8xf32>
    %342 = arith.subf %338, %341 : vector<1x8xf32>
    %343 = math.exp %342 : vector<1x8xf32>
    %cst_249 = arith.constant dense<0.000000e+00> : vector<1xf32>
    %344 = vector.multi_reduction <add>, %343, %cst_249 [1] : vector<1x8xf32> to vector<1xf32>
    %345 = vector.shape_cast %344 : vector<1xf32> to vector<1x1xf32>
    %346 = vector.broadcast %345 : vector<1x1xf32> to vector<1x8xf32>
    %347 = arith.divf %343, %346 : vector<1x8xf32>
    %cst_250 = arith.constant 0.000000e+00 : f32
    %348 = vector.broadcast %cst_250 : f32 to vector<1x128xf32>
    %c0_251 = arith.constant 0 : index
    %c0_252 = arith.constant 0 : index
    %c0_253 = arith.constant 0 : index
    %349 = vector.load %arg7[%c0_251, %c0_252, %c0_253] : memref<1x1x128xf32, #tpu.memory_space<vmem>>, vector<1x1x128xf32>
    %350 = vector.shape_cast %349 : vector<1x1x128xf32> to vector<1x128xf32>
    %351 = vector.shape_cast %348 : vector<1x128xf32> to vector<1x1x128xf32>
    tpu.vector_store %arg7[%c0_251, %c0_252, %c0_253], %351 {strides = array<i32>} : memref<1x1x128xf32, #tpu.memory_space<vmem>>, vector<1x1x128xf32>,
    %c0_254 = arith.constant 0 : index
    %c0_255 = arith.constant 0 : index
    %c0_256 = arith.constant 0 : index
    %352 = vector.load %arg7[%c0_254, %c0_255, %c0_256] : memref<1x1x128xf32, #tpu.memory_space<vmem>>, vector<1x1x16xf32>
    %353 = vector.shape_cast %352 : vector<1x1x16xf32> to vector<1x16xf32>
    %354 = vector.shape_cast %211 : vector<1x16xf32> to vector<1x1x16xf32>
    tpu.vector_store %arg7[%c0_254, %c0_255, %c0_256], %354 {strides = array<i32>} : memref<1x1x128xf32, #tpu.memory_space<vmem>>, vector<1x1x16xf32>,
    %c0_257 = arith.constant 0 : index
    %c0_258 = arith.constant 0 : index
    %c16_259 = arith.constant 16 : index
    %355 = vector.load %arg7[%c0_257, %c0_258, %c16_259] : memref<1x1x128xf32, #tpu.memory_space<vmem>>, vector<1x1x16xf32>
    %356 = vector.shape_cast %355 : vector<1x1x16xf32> to vector<1x16xf32>
    %357 = vector.shape_cast %212 : vector<1x16xf32> to vector<1x1x16xf32>
    tpu.vector_store %arg7[%c0_257, %c0_258, %c16_259], %357 {strides = array<i32>} : memref<1x1x128xf32, #tpu.memory_space<vmem>>, vector<1x1x16xf32>,
    %c0_260 = arith.constant 0 : index
    %c0_261 = arith.constant 0 : index
    %c32_262 = arith.constant 32 : index
    %358 = vector.load %arg7[%c0_260, %c0_261, %c32_262] : memref<1x1x128xf32, #tpu.memory_space<vmem>>, vector<1x1x8xf32>
    %359 = vector.shape_cast %358 : vector<1x1x8xf32> to vector<1x8xf32>
    %360 = vector.shape_cast %347 : vector<1x8xf32> to vector<1x1x8xf32>
    tpu.vector_store %arg7[%c0_260, %c0_261, %c32_262], %360 {strides = array<i32>} : memref<1x1x128xf32, #tpu.memory_space<vmem>>, vector<1x1x8xf32>,
    return
  }
  func.func @transform_0(%arg0: i32) -> (i32, i32, i32) {
    %c0_i32 = arith.constant 0 : i32
    %c0_i32_0 = arith.constant 0 : i32
    %c0_i32_1 = arith.constant 0 : i32
    return %arg0, %c0_i32, %c0_i32_0 : i32, i32, i32
  }
  func.func @transform_1(%arg0: i32) -> (i32, i32, i32) {
    %c0_i32 = arith.constant 0 : i32
    %c0_i32_0 = arith.constant 0 : i32
    %c0_i32_1 = arith.constant 0 : i32
    return %arg0, %c0_i32, %c0_i32_0 : i32, i32, i32
  }
  func.func @transform_2(%arg0: i32) -> (i32, i32) {
    %c0_i32 = arith.constant 0 : i32
    %c0_i32_0 = arith.constant 0 : i32
    %c0_i32_1 = arith.constant 0 : i32
    return %c0_i32, %c0_i32_0 : i32, i32
  }
  func.func @transform_3(%arg0: i32) -> (i32, i32) {
    %c0_i32 = arith.constant 0 : i32
    %c0_i32_0 = arith.constant 0 : i32
    %c0_i32_1 = arith.constant 0 : i32
    return %c0_i32, %c0_i32_0 : i32, i32
  }
  func.func @transform_4(%arg0: i32) -> (i32, i32) {
    %c0_i32 = arith.constant 0 : i32
    %c0_i32_0 = arith.constant 0 : i32
    %c0_i32_1 = arith.constant 0 : i32
    return %c0_i32, %c0_i32_0 : i32, i32
  }
  func.func @transform_5(%arg0: i32) -> (i32, i32, i32) {
    %c0_i32 = arith.constant 0 : i32
    %c0_i32_0 = arith.constant 0 : i32
    %c0_i32_1 = arith.constant 0 : i32
    return %arg0, %c0_i32, %c0_i32_0 : i32, i32, i32
  }
  func.func @transform_6(%arg0: i32) -> (i32, i32, i32) {
    %c0_i32 = arith.constant 0 : i32
    %c0_i32_0 = arith.constant 0 : i32
    %c0_i32_1 = arith.constant 0 : i32
    return %arg0, %c0_i32, %c0_i32_0 : i32, i32, i32
  }
}

</mosaic_0001>

<llo_original>
// kernel: forward.1
$region0: #{forward.1}
  #allocation0 [shape = 'u32[]', space=smem, size = 0x4, offset = 0x4, fixed_abs, tag = 'smem constant byte address 0x4 - core index']
  #allocation1 [shape = 'u32[144,128]{1,0:T(1,128)}', space=vmem, size = 0x12000, scoped, tag = 'internal scratch']
  #allocation2 [shape = 'f32[64,132]{1,0:T(8,128)}', space=vmem, size = 0x10000, scoped, tag = 'scratch operand']
  %s0 = inlined_call_operand.vmem [shape: f32[2,6,128], index: 0, kind: input, shape index: {}]
  %s1 = inlined_call_operand.vmem [shape: f32[2,1,16], index: 1, kind: input, shape index: {}]
  %s2 = inlined_call_operand.hbm [shape: bf16[1968,128], index: 2, kind: input, shape index: {}]
  %s3 = inlined_call_operand.hbm [shape: bf16[32,384], index: 3, kind: input, shape index: {}]
  %s4 = inlined_call_operand.hbm [shape: f32[344,128], index: 4, kind: input, shape index: {}]
  %s5 = inlined_call_operand.vmem [shape: f32[2,6,128], index: 5, kind: output, shape index: {0}]
  %s6 = inlined_call_operand.vmem [shape: f32[2,1,128], index: 6, kind: output, shape index: {1}]
  %7 = xla_tuple %s5, %s6
  %s8 = sld [smem:[#allocation0]]
  $region73: #{forward.1} parent=0
    _
  %s10 = ssub.s32 1, %s8
  %s11 = scalar_select 0, %s10, %s8
  $region1: #{forward.1} parent=0
    #allocation3 [shape = 'u8[503808]{0}', space=vmem, size = 0x7b000, scoped, tag = 'input window, operand 2, single buffered']
    #allocation4 [shape = 's32[2]{0}', space=sflag, size = 0x8, scoped, tag = 'scoped memory for forward.1']
    #allocation5 [shape = 'u8[24576]{0}', space=vmem, size = 0x6000, scoped, tag = 'input window, operand 3, single buffered']
    #allocation6 [shape = 's32[1]{0}', space=sflag, size = 0x4, scoped, tag = 'scoped memory for forward.1']
    #allocation7 [shape = 'u8[176128]{0}', space=vmem, size = 0x2b000, scoped, tag = 'input window, operand 4, single buffered']
    %12 = vsyncpa [#allocation4], 0
    %13 = vsyncpa [#allocation6], 0
    loop: start=0, step=1, limit=4
    $region2: #{forward.1} parent=1 // loop_pre_header
      _
    $region3: #{forward.1} parent=1 // loop_header
      %s15 = sphi 0, %s19
      %p16 = scmp.ge.s32.totalorder %s15, 4
      %s25 = sphi 0, %s27
      %s28 = sphi 0, %s25
      %s29 = sphi 0, %s28
      %s45 = sphi 0, %s29
      %s51 = sphi 0, %s53
      %s54 = sphi 0, %s51
      %s55 = sphi 0, %s54
      %s71 = sphi 0, %s55
      %s75 = sphi 0, %s75
      %s77 = sphi 0, %s75
      %s78 = sphi 0, %s77
      %s92 = sphi 0, %s78
      %s96 = sphi 0, %s96
      %s98 = sphi 0, %s96
      %s99 = sphi 0, %s98
      %s113 = sphi 0, %s99
      %s117 = sphi 0, %s117
      %s119 = sphi 0, %s117
      %s120 = sphi 0, %s119
      %s134 = sphi 0, %s120
      %s140 = sphi 0, %s142
      %s143 = sphi 0, %s140
      %s144 = sphi 0, %s143
      %s160 = sphi 0, %s144
      %s166 = sphi 0, %s168
      %s169 = sphi 0, %s166
      %s170 = sphi 0, %s169
      %s186 = sphi 0, %s170
    $region4: #{forward.1} parent=1 // loop_header_branch
      %18 = sbr.rel (%p16) target = $region8
    $region5: #{forward.1} parent=1 // loop_body
      %s20 = ssub.s32 %s15, 1
      %s21 = ssub.s32 %s15, 2
      %s22 = sadd.s32 %s15, 1
      %s23 = ssub.s32 %s15, %s22
      %p24 = scmp.eq.s32.totalorder %s23, 0
      %s26 = sadd.s32 %s25, 1
      %s27 = scalar_select %p24, %s25, %s26
      %p30 = pneg %p24
      %p31 = scmp.eq.s32.totalorder %s15, 1
      %p32 = por %p30, %p31
      %p33 = scmp.ne.s32.totalorder %s25, %s28
      %p34 = scmp.eq.s32.totalorder %s15, 0
      %p35 = por %p33, %p34
      %p36 = scmp.ne.s32.totalorder %s25, %s28
      %p37 = scmp.eq.s32.totalorder %s20, 1
      %p38 = por %p36, %p37
      %p39 = scmp.ne.s32.totalorder %s28, %s29
      %p40 = scmp.eq.s32.totalorder %s20, 0
      %p41 = por %p39, %p40
      %p42 = scmp.ne.s32.totalorder %s28, %s29
      %p43 = scmp.eq.s32.totalorder %s21, 1
      %p44 = por %p42, %p43
      %p46 = scmp.ne.s32.totalorder %s29, %s45
      %p47 = scmp.eq.s32.totalorder %s21, 0
      %p48 = por %p46, %p47
      %s49 = ssub.s32 %s15, %s22
      %p50 = scmp.eq.s32.totalorder %s49, 0
      %s52 = sadd.s32 %s51, 1
      %s53 = scalar_select %p50, %s51, %s52
      %p56 = pneg %p50
      %p57 = scmp.eq.s32.totalorder %s15, 1
      %p58 = por %p56, %p57
      %p59 = scmp.ne.s32.totalorder %s51, %s54
      %p60 = scmp.eq.s32.totalorder %s15, 0
      %p61 = por %p59, %p60
      %p62 = scmp.ne.s32.totalorder %s51, %s54
      %p63 = scmp.eq.s32.totalorder %s20, 1
      %p64 = por %p62, %p63
      %p65 = scmp.ne.s32.totalorder %s54, %s55
      %p66 = scmp.eq.s32.totalorder %s20, 0
      %p67 = por %p65, %p66
      %p68 = scmp.ne.s32.totalorder %s54, %s55
      %p69 = scmp.eq.s32.totalorder %s21, 1
      %p70 = por %p68, %p69
      %p72 = scmp.ne.s32.totalorder %s55, %s71
      %p73 = scmp.eq.s32.totalorder %s21, 0
      %p74 = por %p72, %p73
      %s76 = sadd.s32 %s75, 1
      %p79 = scmp.eq.s32.totalorder %s15, 1
      %p80 = scmp.ne.s32.totalorder %s75, %s77
      %p81 = scmp.eq.s32.totalorder %s15, 0
      %p82 = por %p80, %p81
      %p83 = scmp.ne.s32.totalorder %s75, %s77
      %p84 = scmp.eq.s32.totalorder %s20, 1
      %p85 = por %p83, %p84
      %p86 = scmp.ne.s32.totalorder %s77, %s78
      %p87 = scmp.eq.s32.totalorder %s20, 0
      %p88 = por %p86, %p87
      %p89 = scmp.ne.s32.totalorder %s77, %s78
      %p90 = scmp.eq.s32.totalorder %s21, 1
      %p91 = por %p89, %p90
      %p93 = scmp.ne.s32.totalorder %s78, %s92
      %p94 = scmp.eq.s32.totalorder %s21, 0
      %p95 = por %p93, %p94
      %s97 = sadd.s32 %s96, 1
      %p100 = scmp.eq.s32.totalorder %s15, 1
      %p101 = scmp.ne.s32.totalorder %s96, %s98
      %p102 = scmp.eq.s32.totalorder %s15, 0
      %p103 = por %p101, %p102
      %p104 = scmp.ne.s32.totalorder %s96, %s98
      %p105 = scmp.eq.s32.totalorder %s20, 1
      %p106 = por %p104, %p105
      %p107 = scmp.ne.s32.totalorder %s98, %s99
      %p108 = scmp.eq.s32.totalorder %s20, 0
      %p109 = por %p107, %p108
      %p110 = scmp.ne.s32.totalorder %s98, %s99
      %p111 = scmp.eq.s32.totalorder %s21, 1
      %p112 = por %p110, %p111
      %p114 = scmp.ne.s32.totalorder %s99, %s113
      %p115 = scmp.eq.s32.totalorder %s21, 0
      %p116 = por %p114, %p115
      %s118 = sadd.s32 %s117, 1
      %p121 = scmp.eq.s32.totalorder %s15, 1
      %p122 = scmp.ne.s32.totalorder %s117, %s119
      %p123 = scmp.eq.s32.totalorder %s15, 0
      %p124 = por %p122, %p123
      %p125 = scmp.ne.s32.totalorder %s117, %s119
      %p126 = scmp.eq.s32.totalorder %s20, 1
      %p127 = por %p125, %p126
      %p128 = scmp.ne.s32.totalorder %s119, %s120
      %p129 = scmp.eq.s32.totalorder %s20, 0
      %p130 = por %p128, %p129
      %p131 = scmp.ne.s32.totalorder %s119, %s120
      %p132 = scmp.eq.s32.totalorder %s21, 1
      %p133 = por %p131, %p132
      %p135 = scmp.ne.s32.totalorder %s120, %s134
      %p136 = scmp.eq.s32.totalorder %s21, 0
      %p137 = por %p135, %p136
      %s138 = ssub.s32 %s15, %s22
      %p139 = scmp.eq.s32.totalorder %s138, 0
      %s141 = sadd.s32 %s140, 1
      %s142 = scalar_select %p139, %s140, %s141
      %p145 = pneg %p139
      %p146 = scmp.eq.s32.totalorder %s15, 1
      %p147 = por %p145, %p146
      %p148 = scmp.ne.s32.totalorder %s140, %s143
      %p149 = scmp.eq.s32.totalorder %s15, 0
      %p150 = por %p148, %p149
      %p151 = scmp.ne.s32.totalorder %s140, %s143
      %p152 = scmp.eq.s32.totalorder %s20, 1
      %p153 = por %p151, %p152
      %p154 = scmp.ne.s32.totalorder %s143, %s144
      %p155 = scmp.eq.s32.totalorder %s20, 0
      %p156 = por %p154, %p155
      %p157 = scmp.ne.s32.totalorder %s143, %s144
      %p158 = scmp.eq.s32.totalorder %s21, 1
      %p159 = por %p157, %p158
      %p161 = scmp.ne.s32.totalorder %s144, %s160
      %p162 = scmp.eq.s32.totalorder %s21, 0
      %p163 = por %p161, %p162
      %s164 = ssub.s32 %s15, %s22
      %p165 = scmp.eq.s32.totalorder %s164, 0
      %s167 = sadd.s32 %s166, 1
      %s168 = scalar_select %p165, %s166, %s167
      %p171 = pneg %p165
      %p172 = scmp.eq.s32.totalorder %s15, 1
      %p173 = por %p171, %p172
      %p174 = scmp.ne.s32.totalorder %s166, %s169
      %p175 = scmp.eq.s32.totalorder %s15, 0
      %p176 = por %p174, %p175
      %p177 = scmp.ne.s32.totalorder %s166, %s169
      %p178 = scmp.eq.s32.totalorder %s20, 1
      %p179 = por %p177, %p178
      %p180 = scmp.ne.s32.totalorder %s169, %s170
      %p181 = scmp.eq.s32.totalorder %s20, 0
      %p182 = por %p180, %p181
      %p183 = scmp.ne.s32.totalorder %s169, %s170
      %p184 = scmp.eq.s32.totalorder %s21, 1
      %p185 = por %p183, %p184
      %p187 = scmp.ne.s32.totalorder %s170, %s186
      %p188 = scmp.eq.s32.totalorder %s21, 0
      %p189 = por %p187, %p188
      %p190 = scmp.le.s32.totalorder 1, %s15
      %p191 = scmp.lt.s32.totalorder %s15, 3
      %p192 = pnand %p190, %p191
      %p193 = pneg %p192
      // Predicated region
      $region9: #{forward.1} parent=5 // pred_check
        _
      $region10: #{forward.1} parent=5 // pred_check_branch
        %195 = sbr.rel (%p192) target = $region12
      $region11: #{forward.1} parent=5 // pred_region
        %s196 = ssub.s32 %s15, 1
        // Predicated region
        $region13: #{forward.1} parent=11 // pred_check
          %p197 = pneg %p88
        $region14: #{forward.1} parent=11 // pred_check_branch
          %199 = sbr.rel (%p197) target = $region16
        $region15: #{forward.1} parent=11 // pred_region
          %s201 = ssub.s32 15744, 15744
          %202 = vsyncadd [#allocation4], %s201
          %s203 = sshll.u32 [#allocation3], 4
          %s204 = int_to_ptr.vmem [resolvable:$true] %s203
          %209 = dma.hbm_to_vmem [thread:$0]  %s2, 15744, %s204, [#allocation4], 64, 64, 4
        $region16: #{forward.1} parent=11 // pred_fallthru
          _
        // Predicated region
        $region17: #{forward.1} parent=11 // pred_check
          %p210 = pneg %p109
        $region18: #{forward.1} parent=11 // pred_check_branch
          %212 = sbr.rel (%p210) target = $region20
        $region19: #{forward.1} parent=11 // pred_region
          %s214 = ssub.s32 768, 768
          %215 = vsyncadd [#allocation6], %s214
          %s216 = sshll.u32 [#allocation5], 4
          %s217 = int_to_ptr.vmem [resolvable:$true] %s216
          %222 = dma.hbm_to_vmem [thread:$0]  %s3, 768, %s217, [#allocation6], 192, 192, 12
        $region20: #{forward.1} parent=11 // pred_fallthru
          _
        // Predicated region
        $region21: #{forward.1} parent=11 // pred_check
          %p223 = pneg %p130
        $region22: #{forward.1} parent=11 // pred_check_branch
          %225 = sbr.rel (%p223) target = $region24
        $region23: #{forward.1} parent=11 // pred_region
          %s227 = ssub.s32 5504, 5504
          %228 = vsyncadd [#allocation6], %s227
          %s229 = sshll.u32 [#allocation7], 4
          %s230 = int_to_ptr.vmem [resolvable:$true] %s229
          %235 = dma.hbm_to_vmem [thread:$0]  %s4, 5504, %s230, [#allocation6], 128, 128, 8
        $region24: #{forward.1} parent=11 // pred_fallthru
          _
      $region12: #{forward.1} parent=5 // pred_fallthru
        _
      %p236 = scmp.lt.s32.totalorder %s15, 2
      // Predicated region
      $region25: #{forward.1} parent=5 // pred_check
        %p237 = pneg %p236
      $region26: #{forward.1} parent=5 // pred_check_branch
        %239 = sbr.rel (%p237) target = $region28
      $region27: #{forward.1} parent=5 // pred_region
        // Predicated region
        $region29: #{forward.1} parent=27 // pred_check
          %p240 = pneg %p35
        $region30: #{forward.1} parent=27 // pred_check_branch
          %242 = sbr.rel (%p240) target = $region32
        $region31: #{forward.1} parent=27 // pred_region
          %p243 = scmp.lt.s32.totalorder %s15, 1
          %s244 = scalar_select %p243, %s15, 1
          %s245 = smul.addr %s244, 8
          %s246 = scalar_lea.vmem %s0, %s245
        $region32: #{forward.1} parent=27 // pred_fallthru
          _
        // Predicated region
        $region33: #{forward.1} parent=27 // pred_check
          %p247 = pneg %p61
        $region34: #{forward.1} parent=27 // pred_check_branch
          %249 = sbr.rel (%p247) target = $region36
        $region35: #{forward.1} parent=27 // pred_region
          %p250 = scmp.lt.s32.totalorder %s15, 1
          %s251 = scalar_select %p250, %s15, 1
          %s252 = scalar_lea.vmem %s1, %s251
        $region36: #{forward.1} parent=27 // pred_fallthru
          _
      $region28: #{forward.1} parent=5 // pred_fallthru
        _
      %p253 = scmp.le.s32.totalorder 1, %s15
      %p254 = scmp.lt.s32.totalorder %s15, 3
      %p255 = pnand %p253, %p254
      %p256 = pneg %p255
      // Predicated region
      $region37: #{forward.1} parent=5 // pred_check
        _
      $region38: #{forward.1} parent=5 // pred_check_branch
        %258 = sbr.rel (%p255) target = $region40
      $region39: #{forward.1} parent=5 // pred_region
        %s259 = ssub.s32 %s15, 1
        // Predicated region
        $region41: #{forward.1} parent=39 // pred_check
          %p260 = pneg %p88
        $region42: #{forward.1} parent=39 // pred_check_branch
          %262 = sbr.rel (%p260) target = $region44
        $region43: #{forward.1} parent=39 // pred_region
          %263 = dma.done [#allocation4], 15744
        $region44: #{forward.1} parent=39 // pred_fallthru
          _
        // Predicated region
        $region45: #{forward.1} parent=39 // pred_check
          %p264 = pneg %p109
        $region46: #{forward.1} parent=39 // pred_check_branch
          %266 = sbr.rel (%p264) target = $region48
        $region47: #{forward.1} parent=39 // pred_region
          %267 = dma.done [#allocation6], 768
        $region48: #{forward.1} parent=39 // pred_fallthru
          _
        // Predicated region
        $region49: #{forward.1} parent=39 // pred_check
          %p268 = pneg %p130
        $region50: #{forward.1} parent=39 // pred_check_branch
          %270 = sbr.rel (%p268) target = $region52
        $region51: #{forward.1} parent=39 // pred_region
          %271 = dma.done [#allocation6], 5504
        $region52: #{forward.1} parent=39 // pred_fallthru
          _
        %p272 = scmp.lt.s32.totalorder %s20, 1
        %s273 = scalar_select %p272, %s20, 1
        %s274 = smul.addr %s273, 8
        %s275 = scalar_lea.vmem %s0, %s274
        %p276 = pneg %p41
        %p277 = pneg %p38
        %p278 = scmp.lt.s32.totalorder %s20, 1
        %s279 = scalar_select %p278, %s20, 1
        %s280 = scalar_lea.vmem %s1, %s279
        %p281 = pneg %p67
        %p282 = pneg %p64
        %p283 = pneg %p88
        %p284 = pneg %p85
        %p285 = pneg %p109
        %p286 = pneg %p106
        %p287 = pneg %p130
        %p288 = pneg %p127
        %p289 = pneg %p156
        %p290 = pneg %p153
        %p291 = scmp.lt.s32.totalorder %s20, 1
        %s292 = scalar_select %p291, %s20, 1
        %s293 = smul.addr %s292, 8
        %s294 = scalar_lea.vmem %s5, %s293
        %p295 = pneg %p182
        %p296 = pneg %p179
        %p297 = scmp.lt.s32.totalorder %s20, 1
        %s298 = scalar_select %p297, %s20, 1
        %s299 = scalar_lea.vmem %s6, %s298
        %p300 = scmp.lt.s32.totalorder %s20, 1
        %s301 = scalar_select %p300, %s20, 1
        %s302 = smul.addr %s301, 8
        %s303 = scalar_lea.vmem %s0, %s302
        %p304 = scmp.lt.s32.totalorder %s20, 1
        %s305 = scalar_select %p304, %s20, 1
        %s306 = scalar_lea.vmem %s1, %s305
        %p307 = scmp.lt.s32.totalorder %s20, 1
        %s308 = scalar_select %p307, %s20, 1
        %s309 = smul.addr %s308, 8
        %s310 = scalar_lea.vmem %s5, %s309
        %p311 = scmp.lt.s32.totalorder %s20, 1
        %s312 = scalar_select %p311, %s20, 1
        %s313 = scalar_lea.vmem %s6, %s312
        %v315 = vld [vmem:[%s303] sm:$0x3f]
        %v316 = vld [vmem:[%s306] sm:$0x1]
        %vm317 = vcmask 5120
        %318 = vst.msk [vmem:[#allocation2] sm:$0x3f] %vm317, 0.0
        %vm319 = vcmask 13320
        %320 = vst.msk [vmem:[#allocation2 + $0x8] sm:$0x3f] %vm319, 0.0
        %322 = vrot.lane.b32.xlu0 %v315, 1
        %v323 = vpop.permute.xlu0 %322
        %vm325 = vcmask 1045512
        %326 = vst.msk [vmem:[#allocation2] sm:$0x3f] %vm325, %v323
        %327 = vst.msk [vmem:[#allocation2 + $0x8] sm:$0x3f] %vm317, %v323
        %v328 = vld [vmem:[#allocation2] sm:$0x3f]
        %v329 = vpack.c.bf16 %v328, %v328
        %v330 = vld [vmem:[#allocation3] sm:$0xf]
        %v331 = vld [vmem:[#allocation3 + $0x4] sm:$0xf]
        %v332 = vld [vmem:[#allocation2 + $0x8] sm:$0x3f]
        %v333 = vpack.c.bf16 %v332, %v332
        %v334 = vld [vmem:[#allocation3 + $0x8] sm:$0xf]
        %v335 = vld [vmem:[#allocation3 + $0xc] sm:$0xf]
        %v338 = vunpack.c.l.b16 %v334
        %v339 = vunpack.c.l.b16 %v335
        %v340 = vpack.c.b16 %v339, %v338
        %343 = vrot.lane.b32.xlu0 %v329, 127
        %v344 = vpop.permute.xlu0 %343
        %345 = vrot.lane.b32.xlu0 %v333, 127
        %v346 = vpop.permute.xlu0 %345
        %vm347 = vcmask 1039360
        %v348 = vsel %vm347, %v344, %v346
        %vm349 = vcmask 48128
        %v351 = vsel %vm349, %v340, 0
        %vm353 = vcmask 1042432
        %v355 = vsel %vm353, %v348, 0
        %357 = vmatprep.subr.bf16.mxu0 0
        %358 = vmatpush1.bf16.msra.mxu0 0
        %359 = vmatprep.subr.bf16.mxu0 0
        %360 = vmatpush1.bf16.msra.mxu0 0
        %361 = vmatprep.subr.bf16.mxu0 0
        %362 = vmatpush1.bf16.msra.mxu0 0
        %363 = vmatprep.subr.bf16.mxu0 0
        %364 = vmatpush1.bf16.msra.mxu0 0
        %365 = vmatprep.subr.bf16.mxu0 0
        %366 = vmatpush1.bf16.msra.mxu0 0
        %367 = vmatprep.subr.bf16.mxu0 0
        %368 = vmatpush1.bf16.msra.mxu0 0
        %369 = vmatprep.subr.bf16.mxu0 0
        %370 = vmatpush1.bf16.msra.mxu0 0
        %371 = vmatprep.subr.bf16.mxu0 0
        %372 = vmatpush1.bf16.msra.mxu0 %v355
        %373 = vmatprep.subr.bf16.mxu0 0
        %374 = vmatpush2.bf16.msra.mxu0 0
        %375 = vmatprep.subr.bf16.mxu0 0
        %376 = vmatpush2.bf16.msra.mxu0 0
        %377 = vmatprep.subr.bf16.mxu0 0
        %378 = vmatpush2.bf16.msra.mxu0 0
        %379 = vmatprep.subr.bf16.mxu0 0
        %380 = vmatpush2.bf16.msra.mxu0 0
        %381 = vmatprep.subr.bf16.mxu0 0
        %382 = vmatpush2.bf16.msra.mxu0 0
        %383 = vmatprep.subr.bf16.mxu0 0
        %384 = vmatpush2.bf16.msra.mxu0 0
        %385 = vmatprep.subr.bf16.mxu0 0
        %386 = vmatpush2.bf16.msra.mxu0 0
        %387 = vmatprep.subr.bf16.mxu0 0
        %388 = vmatpush2.bf16.msra.mxu0 0
        %389 = vmatprep.mubr.bf16.mxu0 0
        %390 = vmatmul.mubr.bf16.gmra.mxu0 %v351
        %v391 = vpop.f32.mrf.mxu0
        %v392 = vadd.f32 0.0, %v391
        %v393 = vpop.f32.mrf.mxu0
        %v394 = vpop.f32.mrf.mxu0
        %v395 = vadd.f32 0.0, %v394
        %v396 = vpop.f32.mrf.mxu0
        %397 = vdwg.mxu0
        %v400 = vunpack.c.l.b16 %v330
        %v401 = vunpack.c.l.b16 %v331
        %v402 = vpack.c.b16 %v401, %v400
        %v404 = vsel %vm349, %v402, 0
        %v407 = vsel %vm353, %v329, 0
        %409 = vmatprep.subr.bf16.mxu0 0
        %410 = vmatpush1.bf16.msra.mxu0 0
        %411 = vmatprep.subr.bf16.mxu0 0
        %412 = vmatpush1.bf16.msra.mxu0 0
        %413 = vmatprep.subr.bf16.mxu0 0
        %414 = vmatpush1.bf16.msra.mxu0 0
        %415 = vmatprep.subr.bf16.mxu0 0
        %416 = vmatpush1.bf16.msra.mxu0 0
        %417 = vmatprep.subr.bf16.mxu0 0
        %418 = vmatpush1.bf16.msra.mxu0 0
        %419 = vmatprep.subr.bf16.mxu0 0
        %420 = vmatpush1.bf16.msra.mxu0 0
        %421 = vmatprep.subr.bf16.mxu0 0
        %422 = vmatpush1.bf16.msra.mxu0 0
        %423 = vmatprep.subr.bf16.mxu0 0
        %424 = vmatpush1.bf16.msra.mxu0 %v407
        %425 = vmatprep.subr.bf16.mxu0 0
        %426 = vmatpush2.bf16.msra.mxu0 0
        %427 = vmatprep.subr.bf16.mxu0 0
        %428 = vmatpush2.bf16.msra.mxu0 0
        %429 = vmatprep.subr.bf16.mxu0 0
        %430 = vmatpush2.bf16.msra.mxu0 0
        %431 = vmatprep.subr.bf16.mxu0 0
        %432 = vmatpush2.bf16.msra.mxu0 0
        %433 = vmatprep.subr.bf16.mxu0 0
        %434 = vmatpush2.bf16.msra.mxu0 0
        %435 = vmatprep.subr.bf16.mxu0 0
        %436 = vmatpush2.bf16.msra.mxu0 0
        %437 = vmatprep.subr.bf16.mxu0 0
        %438 = vmatpush2.bf16.msra.mxu0 0
        %439 = vmatprep.subr.bf16.mxu0 0
        %440 = vmatpush2.bf16.msra.mxu0 0
        %441 = vmatprep.mubr.bf16.mxu0 0
        %442 = vmatmul.mubr.bf16.gmra.mxu0 %v404
        %v443 = vpop.f32.mrf.mxu0
        %v444 = vadd.f32 %v392, %v443
        %v445 = vpop.f32.mrf.mxu0
        %v446 = vpop.f32.mrf.mxu0
        %v447 = vadd.f32 %v395, %v446
        %v448 = vpop.f32.mrf.mxu0
        %449 = vdwg.mxu0
        %v450 = vld [vmem:[#allocation3 + $0x10] sm:$0xf]
        %v451 = vld [vmem:[#allocation3 + $0x14] sm:$0xf]
        %v454 = vunpack.c.l.b16 %v450
        %v455 = vunpack.c.l.b16 %v451
        %v456 = vpack.c.b16 %v455, %v454
        %457 = vrot.lane.b32.xlu0 %v329, 126
        %v458 = vpop.permute.xlu0 %457
        %459 = vrot.lane.b32.xlu0 %v333, 126
        %v460 = vpop.permute.xlu0 %459
        %vm461 = vcmask 1031168
        %v462 = vsel %vm461, %v458, %v460
        %v464 = vsel %vm349, %v456, 0
        %v467 = vsel %vm353, %v462, 0
        %469 = vmatprep.subr.bf16.mxu0 0
        %470 = vmatpush1.bf16.msra.mxu0 0
        %471 = vmatprep.subr.bf16.mxu0 0
        %472 = vmatpush1.bf16.msra.mxu0 0
        %473 = vmatprep.subr.bf16.mxu0 0
        %474 = vmatpush1.bf16.msra.mxu0 0
        %475 = vmatprep.subr.bf16.mxu0 0
        %476 = vmatpush1.bf16.msra.mxu0 0
        %477 = vmatprep.subr.bf16.mxu0 0
        %478 = vmatpush1.bf16.msra.mxu0 0
        %479 = vmatprep.subr.bf16.mxu0 0
        %480 = vmatpush1.bf16.msra.mxu0 0
        %481 = vmatprep.subr.bf16.mxu0 0
        %482 = vmatpush1.bf16.msra.mxu0 0
        %483 = vmatprep.subr.bf16.mxu0 0
        %484 = vmatpush1.bf16.msra.mxu0 %v467
        %485 = vmatprep.subr.bf16.mxu0 0
        %486 = vmatpush2.bf16.msra.mxu0 0
        %487 = vmatprep.subr.bf16.mxu0 0
        %488 = vmatpush2.bf16.msra.mxu0 0
        %489 = vmatprep.subr.bf16.mxu0 0
        %490 = vmatpush2.bf16.msra.mxu0 0
        %491 = vmatprep.subr.bf16.mxu0 0
        %492 = vmatpush2.bf16.msra.mxu0 0
        %493 = vmatprep.subr.bf16.mxu0 0
        %494 = vmatpush2.bf16.msra.mxu0 0
        %495 = vmatprep.subr.bf16.mxu0 0
        %496 = vmatpush2.bf16.msra.mxu0 0
        %497 = vmatprep.subr.bf16.mxu0 0
        %498 = vmatpush2.bf16.msra.mxu0 0
        %499 = vmatprep.subr.bf16.mxu0 0
        %500 = vmatpush2.bf16.msra.mxu0 0
        %501 = vmatprep.mubr.bf16.mxu0 0
        %502 = vmatmul.mubr.bf16.gmra.mxu0 %v464
        %v503 = vpop.f32.mrf.mxu0
        %v504 = vadd.f32 0.0, %v503
        %v505 = vpop.f32.mrf.mxu0
        %v506 = vpop.f32.mrf.mxu0
        %v507 = vadd.f32 0.0, %v506
        %v508 = vpop.f32.mrf.mxu0
        %509 = vdwg.mxu0
        %v510 = vadd.f32 %v444, %v504
        %v511 = vadd.f32 %v447, %v507
        %v512 = vld [vmem:[#allocation7] sm:$0xff]
        %v513 = vld [vmem:[#allocation7 + $0x8] sm:$0xff]
        %515 = vset.pattern.permute.xlu0 0
        %516 = vperm.xlu0 %515, %v512
        %v517 = vpop.permute.xlu0 %516
        %520 = vset.pattern.permute.xlu0 0
        %521 = vperm.xlu0 %520, %v513
        %v522 = vpop.permute.xlu0 %521
        %v524 = vadd.f32 %v510, %v517
        %v525 = vadd.f32 %v511, %v522
        %vm526 = vcmp.ge.f32.partialorder %v524, 0.0
        %vm527 = vcmp.ge.f32.partialorder %v525, 0.0
        %v528 = vmul.f32 %v524, 0.01
        %v529 = vmul.f32 %v525, 0.01
        %v530 = vsel %vm526, %v524, %v528
        %v531 = vsel %vm527, %v525, %v529
        %534 = vrot.lane.b32.xlu0 %v530, 127
        %v535 = vpop.permute.xlu0 %534
        %536 = vrot.lane.b32.xlu0 %v531, 127
        %v537 = vpop.permute.xlu0 %536
        %v540 = vmax.f32 %v530, %v535
        %v541 = vmax.f32 %v531, %v537
        %v542 = vpack.c.bf16 %v541, %v540
        %v543 = vld [vmem:[#allocation3 + $0x18] sm:$0xf]
        %v544 = vld [vmem:[#allocation3 + $0x1c] sm:$0xf]
        %v545 = vld [vmem:[#allocation3 + $0x20] sm:$0xf]
        %v546 = vld [vmem:[#allocation3 + $0x24] sm:$0xf]
        %v547 = vld [vmem:[#allocation3 + $0x28] sm:$0xf]
        %v548 = vld [vmem:[#allocation3 + $0x2c] sm:$0xf]
        %v549 = vld [vmem:[#allocation3 + $0x30] sm:$0xf]
        %v550 = vld [vmem:[#allocation3 + $0x34] sm:$0xf]
        %v551 = vld [vmem:[#allocation3 + $0x38] sm:$0xf]
        %v552 = vld [vmem:[#allocation3 + $0x3c] sm:$0xf]
        %v553 = vld [vmem:[#allocation3 + $0x40] sm:$0xf]
        %v554 = vld [vmem:[#allocation3 + $0x44] sm:$0xf]
        %v555 = vld [vmem:[#allocation3 + $0x48] sm:$0xf]
        %v556 = vld [vmem:[#allocation3 + $0x4c] sm:$0xf]
        %v557 = vld [vmem:[#allocation3 + $0x50] sm:$0xf]
        %v558 = vld [vmem:[#allocation3 + $0x54] sm:$0xf]
        %v575 = vunpack.c.l.b16 %v543
        %v576 = vunpack.c.l.b16 %v544
        %v577 = vunpack.c.l.b16 %v545
        %v578 = vunpack.c.l.b16 %v546
        %v579 = vunpack.c.l.b16 %v547
        %v580 = vunpack.c.l.b16 %v548
        %v581 = vunpack.c.l.b16 %v549
        %v582 = vunpack.c.l.b16 %v550
        %v583 = vunpack.c.l.b16 %v551
        %v584 = vunpack.c.l.b16 %v552
        %v585 = vunpack.c.l.b16 %v553
        %v586 = vunpack.c.l.b16 %v554
        %v587 = vunpack.c.l.b16 %v555
        %v588 = vunpack.c.l.b16 %v556
        %v589 = vunpack.c.l.b16 %v557
        %v590 = vunpack.c.l.b16 %v558
        %v591 = vpack.c.b16 %v576, %v575
        %v592 = vpack.c.b16 %v578, %v577
        %v593 = vpack.c.b16 %v580, %v579
        %v594 = vpack.c.b16 %v582, %v581
        %v595 = vpack.c.b16 %v584, %v583
        %v596 = vpack.c.b16 %v586, %v585
        %v597 = vpack.c.b16 %v588, %v587
        %v598 = vpack.c.b16 %v590, %v589
        %vm606 = vcmask 1039360
        %v608 = vsel %vm606, %v542, 0
        %vm610 = vcmask 1046528
        %vm611 = vcmask 1047552
        %v612 = vsel %vm610, 4294967295, 65535
        %v613 = vsel %vm611, %v612, 0
        %v615 = vand.u32 %v598, %v613
        %617 = vmatprep.subr.bf16.mxu0 0
        %618 = vmatpush1.bf16.msra.mxu0 %v615
        %619 = vmatprep.subr.bf16.mxu0 0
        %620 = vmatpush1.bf16.msra.mxu0 %v597
        %621 = vmatprep.subr.bf16.mxu0 0
        %622 = vmatpush1.bf16.msra.mxu0 %v596
        %623 = vmatprep.subr.bf16.mxu0 0
        %624 = vmatpush1.bf16.msra.mxu0 %v595
        %625 = vmatprep.subr.bf16.mxu0 0
        %626 = vmatpush1.bf16.msra.mxu0 %v594
        %627 = vmatprep.subr.bf16.mxu0 0
        %628 = vmatpush1.bf16.msra.mxu0 %v593
        %629 = vmatprep.subr.bf16.mxu0 0
        %630 = vmatpush1.bf16.msra.mxu0 %v592
        %631 = vmatprep.subr.bf16.mxu0 0
        %632 = vmatpush1.bf16.msra.mxu0 %v591
        %633 = vmatprep.subr.bf16.mxu0 0
        %634 = vmatpush2.bf16.msra.mxu0 0
        %635 = vmatprep.subr.bf16.mxu0 0
        %636 = vmatpush2.bf16.msra.mxu0 0
        %637 = vmatprep.subr.bf16.mxu0 0
        %638 = vmatpush2.bf16.msra.mxu0 0
        %639 = vmatprep.subr.bf16.mxu0 0
        %640 = vmatpush2.bf16.msra.mxu0 0
        %641 = vmatprep.subr.bf16.mxu0 0
        %642 = vmatpush2.bf16.msra.mxu0 0
        %643 = vmatprep.subr.bf16.mxu0 0
        %644 = vmatpush2.bf16.msra.mxu0 0
        %645 = vmatprep.subr.bf16.mxu0 0
        %646 = vmatpush2.bf16.msra.mxu0 0
        %647 = vmatprep.subr.bf16.mxu0 0
        %648 = vmatpush2.bf16.msra.mxu0 0
        %649 = vmatprep.mubr.bf16.mxu0 0
        %650 = vmatmul.mubr.bf16.gmra.mxu0 %v608
        %v651 = vpop.f32.mrf.mxu0
        %v652 = vadd.f32 0.0, %v651
        %v653 = vpop.f32.mrf.mxu0
        %v654 = vpop.f32.mrf.mxu0
        %v655 = vadd.f32 0.0, %v654
        %v656 = vpop.f32.mrf.mxu0
        %657 = vdwg.mxu0
        %vm658 = vcmask 7168
        %659 = vst.msk [vmem:[#allocation2] sm:$0xff] %vm658, 0.0
        %660 = vst.msk [vmem:[#allocation2 + $0x10] sm:$0xff] %vm658, 0.0
        %vm661 = vcmask 540168
        %662 = vst.msk [vmem:[#allocation2] sm:$0xff] %vm661, 0.0
        %663 = vst.msk [vmem:[#allocation2 + $0x10] sm:$0xff] %vm661, 0.0
        %666 = vrot.lane.b32.xlu0 %v652, 1
        %v667 = vpop.permute.xlu0 %666
        %668 = vrot.lane.b32.xlu0 %v655, 1
        %v669 = vpop.permute.xlu0 %668
        %vm672 = vcmask 531464
        %673 = vst.msk [vmem:[#allocation2] sm:$0xff] %vm672, %v667
        %674 = vst.msk [vmem:[#allocation2 + $0x10] sm:$0xff] %vm672, %v669
        %v675 = vld [vmem:[#allocation2] sm:$0xff]
        %v676 = vld [vmem:[#allocation2 + $0x10] sm:$0xff]
        %v677 = vpack.c.bf16 %v676, %v675
        %v678 = vld [vmem:[#allocation3 + $0x58] sm:$0xf]
        %v679 = vld [vmem:[#allocation3 + $0x5c] sm:$0xf]
        %v680 = vld [vmem:[#allocation3 + $0x60] sm:$0xf]
        %v681 = vld [vmem:[#allocation3 + $0x64] sm:$0xf]
        %v682 = vld [vmem:[#allocation3 + $0x68] sm:$0xf]
        %v683 = vld [vmem:[#allocation3 + $0x6c] sm:$0xf]
        %v684 = vld [vmem:[#allocation3 + $0x70] sm:$0xf]
        %v685 = vld [vmem:[#allocation3 + $0x74] sm:$0xf]
        %v690 = vunpack.c.l.b16 %v682
        %v691 = vunpack.c.l.b16 %v683
        %v692 = vunpack.c.l.b16 %v684
        %v693 = vunpack.c.l.b16 %v685
        %v694 = vpack.c.b16 %v691, %v690
        %v695 = vpack.c.b16 %v693, %v692
        %697 = vrot.lane.b32.xlu0 %v677, 127
        %v698 = vpop.permute.xlu0 %697
        %vm700 = vcmask 130048
        %v702 = vsel %vm700, %v694, 0
        %v705 = vsel %vm700, %v695, 0
        %707 = vmatprep.subr.bf16.mxu0 0
        %708 = vmatpush1.bf16.msra.mxu0 0
        %709 = vmatprep.subr.bf16.mxu0 0
        %710 = vmatpush1.bf16.msra.mxu0 0
        %711 = vmatprep.subr.bf16.mxu0 0
        %712 = vmatpush1.bf16.msra.mxu0 0
        %713 = vmatprep.subr.bf16.mxu0 0
        %714 = vmatpush1.bf16.msra.mxu0 0
        %715 = vmatprep.subr.bf16.mxu0 0
        %716 = vmatpush1.bf16.msra.mxu0 0
        %717 = vmatprep.subr.bf16.mxu0 0
        %718 = vmatpush1.bf16.msra.mxu0 0
        %719 = vmatprep.subr.bf16.mxu0 0
        %720 = vmatpush1.bf16.msra.mxu0 0
        %721 = vmatprep.subr.bf16.mxu0 0
        %722 = vmatpush1.bf16.msra.mxu0 %v698
        %723 = vmatprep.subr.bf16.mxu0 0
        %724 = vmatpush2.bf16.msra.mxu0 0
        %725 = vmatprep.subr.bf16.mxu0 0
        %726 = vmatpush2.bf16.msra.mxu0 0
        %727 = vmatprep.subr.bf16.mxu0 0
        %728 = vmatpush2.bf16.msra.mxu0 0
        %729 = vmatprep.subr.bf16.mxu0 0
        %730 = vmatpush2.bf16.msra.mxu0 0
        %731 = vmatprep.subr.bf16.mxu0 0
        %732 = vmatpush2.bf16.msra.mxu0 0
        %733 = vmatprep.subr.bf16.mxu0 0
        %734 = vmatpush2.bf16.msra.mxu0 0
        %735 = vmatprep.subr.bf16.mxu0 0
        %736 = vmatpush2.bf16.msra.mxu0 0
        %737 = vmatprep.subr.bf16.mxu0 0
        %738 = vmatpush2.bf16.msra.mxu0 0
        %739 = vmatprep.mubr.bf16.mxu0 0
        %740 = vmatmul.mubr.bf16.gmra.mxu0 %v702
        %v741 = vpop.f32.mrf.mxu0
        %v742 = vadd.f32 0.0, %v741
        %v743 = vpop.f32.mrf.mxu0
        %v744 = vpop.f32.mrf.mxu0
        %v745 = vadd.f32 0.0, %v744
        %v746 = vpop.f32.mrf.mxu0
        %747 = vmatprep.mubr.bf16.mxu0 0
        %748 = vmatmul.mubr.bf16.gmra.mxu0 %v705
        %v749 = vpop.f32.mrf.mxu0
        %v750 = vadd.f32 0.0, %v749
        %v751 = vpop.f32.mrf.mxu0
        %v752 = vpop.f32.mrf.mxu0
        %v753 = vadd.f32 0.0, %v752
        %v754 = vpop.f32.mrf.mxu0
        %755 = vdwg.mxu0
        %v760 = vunpack.c.l.b16 %v678
        %v761 = vunpack.c.l.b16 %v679
        %v762 = vunpack.c.l.b16 %v680
        %v763 = vunpack.c.l.b16 %v681
        %v764 = vpack.c.b16 %v761, %v760
        %v765 = vpack.c.b16 %v763, %v762
        %v767 = vsel %vm700, %v764, 0
        %v770 = vsel %vm700, %v765, 0
        %772 = vmatprep.subr.bf16.mxu0 0
        %773 = vmatpush1.bf16.msra.mxu0 0
        %774 = vmatprep.subr.bf16.mxu0 0
        %775 = vmatpush1.bf16.msra.mxu0 0
        %776 = vmatprep.subr.bf16.mxu0 0
        %777 = vmatpush1.bf16.msra.mxu0 0
        %778 = vmatprep.subr.bf16.mxu0 0
        %779 = vmatpush1.bf16.msra.mxu0 0
        %780 = vmatprep.subr.bf16.mxu0 0
        %781 = vmatpush1.bf16.msra.mxu0 0
        %782 = vmatprep.subr.bf16.mxu0 0
        %783 = vmatpush1.bf16.msra.mxu0 0
        %784 = vmatprep.subr.bf16.mxu0 0
        %785 = vmatpush1.bf16.msra.mxu0 0
        %786 = vmatprep.subr.bf16.mxu0 0
        %787 = vmatpush1.bf16.msra.mxu0 %v677
        %788 = vmatprep.subr.bf16.mxu0 0
        %789 = vmatpush2.bf16.msra.mxu0 0
        %790 = vmatprep.subr.bf16.mxu0 0
        %791 = vmatpush2.bf16.msra.mxu0 0
        %792 = vmatprep.subr.bf16.mxu0 0
        %793 = vmatpush2.bf16.msra.mxu0 0
        %794 = vmatprep.subr.bf16.mxu0 0
        %795 = vmatpush2.bf16.msra.mxu0 0
        %796 = vmatprep.subr.bf16.mxu0 0
        %797 = vmatpush2.bf16.msra.mxu0 0
        %798 = vmatprep.subr.bf16.mxu0 0
        %799 = vmatpush2.bf16.msra.mxu0 0
        %800 = vmatprep.subr.bf16.mxu0 0
        %801 = vmatpush2.bf16.msra.mxu0 0
        %802 = vmatprep.subr.bf16.mxu0 0
        %803 = vmatpush2.bf16.msra.mxu0 0
        %804 = vmatprep.mubr.bf16.mxu0 0
        %805 = vmatmul.mubr.bf16.gmra.mxu0 %v767
        %v806 = vpop.f32.mrf.mxu0
        %v807 = vadd.f32 %v742, %v806
        %v808 = vpop.f32.mrf.mxu0
        %v809 = vpop.f32.mrf.mxu0
        %v810 = vadd.f32 %v745, %v809
        %v811 = vpop.f32.mrf.mxu0
        %812 = vmatprep.mubr.bf16.mxu0 0
        %813 = vmatmul.mubr.bf16.gmra.mxu0 %v770
        %v814 = vpop.f32.mrf.mxu0
        %v815 = vadd.f32 %v750, %v814
        %v816 = vpop.f32.mrf.mxu0
        %v817 = vpop.f32.mrf.mxu0
        %v818 = vadd.f32 %v753, %v817
        %v819 = vpop.f32.mrf.mxu0
        %820 = vdwg.mxu0
        %v821 = vld [vmem:[#allocation3 + $0x78] sm:$0xf]
        %v822 = vld [vmem:[#allocation3 + $0x7c] sm:$0xf]
        %v823 = vld [vmem:[#allocation3 + $0x80] sm:$0xf]
        %v824 = vld [vmem:[#allocation3 + $0x84] sm:$0xf]
        %v829 = vunpack.c.l.b16 %v821
        %v830 = vunpack.c.l.b16 %v822
        %v831 = vunpack.c.l.b16 %v823
        %v832 = vunpack.c.l.b16 %v824
        %v833 = vpack.c.b16 %v830, %v829
        %v834 = vpack.c.b16 %v832, %v831
        %835 = vrot.lane.b32.xlu0 %v677, 126
        %v836 = vpop.permute.xlu0 %835
        %v839 = vsel %vm700, %v833, 0
        %v842 = vsel %vm700, %v834, 0
        %844 = vmatprep.subr.bf16.mxu0 0
        %845 = vmatpush1.bf16.msra.mxu0 0
        %846 = vmatprep.subr.bf16.mxu0 0
        %847 = vmatpush1.bf16.msra.mxu0 0
        %848 = vmatprep.subr.bf16.mxu0 0
        %849 = vmatpush1.bf16.msra.mxu0 0
        %850 = vmatprep.subr.bf16.mxu0 0
        %851 = vmatpush1.bf16.msra.mxu0 0
        %852 = vmatprep.subr.bf16.mxu0 0
        %853 = vmatpush1.bf16.msra.mxu0 0
        %854 = vmatprep.subr.bf16.mxu0 0
        %855 = vmatpush1.bf16.msra.mxu0 0
        %856 = vmatprep.subr.bf16.mxu0 0
        %857 = vmatpush1.bf16.msra.mxu0 0
        %858 = vmatprep.subr.bf16.mxu0 0
        %859 = vmatpush1.bf16.msra.mxu0 %v836
        %860 = vmatprep.subr.bf16.mxu0 0
        %861 = vmatpush2.bf16.msra.mxu0 0
        %862 = vmatprep.subr.bf16.mxu0 0
        %863 = vmatpush2.bf16.msra.mxu0 0
        %864 = vmatprep.subr.bf16.mxu0 0
        %865 = vmatpush2.bf16.msra.mxu0 0
        %866 = vmatprep.subr.bf16.mxu0 0
        %867 = vmatpush2.bf16.msra.mxu0 0
        %868 = vmatprep.subr.bf16.mxu0 0
        %869 = vmatpush2.bf16.msra.mxu0 0
        %870 = vmatprep.subr.bf16.mxu0 0
        %871 = vmatpush2.bf16.msra.mxu0 0
        %872 = vmatprep.subr.bf16.mxu0 0
        %873 = vmatpush2.bf16.msra.mxu0 0
        %874 = vmatprep.subr.bf16.mxu0 0
        %875 = vmatpush2.bf16.msra.mxu0 0
        %876 = vmatprep.mubr.bf16.mxu0 0
        %877 = vmatmul.mubr.bf16.gmra.mxu0 %v839
        %v878 = vpop.f32.mrf.mxu0
        %v879 = vadd.f32 0.0, %v878
        %v880 = vpop.f32.mrf.mxu0
        %v881 = vpop.f32.mrf.mxu0
        %v882 = vadd.f32 0.0, %v881
        %v883 = vpop.f32.mrf.mxu0
        %884 = vmatprep.mubr.bf16.mxu0 0
        %885 = vmatmul.mubr.bf16.gmra.mxu0 %v842
        %v886 = vpop.f32.mrf.mxu0
        %v887 = vadd.f32 0.0, %v886
        %v888 = vpop.f32.mrf.mxu0
        %v889 = vpop.f32.mrf.mxu0
        %v890 = vadd.f32 0.0, %v889
        %v891 = vpop.f32.mrf.mxu0
        %892 = vdwg.mxu0
        %v893 = vadd.f32 %v807, %v879
        %v894 = vadd.f32 %v810, %v882
        %v895 = vadd.f32 %v815, %v887
        %v896 = vadd.f32 %v818, %v890
        %v897 = vld [vmem:[#allocation7 + $0x10] sm:$0xff]
        %v898 = vld [vmem:[#allocation7 + $0x18] sm:$0xff]
        %v899 = vld [vmem:[#allocation7 + $0x20] sm:$0xff]
        %v900 = vld [vmem:[#allocation7 + $0x28] sm:$0xff]
        %902 = vset.pattern.permute.xlu0 0
        %903 = vperm.xlu0 %902, %v897
        %v904 = vpop.permute.xlu0 %903
        %907 = vset.pattern.permute.xlu0 0
        %908 = vperm.xlu0 %907, %v898
        %v909 = vpop.permute.xlu0 %908
        %912 = vset.pattern.permute.xlu0 0
        %913 = vperm.xlu0 %912, %v899
        %v914 = vpop.permute.xlu0 %913
        %917 = vset.pattern.permute.xlu0 0
        %918 = vperm.xlu0 %917, %v900
        %v919 = vpop.permute.xlu0 %918
        %v921 = vadd.f32 %v893, %v904
        %v922 = vadd.f32 %v894, %v909
        %v923 = vadd.f32 %v895, %v914
        %v924 = vadd.f32 %v896, %v919
        %vm925 = vcmp.ge.f32.partialorder %v921, 0.0
        %vm926 = vcmp.ge.f32.partialorder %v922, 0.0
        %vm927 = vcmp.ge.f32.partialorder %v923, 0.0
        %vm928 = vcmp.ge.f32.partialorder %v924, 0.0
        %v929 = vmul.f32 %v921, 0.01
        %v930 = vmul.f32 %v922, 0.01
        %v931 = vmul.f32 %v923, 0.01
        %v932 = vmul.f32 %v924, 0.01
        %v933 = vsel %vm925, %v921, %v929
        %v934 = vsel %vm926, %v922, %v930
        %v935 = vsel %vm927, %v923, %v931
        %v936 = vsel %vm928, %v924, %v932
        %941 = vrot.lane.b32.xlu0 %v933, 127
        %v942 = vpop.permute.xlu0 %941
        %943 = vrot.lane.b32.xlu0 %v934, 127
        %v944 = vpop.permute.xlu0 %943
        %945 = vrot.lane.b32.xlu0 %v935, 127
        %v946 = vpop.permute.xlu0 %945
        %947 = vrot.lane.b32.xlu0 %v936, 127
        %v948 = vpop.permute.xlu0 %947
        %v953 = vmax.f32 %v933, %v942
        %v954 = vmax.f32 %v934, %v944
        %v955 = vmax.f32 %v935, %v946
        %v956 = vmax.f32 %v936, %v948
        %v957 = vpack.c.bf16 %v954, %v953
        %v958 = vpack.c.bf16 %v956, %v955
        %v959 = vld [vmem:[#allocation3 + $0x88] sm:$0xf]
        %v960 = vld [vmem:[#allocation3 + $0x8c] sm:$0xf]
        %v961 = vld [vmem:[#allocation3 + $0x90] sm:$0xf]
        %v962 = vld [vmem:[#allocation3 + $0x94] sm:$0xf]
        %v963 = vld [vmem:[#allocation3 + $0x98] sm:$0xf]
        %v964 = vld [vmem:[#allocation3 + $0x9c] sm:$0xf]
        %v965 = vld [vmem:[#allocation3 + $0xa0] sm:$0xf]
        %v966 = vld [vmem:[#allocation3 + $0xa4] sm:$0xf]
        %v975 = vunpack.c.l.b16 %v959
        %v976 = vunpack.c.l.b16 %v960
        %v977 = vunpack.c.l.b16 %v961
        %v978 = vunpack.c.l.b16 %v962
        %v979 = vunpack.c.l.b16 %v963
        %v980 = vunpack.c.l.b16 %v964
        %v981 = vunpack.c.l.b16 %v965
        %v982 = vunpack.c.l.b16 %v966
        %v983 = vpack.c.b16 %v976, %v975
        %v984 = vpack.c.b16 %v978, %v977
        %v985 = vpack.c.b16 %v980, %v979
        %v986 = vpack.c.b16 %v982, %v981
        %vm990 = vcmask 515072
        %v992 = vsel %vm990, %v957, 0
        %v995 = vsel %vm990, %v958, 0
        %v998 = vand.u32 %v986, %v613
        %1000 = vmatprep.subr.bf16.mxu0 0
        %1001 = vmatpush1.bf16.msra.mxu0 0
        %1002 = vmatprep.subr.bf16.mxu0 0
        %1003 = vmatpush1.bf16.msra.mxu0 0
        %1004 = vmatprep.subr.bf16.mxu0 0
        %1005 = vmatpush1.bf16.msra.mxu0 0
        %1006 = vmatprep.subr.bf16.mxu0 0
        %1007 = vmatpush1.bf16.msra.mxu0 0
        %1008 = vmatprep.subr.bf16.mxu0 0
        %1009 = vmatpush1.bf16.msra.mxu0 %v998
        %1010 = vmatprep.subr.bf16.mxu0 0
        %1011 = vmatpush1.bf16.msra.mxu0 %v985
        %1012 = vmatprep.subr.bf16.mxu0 0
        %1013 = vmatpush1.bf16.msra.mxu0 %v984
        %1014 = vmatprep.subr.bf16.mxu0 0
        %1015 = vmatpush1.bf16.msra.mxu0 %v983
        %1016 = vmatprep.subr.bf16.mxu0 0
        %1017 = vmatpush2.bf16.msra.mxu0 0
        %1018 = vmatprep.subr.bf16.mxu0 0
        %1019 = vmatpush2.bf16.msra.mxu0 0
        %1020 = vmatprep.subr.bf16.mxu0 0
        %1021 = vmatpush2.bf16.msra.mxu0 0
        %1022 = vmatprep.subr.bf16.mxu0 0
        %1023 = vmatpush2.bf16.msra.mxu0 0
        %1024 = vmatprep.subr.bf16.mxu0 0
        %1025 = vmatpush2.bf16.msra.mxu0 0
        %1026 = vmatprep.subr.bf16.mxu0 0
        %1027 = vmatpush2.bf16.msra.mxu0 0
        %1028 = vmatprep.subr.bf16.mxu0 0
        %1029 = vmatpush2.bf16.msra.mxu0 0
        %1030 = vmatprep.subr.bf16.mxu0 0
        %1031 = vmatpush2.bf16.msra.mxu0 0
        %1032 = vmatprep.mubr.bf16.mxu0 0
        %1033 = vmatmul.mubr.bf16.gmra.mxu0 %v992
        %v1034 = vpop.f32.mrf.mxu0
        %v1035 = vadd.f32 0.0, %v1034
        %v1036 = vpop.f32.mrf.mxu0
        %v1037 = vpop.f32.mrf.mxu0
        %v1038 = vadd.f32 0.0, %v1037
        %v1039 = vpop.f32.mrf.mxu0
        %1040 = vmatprep.mubr.bf16.mxu0 0
        %1041 = vmatmul.mubr.bf16.gmra.mxu0 %v995
        %v1042 = vpop.f32.mrf.mxu0
        %v1043 = vadd.f32 0.0, %v1042
        %v1044 = vpop.f32.mrf.mxu0
        %v1045 = vpop.f32.mrf.mxu0
        %v1046 = vadd.f32 0.0, %v1045
        %v1047 = vpop.f32.mrf.mxu0
        %1048 = vdwg.mxu0
        %1049 = vst.msk [vmem:[#allocation2] sm:$0xff] %vm658, 0.0
        %1050 = vst.msk [vmem:[#allocation2 + $0x10] sm:$0xff] %vm658, 0.0
        %1051 = vst.msk [vmem:[#allocation2 + $0x20] sm:$0xff] %vm658, 0.0
        %1052 = vst.msk [vmem:[#allocation2 + $0x30] sm:$0xff] %vm658, 0.0
        %vm1053 = vcmask 277768
        %1054 = vst.msk [vmem:[#allocation2] sm:$0xff] %vm1053, 0.0
        %1055 = vst.msk [vmem:[#allocation2 + $0x10] sm:$0xff] %vm1053, 0.0
        %1056 = vst.msk [vmem:[#allocation2 + $0x20] sm:$0xff] %vm1053, 0.0
        %1057 = vst.msk [vmem:[#allocation2 + $0x30] sm:$0xff] %vm1053, 0.0
        %1062 = vrot.lane.b32.xlu0 %v1035, 1
        %v1063 = vpop.permute.xlu0 %1062
        %1064 = vrot.lane.b32.xlu0 %v1038, 1
        %v1065 = vpop.permute.xlu0 %1064
        %1066 = vrot.lane.b32.xlu0 %v1043, 1
        %v1067 = vpop.permute.xlu0 %1066
        %1068 = vrot.lane.b32.xlu0 %v1046, 1
        %v1069 = vpop.permute.xlu0 %1068
        %vm1074 = vcmask 269320
        %1075 = vst.msk [vmem:[#allocation2] sm:$0xff] %vm1074, %v1063
        %1076 = vst.msk [vmem:[#allocation2 + $0x10] sm:$0xff] %vm1074, %v1065
        %1077 = vst.msk [vmem:[#allocation2 + $0x20] sm:$0xff] %vm1074, %v1067
        %1078 = vst.msk [vmem:[#allocation2 + $0x30] sm:$0xff] %vm1074, %v1069
        %v1079 = vld [vmem:[#allocation2] sm:$0xff]
        %v1080 = vld [vmem:[#allocation2 + $0x10] sm:$0xff]
        %v1081 = vld [vmem:[#allocation2 + $0x20] sm:$0xff]
        %v1082 = vld [vmem:[#allocation2 + $0x30] sm:$0xff]
        %v1083 = vpack.c.bf16 %v1080, %v1079
        %v1084 = vpack.c.bf16 %v1082, %v1081
        %v1085 = vld [vmem:[#allocation3 + $0xa8] sm:$0xf]
        %v1086 = vld [vmem:[#allocation3 + $0xac] sm:$0xf]
        %v1087 = vld [vmem:[#allocation3 + $0xb0] sm:$0xf]
        %v1088 = vld [vmem:[#allocation3 + $0xb4] sm:$0xf]
        %v1089 = vld [vmem:[#allocation3 + $0xb8] sm:$0xf]
        %v1090 = vld [vmem:[#allocation3 + $0xbc] sm:$0xf]
        %v1091 = vld [vmem:[#allocation3 + $0xc0] sm:$0xf]
        %v1092 = vld [vmem:[#allocation3 + $0xc4] sm:$0xf]
        %v1093 = vld [vmem:[#allocation3 + $0xc8] sm:$0xf]
        %v1094 = vld [vmem:[#allocation3 + $0xcc] sm:$0xf]
        %v1095 = vld [vmem:[#allocation3 + $0xd0] sm:$0xf]
        %v1096 = vld [vmem:[#allocation3 + $0xd4] sm:$0xf]
        %v1097 = vld [vmem:[#allocation3 + $0xd8] sm:$0xf]
        %v1098 = vld [vmem:[#allocation3 + $0xdc] sm:$0xf]
        %v1099 = vld [vmem:[#allocation3 + $0xe0] sm:$0xf]
        %v1100 = vld [vmem:[#allocation3 + $0xe4] sm:$0xf]
        %v1109 = vunpack.c.l.b16 %v1093
        %v1110 = vunpack.c.l.b16 %v1094
        %v1111 = vunpack.c.l.b16 %v1095
        %v1112 = vunpack.c.l.b16 %v1096
        %v1113 = vunpack.c.l.b16 %v1097
        %v1114 = vunpack.c.l.b16 %v1098
        %v1115 = vunpack.c.l.b16 %v1099
        %v1116 = vunpack.c.l.b16 %v1100
        %v1117 = vpack.c.b16 %v1110, %v1109
        %v1118 = vpack.c.b16 %v1112, %v1111
        %v1119 = vpack.c.b16 %v1114, %v1113
        %v1120 = vpack.c.b16 %v1116, %v1115
        %1123 = vrot.lane.b32.xlu0 %v1083, 127
        %v1124 = vpop.permute.xlu0 %1123
        %1125 = vrot.lane.b32.xlu0 %v1084, 127
        %v1126 = vpop.permute.xlu0 %1125
        %vm1129 = vcmask 261120
        %v1131 = vsel %vm1129, %v1117, 0
        %v1134 = vsel %vm1129, %v1118, 0
        %v1137 = vsel %vm1129, %v1119, 0
        %v1140 = vsel %vm1129, %v1120, 0
        %1142 = vmatprep.subr.bf16.mxu0 0
        %1143 = vmatpush1.bf16.msra.mxu0 0
        %1144 = vmatprep.subr.bf16.mxu0 0
        %1145 = vmatpush1.bf16.msra.mxu0 0
        %1146 = vmatprep.subr.bf16.mxu0 0
        %1147 = vmatpush1.bf16.msra.mxu0 0
        %1148 = vmatprep.subr.bf16.mxu0 0
        %1149 = vmatpush1.bf16.msra.mxu0 0
        %1150 = vmatprep.subr.bf16.mxu0 0
        %1151 = vmatpush1.bf16.msra.mxu0 0
        %1152 = vmatprep.subr.bf16.mxu0 0
        %1153 = vmatpush1.bf16.msra.mxu0 0
        %1154 = vmatprep.subr.bf16.mxu0 0
        %1155 = vmatpush1.bf16.msra.mxu0 %v1126
        %1156 = vmatprep.subr.bf16.mxu0 0
        %1157 = vmatpush1.bf16.msra.mxu0 %v1124
        %1158 = vmatprep.subr.bf16.mxu0 0
        %1159 = vmatpush2.bf16.msra.mxu0 0
        %1160 = vmatprep.subr.bf16.mxu0 0
        %1161 = vmatpush2.bf16.msra.mxu0 0
        %1162 = vmatprep.subr.bf16.mxu0 0
        %1163 = vmatpush2.bf16.msra.mxu0 0
        %1164 = vmatprep.subr.bf16.mxu0 0
        %1165 = vmatpush2.bf16.msra.mxu0 0
        %1166 = vmatprep.subr.bf16.mxu0 0
        %1167 = vmatpush2.bf16.msra.mxu0 0
        %1168 = vmatprep.subr.bf16.mxu0 0
        %1169 = vmatpush2.bf16.msra.mxu0 0
        %1170 = vmatprep.subr.bf16.mxu0 0
        %1171 = vmatpush2.bf16.msra.mxu0 0
        %1172 = vmatprep.subr.bf16.mxu0 0
        %1173 = vmatpush2.bf16.msra.mxu0 0
        %1174 = vmatprep.mubr.bf16.mxu0 0
        %1175 = vmatmul.mubr.bf16.gmra.mxu0 %v1131
        %v1176 = vpop.f32.mrf.mxu0
        %v1177 = vadd.f32 0.0, %v1176
        %v1178 = vpop.f32.mrf.mxu0
        %v1179 = vpop.f32.mrf.mxu0
        %v1180 = vadd.f32 0.0, %v1179
        %v1181 = vpop.f32.mrf.mxu0
        %1182 = vmatprep.mubr.bf16.mxu0 0
        %1183 = vmatmul.mubr.bf16.gmra.mxu0 %v1134
        %v1184 = vpop.f32.mrf.mxu0
        %v1185 = vadd.f32 0.0, %v1184
        %v1186 = vpop.f32.mrf.mxu0
        %v1187 = vpop.f32.mrf.mxu0
        %v1188 = vadd.f32 0.0, %v1187
        %v1189 = vpop.f32.mrf.mxu0
        %1190 = vmatprep.mubr.bf16.mxu0 0
        %1191 = vmatmul.mubr.bf16.gmra.mxu0 %v1137
        %v1192 = vpop.f32.mrf.mxu0
        %v1193 = vadd.f32 0.0, %v1192
        %v1194 = vpop.f32.mrf.mxu0
        %v1195 = vpop.f32.mrf.mxu0
        %v1196 = vadd.f32 0.0, %v1195
        %v1197 = vpop.f32.mrf.mxu0
        %1198 = vmatprep.mubr.bf16.mxu0 0
        %1199 = vmatmul.mubr.bf16.gmra.mxu0 %v1140
        %v1200 = vpop.f32.mrf.mxu0
        %v1201 = vadd.f32 0.0, %v1200
        %v1202 = vpop.f32.mrf.mxu0
        %v1203 = vpop.f32.mrf.mxu0
        %v1204 = vadd.f32 0.0, %v1203
        %v1205 = vpop.f32.mrf.mxu0
        %1206 = vdwg.mxu0
        %v1215 = vunpack.c.l.b16 %v1085
        %v1216 = vunpack.c.l.b16 %v1086
        %v1217 = vunpack.c.l.b16 %v1087
        %v1218 = vunpack.c.l.b16 %v1088
        %v1219 = vunpack.c.l.b16 %v1089
        %v1220 = vunpack.c.l.b16 %v1090
        %v1221 = vunpack.c.l.b16 %v1091
        %v1222 = vunpack.c.l.b16 %v1092
        %v1223 = vpack.c.b16 %v1216, %v1215
        %v1224 = vpack.c.b16 %v1218, %v1217
        %v1225 = vpack.c.b16 %v1220, %v1219
        %v1226 = vpack.c.b16 %v1222, %v1221
        %v1228 = vsel %vm1129, %v1223, 0
        %v1231 = vsel %vm1129, %v1224, 0
        %v1234 = vsel %vm1129, %v1225, 0
        %v1237 = vsel %vm1129, %v1226, 0
        %1239 = vmatprep.subr.bf16.mxu0 0
        %1240 = vmatpush1.bf16.msra.mxu0 0
        %1241 = vmatprep.subr.bf16.mxu0 0
        %1242 = vmatpush1.bf16.msra.mxu0 0
        %1243 = vmatprep.subr.bf16.mxu0 0
        %1244 = vmatpush1.bf16.msra.mxu0 0
        %1245 = vmatprep.subr.bf16.mxu0 0
        %1246 = vmatpush1.bf16.msra.mxu0 0
        %1247 = vmatprep.subr.bf16.mxu0 0
        %1248 = vmatpush1.bf16.msra.mxu0 0
        %1249 = vmatprep.subr.bf16.mxu0 0
        %1250 = vmatpush1.bf16.msra.mxu0 0
        %1251 = vmatprep.subr.bf16.mxu0 0
        %1252 = vmatpush1.bf16.msra.mxu0 %v1084
        %1253 = vmatprep.subr.bf16.mxu0 0
        %1254 = vmatpush1.bf16.msra.mxu0 %v1083
        %1255 = vmatprep.subr.bf16.mxu0 0
        %1256 = vmatpush2.bf16.msra.mxu0 0
        %1257 = vmatprep.subr.bf16.mxu0 0
        %1258 = vmatpush2.bf16.msra.mxu0 0
        %1259 = vmatprep.subr.bf16.mxu0 0
        %1260 = vmatpush2.bf16.msra.mxu0 0
        %1261 = vmatprep.subr.bf16.mxu0 0
        %1262 = vmatpush2.bf16.msra.mxu0 0
        %1263 = vmatprep.subr.bf16.mxu0 0
        %1264 = vmatpush2.bf16.msra.mxu0 0
        %1265 = vmatprep.subr.bf16.mxu0 0
        %1266 = vmatpush2.bf16.msra.mxu0 0
        %1267 = vmatprep.subr.bf16.mxu0 0
        %1268 = vmatpush2.bf16.msra.mxu0 0
        %1269 = vmatprep.subr.bf16.mxu0 0
        %1270 = vmatpush2.bf16.msra.mxu0 0
        %1271 = vmatprep.mubr.bf16.mxu0 0
        %1272 = vmatmul.mubr.bf16.gmra.mxu0 %v1228
        %v1273 = vpop.f32.mrf.mxu0
        %v1274 = vadd.f32 %v1177, %v1273
        %v1275 = vpop.f32.mrf.mxu0
        %v1276 = vpop.f32.mrf.mxu0
        %v1277 = vadd.f32 %v1180, %v1276
        %v1278 = vpop.f32.mrf.mxu0
        %1279 = vmatprep.mubr.bf16.mxu0 0
        %1280 = vmatmul.mubr.bf16.gmra.mxu0 %v1231
        %v1281 = vpop.f32.mrf.mxu0
        %v1282 = vadd.f32 %v1185, %v1281
        %v1283 = vpop.f32.mrf.mxu0
        %v1284 = vpop.f32.mrf.mxu0
        %v1285 = vadd.f32 %v1188, %v1284
        %v1286 = vpop.f32.mrf.mxu0
        %1287 = vmatprep.mubr.bf16.mxu0 0
        %1288 = vmatmul.mubr.bf16.gmra.mxu0 %v1234
        %v1289 = vpop.f32.mrf.mxu0
        %v1290 = vadd.f32 %v1193, %v1289
        %v1291 = vpop.f32.mrf.mxu0
        %v1292 = vpop.f32.mrf.mxu0
        %v1293 = vadd.f32 %v1196, %v1292
        %v1294 = vpop.f32.mrf.mxu0
        %1295 = vmatprep.mubr.bf16.mxu0 0
        %1296 = vmatmul.mubr.bf16.gmra.mxu0 %v1237
        %v1297 = vpop.f32.mrf.mxu0
        %v1298 = vadd.f32 %v1201, %v1297
        %v1299 = vpop.f32.mrf.mxu0
        %v1300 = vpop.f32.mrf.mxu0
        %v1301 = vadd.f32 %v1204, %v1300
        %v1302 = vpop.f32.mrf.mxu0
        %1303 = vdwg.mxu0
        %v1304 = vld [vmem:[#allocation3 + $0xe8] sm:$0xf]
        %v1305 = vld [vmem:[#allocation3 + $0xec] sm:$0xf]
        %v1306 = vld [vmem:[#allocation3 + $0xf0] sm:$0xf]
        %v1307 = vld [vmem:[#allocation3 + $0xf4] sm:$0xf]
        %v1308 = vld [vmem:[#allocation3 + $0xf8] sm:$0xf]
        %v1309 = vld [vmem:[#allocation3 + $0xfc] sm:$0xf]
        %v1310 = vld [vmem:[#allocation3 + $0x100] sm:$0xf]
        %v1311 = vld [vmem:[#allocation3 + $0x104] sm:$0xf]
        %v1320 = vunpack.c.l.b16 %v1304
        %v1321 = vunpack.c.l.b16 %v1305
        %v1322 = vunpack.c.l.b16 %v1306
        %v1323 = vunpack.c.l.b16 %v1307
        %v1324 = vunpack.c.l.b16 %v1308
        %v1325 = vunpack.c.l.b16 %v1309
        %v1326 = vunpack.c.l.b16 %v1310
        %v1327 = vunpack.c.l.b16 %v1311
        %v1328 = vpack.c.b16 %v1321, %v1320
        %v1329 = vpack.c.b16 %v1323, %v1322
        %v1330 = vpack.c.b16 %v1325, %v1324
        %v1331 = vpack.c.b16 %v1327, %v1326
        %1332 = vrot.lane.b32.xlu0 %v1083, 126
        %v1333 = vpop.permute.xlu0 %1332
        %1334 = vrot.lane.b32.xlu0 %v1084, 126
        %v1335 = vpop.permute.xlu0 %1334
        %v1339 = vsel %vm1129, %v1328, 0
        %v1342 = vsel %vm1129, %v1329, 0
        %v1345 = vsel %vm1129, %v1330, 0
        %v1348 = vsel %vm1129, %v1331, 0
        %1350 = vmatprep.subr.bf16.mxu0 0
        %1351 = vmatpush1.bf16.msra.mxu0 0
        %1352 = vmatprep.subr.bf16.mxu0 0
        %1353 = vmatpush1.bf16.msra.mxu0 0
        %1354 = vmatprep.subr.bf16.mxu0 0
        %1355 = vmatpush1.bf16.msra.mxu0 0
        %1356 = vmatprep.subr.bf16.mxu0 0
        %1357 = vmatpush1.bf16.msra.mxu0 0
        %1358 = vmatprep.subr.bf16.mxu0 0
        %1359 = vmatpush1.bf16.msra.mxu0 0
        %1360 = vmatprep.subr.bf16.mxu0 0
        %1361 = vmatpush1.bf16.msra.mxu0 0
        %1362 = vmatprep.subr.bf16.mxu0 0
        %1363 = vmatpush1.bf16.msra.mxu0 %v1335
        %1364 = vmatprep.subr.bf16.mxu0 0
        %1365 = vmatpush1.bf16.msra.mxu0 %v1333
        %1366 = vmatprep.subr.bf16.mxu0 0
        %1367 = vmatpush2.bf16.msra.mxu0 0
        %1368 = vmatprep.subr.bf16.mxu0 0
        %1369 = vmatpush2.bf16.msra.mxu0 0
        %1370 = vmatprep.subr.bf16.mxu0 0
        %1371 = vmatpush2.bf16.msra.mxu0 0
        %1372 = vmatprep.subr.bf16.mxu0 0
        %1373 = vmatpush2.bf16.msra.mxu0 0
        %1374 = vmatprep.subr.bf16.mxu0 0
        %1375 = vmatpush2.bf16.msra.mxu0 0
        %1376 = vmatprep.subr.bf16.mxu0 0
        %1377 = vmatpush2.bf16.msra.mxu0 0
        %1378 = vmatprep.subr.bf16.mxu0 0
        %1379 = vmatpush2.bf16.msra.mxu0 0
        %1380 = vmatprep.subr.bf16.mxu0 0
        %1381 = vmatpush2.bf16.msra.mxu0 0
        %1382 = vmatprep.mubr.bf16.mxu0 0
        %1383 = vmatmul.mubr.bf16.gmra.mxu0 %v1339
        %v1384 = vpop.f32.mrf.mxu0
        %v1385 = vadd.f32 0.0, %v1384
        %v1386 = vpop.f32.mrf.mxu0
        %v1387 = vpop.f32.mrf.mxu0
        %v1388 = vadd.f32 0.0, %v1387
        %v1389 = vpop.f32.mrf.mxu0
        %1390 = vmatprep.mubr.bf16.mxu0 0
        %1391 = vmatmul.mubr.bf16.gmra.mxu0 %v1342
        %v1392 = vpop.f32.mrf.mxu0
        %v1393 = vadd.f32 0.0, %v1392
        %v1394 = vpop.f32.mrf.mxu0
        %v1395 = vpop.f32.mrf.mxu0
        %v1396 = vadd.f32 0.0, %v1395
        %v1397 = vpop.f32.mrf.mxu0
        %1398 = vmatprep.mubr.bf16.mxu0 0
        %1399 = vmatmul.mubr.bf16.gmra.mxu0 %v1345
        %v1400 = vpop.f32.mrf.mxu0
        %v1401 = vadd.f32 0.0, %v1400
        %v1402 = vpop.f32.mrf.mxu0
        %v1403 = vpop.f32.mrf.mxu0
        %v1404 = vadd.f32 0.0, %v1403
        %v1405 = vpop.f32.mrf.mxu0
        %1406 = vmatprep.mubr.bf16.mxu0 0
        %1407 = vmatmul.mubr.bf16.gmra.mxu0 %v1348
        %v1408 = vpop.f32.mrf.mxu0
        %v1409 = vadd.f32 0.0, %v1408
        %v1410 = vpop.f32.mrf.mxu0
        %v1411 = vpop.f32.mrf.mxu0
        %v1412 = vadd.f32 0.0, %v1411
        %v1413 = vpop.f32.mrf.mxu0
        %1414 = vdwg.mxu0
        %v1415 = vadd.f32 %v1274, %v1385
        %v1416 = vadd.f32 %v1277, %v1388
        %v1417 = vadd.f32 %v1282, %v1393
        %v1418 = vadd.f32 %v1285, %v1396
        %v1419 = vadd.f32 %v1290, %v1401
        %v1420 = vadd.f32 %v1293, %v1404
        %v1421 = vadd.f32 %v1298, %v1409
        %v1422 = vadd.f32 %v1301, %v1412
        %v1423 = vld [vmem:[#allocation7 + $0x30] sm:$0xff]
        %v1424 = vld [vmem:[#allocation7 + $0x38] sm:$0xff]
        %v1425 = vld [vmem:[#allocation7 + $0x40] sm:$0xff]
        %v1426 = vld [vmem:[#allocation7 + $0x48] sm:$0xff]
        %v1427 = vld [vmem:[#allocation7 + $0x50] sm:$0xff]
        %v1428 = vld [vmem:[#allocation7 + $0x58] sm:$0xff]
        %v1429 = vld [vmem:[#allocation7 + $0x60] sm:$0xff]
        %v1430 = vld [vmem:[#allocation7 + $0x68] sm:$0xff]
        %1432 = vset.pattern.permute.xlu0 0
        %1433 = vperm.xlu0 %1432, %v1423
        %v1434 = vpop.permute.xlu0 %1433
        %1437 = vset.pattern.permute.xlu0 0
        %1438 = vperm.xlu0 %1437, %v1424
        %v1439 = vpop.permute.xlu0 %1438
        %1442 = vset.pattern.permute.xlu0 0
        %1443 = vperm.xlu0 %1442, %v1425
        %v1444 = vpop.permute.xlu0 %1443
        %1447 = vset.pattern.permute.xlu0 0
        %1448 = vperm.xlu0 %1447, %v1426
        %v1449 = vpop.permute.xlu0 %1448
        %1452 = vset.pattern.permute.xlu0 0
        %1453 = vperm.xlu0 %1452, %v1427
        %v1454 = vpop.permute.xlu0 %1453
        %1457 = vset.pattern.permute.xlu0 0
        %1458 = vperm.xlu0 %1457, %v1428
        %v1459 = vpop.permute.xlu0 %1458
        %1462 = vset.pattern.permute.xlu0 0
        %1463 = vperm.xlu0 %1462, %v1429
        %v1464 = vpop.permute.xlu0 %1463
        %1467 = vset.pattern.permute.xlu0 0
        %1468 = vperm.xlu0 %1467, %v1430
        %v1469 = vpop.permute.xlu0 %1468
        %v1471 = vadd.f32 %v1415, %v1434
        %v1472 = vadd.f32 %v1416, %v1439
        %v1473 = vadd.f32 %v1417, %v1444
        %v1474 = vadd.f32 %v1418, %v1449
        %v1475 = vadd.f32 %v1419, %v1454
        %v1476 = vadd.f32 %v1420, %v1459
        %v1477 = vadd.f32 %v1421, %v1464
        %v1478 = vadd.f32 %v1422, %v1469
        %vm1479 = vcmp.ge.f32.partialorder %v1471, 0.0
        %vm1480 = vcmp.ge.f32.partialorder %v1472, 0.0
        %vm1481 = vcmp.ge.f32.partialorder %v1473, 0.0
        %vm1482 = vcmp.ge.f32.partialorder %v1474, 0.0
        %vm1483 = vcmp.ge.f32.partialorder %v1475, 0.0
        %vm1484 = vcmp.ge.f32.partialorder %v1476, 0.0
        %vm1485 = vcmp.ge.f32.partialorder %v1477, 0.0
        %vm1486 = vcmp.ge.f32.partialorder %v1478, 0.0
        %v1487 = vmul.f32 %v1471, 0.01
        %v1488 = vmul.f32 %v1472, 0.01
        %v1489 = vmul.f32 %v1473, 0.01
        %v1490 = vmul.f32 %v1474, 0.01
        %v1491 = vmul.f32 %v1475, 0.01
        %v1492 = vmul.f32 %v1476, 0.01
        %v1493 = vmul.f32 %v1477, 0.01
        %v1494 = vmul.f32 %v1478, 0.01
        %v1495 = vsel %vm1479, %v1471, %v1487
        %v1496 = vsel %vm1480, %v1472, %v1488
        %v1497 = vsel %vm1481, %v1473, %v1489
        %v1498 = vsel %vm1482, %v1474, %v1490
        %v1499 = vsel %vm1483, %v1475, %v1491
        %v1500 = vsel %vm1484, %v1476, %v1492
        %v1501 = vsel %vm1485, %v1477, %v1493
        %v1502 = vsel %vm1486, %v1478, %v1494
        %1511 = vrot.lane.b32.xlu0 %v1495, 127
        %v1512 = vpop.permute.xlu0 %1511
        %1513 = vrot.lane.b32.xlu0 %v1496, 127
        %v1514 = vpop.permute.xlu0 %1513
        %1515 = vrot.lane.b32.xlu0 %v1497, 127
        %v1516 = vpop.permute.xlu0 %1515
        %1517 = vrot.lane.b32.xlu0 %v1498, 127
        %v1518 = vpop.permute.xlu0 %1517
        %1519 = vrot.lane.b32.xlu0 %v1499, 127
        %v1520 = vpop.permute.xlu0 %1519
        %1521 = vrot.lane.b32.xlu0 %v1500, 127
        %v1522 = vpop.permute.xlu0 %1521
        %1523 = vrot.lane.b32.xlu0 %v1501, 127
        %v1524 = vpop.permute.xlu0 %1523
        %1525 = vrot.lane.b32.xlu0 %v1502, 127
        %v1526 = vpop.permute.xlu0 %1525
        %v1535 = vmax.f32 %v1495, %v1512
        %v1536 = vmax.f32 %v1496, %v1514
        %v1537 = vmax.f32 %v1497, %v1516
        %v1538 = vmax.f32 %v1498, %v1518
        %v1539 = vmax.f32 %v1499, %v1520
        %v1540 = vmax.f32 %v1500, %v1522
        %v1541 = vmax.f32 %v1501, %v1524
        %v1542 = vmax.f32 %v1502, %v1526
        %v1543 = vpack.c.bf16 %v1536, %v1535
        %v1544 = vpack.c.bf16 %v1538, %v1537
        %v1545 = vpack.c.bf16 %v1540, %v1539
        %v1546 = vpack.c.bf16 %v1542, %v1541
        %v1547 = vld [vmem:[#allocation3 + $0x108] sm:$0xf]
        %v1548 = vld [vmem:[#allocation3 + $0x10c] sm:$0xf]
        %v1549 = vld [vmem:[#allocation3 + $0x110] sm:$0xf]
        %v1550 = vld [vmem:[#allocation3 + $0x114] sm:$0xf]
        %v1555 = vunpack.c.l.b16 %v1547
        %v1556 = vunpack.c.l.b16 %v1548
        %v1557 = vunpack.c.l.b16 %v1549
        %v1558 = vunpack.c.l.b16 %v1550
        %v1559 = vpack.c.b16 %v1556, %v1555
        %v1560 = vpack.c.b16 %v1558, %v1557
        %vm1562 = vcmask 252928
        %v1564 = vsel %vm1562, %v1543, 0
        %v1567 = vsel %vm1562, %v1544, 0
        %v1570 = vsel %vm1562, %v1545, 0
        %v1573 = vsel %vm1562, %v1546, 0
        %v1576 = vand.u32 %v1560, %v613
        %1578 = vmatprep.subr.bf16.mxu0 0
        %1579 = vmatpush1.bf16.msra.mxu0 0
        %1580 = vmatprep.subr.bf16.mxu0 0
        %1581 = vmatpush1.bf16.msra.mxu0 0
        %1582 = vmatprep.subr.bf16.mxu0 0
        %1583 = vmatpush1.bf16.msra.mxu0 0
        %1584 = vmatprep.subr.bf16.mxu0 0
        %1585 = vmatpush1.bf16.msra.mxu0 0
        %1586 = vmatprep.subr.bf16.mxu0 0
        %1587 = vmatpush1.bf16.msra.mxu0 0
        %1588 = vmatprep.subr.bf16.mxu0 0
        %1589 = vmatpush1.bf16.msra.mxu0 0
        %1590 = vmatprep.subr.bf16.mxu0 0
        %1591 = vmatpush1.bf16.msra.mxu0 %v1576
        %1592 = vmatprep.subr.bf16.mxu0 0
        %1593 = vmatpush1.bf16.msra.mxu0 %v1559
        %1594 = vmatprep.subr.bf16.mxu0 0
        %1595 = vmatpush2.bf16.msra.mxu0 0
        %1596 = vmatprep.subr.bf16.mxu0 0
        %1597 = vmatpush2.bf16.msra.mxu0 0
        %1598 = vmatprep.subr.bf16.mxu0 0
        %1599 = vmatpush2.bf16.msra.mxu0 0
        %1600 = vmatprep.subr.bf16.mxu0 0
        %1601 = vmatpush2.bf16.msra.mxu0 0
        %1602 = vmatprep.subr.bf16.mxu0 0
        %1603 = vmatpush2.bf16.msra.mxu0 0
        %1604 = vmatprep.subr.bf16.mxu0 0
        %1605 = vmatpush2.bf16.msra.mxu0 0
        %1606 = vmatprep.subr.bf16.mxu0 0
        %1607 = vmatpush2.bf16.msra.mxu0 0
        %1608 = vmatprep.subr.bf16.mxu0 0
        %1609 = vmatpush2.bf16.msra.mxu0 0
        %1610 = vmatprep.mubr.bf16.mxu0 0
        %1611 = vmatmul.mubr.bf16.gmra.mxu0 %v1564
        %v1612 = vpop.f32.mrf.mxu0
        %v1613 = vadd.f32 0.0, %v1612
        %v1614 = vpop.f32.mrf.mxu0
        %v1615 = vpop.f32.mrf.mxu0
        %v1616 = vadd.f32 0.0, %v1615
        %v1617 = vpop.f32.mrf.mxu0
        %1618 = vmatprep.mubr.bf16.mxu0 0
        %1619 = vmatmul.mubr.bf16.gmra.mxu0 %v1567
        %v1620 = vpop.f32.mrf.mxu0
        %v1621 = vadd.f32 0.0, %v1620
        %v1622 = vpop.f32.mrf.mxu0
        %v1623 = vpop.f32.mrf.mxu0
        %v1624 = vadd.f32 0.0, %v1623
        %v1625 = vpop.f32.mrf.mxu0
        %1626 = vmatprep.mubr.bf16.mxu0 0
        %1627 = vmatmul.mubr.bf16.gmra.mxu0 %v1570
        %v1628 = vpop.f32.mrf.mxu0
        %v1629 = vadd.f32 0.0, %v1628
        %v1630 = vpop.f32.mrf.mxu0
        %v1631 = vpop.f32.mrf.mxu0
        %v1632 = vadd.f32 0.0, %v1631
        %v1633 = vpop.f32.mrf.mxu0
        %1634 = vmatprep.mubr.bf16.mxu0 0
        %1635 = vmatmul.mubr.bf16.gmra.mxu0 %v1573
        %v1636 = vpop.f32.mrf.mxu0
        %v1637 = vadd.f32 0.0, %v1636
        %v1638 = vpop.f32.mrf.mxu0
        %v1639 = vpop.f32.mrf.mxu0
        %v1640 = vadd.f32 0.0, %v1639
        %v1641 = vpop.f32.mrf.mxu0
        %1642 = vdwg.mxu0
        %1643 = vst.msk [vmem:[#allocation2] sm:$0xff] %vm658, 0.0
        %1644 = vst.msk [vmem:[#allocation2 + $0x10] sm:$0xff] %vm658, 0.0
        %1645 = vst.msk [vmem:[#allocation2 + $0x20] sm:$0xff] %vm658, 0.0
        %1646 = vst.msk [vmem:[#allocation2 + $0x30] sm:$0xff] %vm658, 0.0
        %1647 = vst.msk [vmem:[#allocation2 + $0x40] sm:$0xff] %vm658, 0.0
        %1648 = vst.msk [vmem:[#allocation2 + $0x50] sm:$0xff] %vm658, 0.0
        %1649 = vst.msk [vmem:[#allocation2 + $0x60] sm:$0xff] %vm658, 0.0
        %1650 = vst.msk [vmem:[#allocation2 + $0x70] sm:$0xff] %vm658, 0.0
        %vm1651 = vcmask 146568
        %1652 = vst.msk [vmem:[#allocation2] sm:$0xff] %vm1651, 0.0
        %1653 = vst.msk [vmem:[#allocation2 + $0x10] sm:$0xff] %vm1651, 0.0
        %1654 = vst.msk [vmem:[#allocation2 + $0x20] sm:$0xff] %vm1651, 0.0
        %1655 = vst.msk [vmem:[#allocation2 + $0x30] sm:$0xff] %vm1651, 0.0
        %1656 = vst.msk [vmem:[#allocation2 + $0x40] sm:$0xff] %vm1651, 0.0
        %1657 = vst.msk [vmem:[#allocation2 + $0x50] sm:$0xff] %vm1651, 0.0
        %1658 = vst.msk [vmem:[#allocation2 + $0x60] sm:$0xff] %vm1651, 0.0
        %1659 = vst.msk [vmem:[#allocation2 + $0x70] sm:$0xff] %vm1651, 0.0
        %1668 = vrot.lane.b32.xlu0 %v1613, 1
        %v1669 = vpop.permute.xlu0 %1668
        %1670 = vrot.lane.b32.xlu0 %v1616, 1
        %v1671 = vpop.permute.xlu0 %1670
        %1672 = vrot.lane.b32.xlu0 %v1621, 1
        %v1673 = vpop.permute.xlu0 %1672
        %1674 = vrot.lane.b32.xlu0 %v1624, 1
        %v1675 = vpop.permute.xlu0 %1674
        %1676 = vrot.lane.b32.xlu0 %v1629, 1
        %v1677 = vpop.permute.xlu0 %1676
        %1678 = vrot.lane.b32.xlu0 %v1632, 1
        %v1679 = vpop.permute.xlu0 %1678
        %1680 = vrot.lane.b32.xlu0 %v1637, 1
        %v1681 = vpop.permute.xlu0 %1680
        %1682 = vrot.lane.b32.xlu0 %v1640, 1
        %v1683 = vpop.permute.xlu0 %1682
        %vm1692 = vcmask 138248
        %1693 = vst.msk [vmem:[#allocation2] sm:$0xff] %vm1692, %v1669
        %1694 = vst.msk [vmem:[#allocation2 + $0x10] sm:$0xff] %vm1692, %v1671
        %1695 = vst.msk [vmem:[#allocation2 + $0x20] sm:$0xff] %vm1692, %v1673
        %1696 = vst.msk [vmem:[#allocation2 + $0x30] sm:$0xff] %vm1692, %v1675
        %1697 = vst.msk [vmem:[#allocation2 + $0x40] sm:$0xff] %vm1692, %v1677
        %1698 = vst.msk [vmem:[#allocation2 + $0x50] sm:$0xff] %vm1692, %v1679
        %1699 = vst.msk [vmem:[#allocation2 + $0x60] sm:$0xff] %vm1692, %v1681
        %1700 = vst.msk [vmem:[#allocation2 + $0x70] sm:$0xff] %vm1692, %v1683
        %v1701 = vld [vmem:[#allocation2] sm:$0xff]
        %v1702 = vld [vmem:[#allocation2 + $0x10] sm:$0xff]
        %v1703 = vld [vmem:[#allocation2 + $0x20] sm:$0xff]
        %v1704 = vld [vmem:[#allocation2 + $0x30] sm:$0xff]
        %v1705 = vld [vmem:[#allocation2 + $0x40] sm:$0xff]
        %v1706 = vld [vmem:[#allocation2 + $0x50] sm:$0xff]
        %v1707 = vld [vmem:[#allocation2 + $0x60] sm:$0xff]
        %v1708 = vld [vmem:[#allocation2 + $0x70] sm:$0xff]
        %v1709 = vpack.c.bf16 %v1702, %v1701
        %v1710 = vpack.c.bf16 %v1704, %v1703
        %v1711 = vpack.c.bf16 %v1706, %v1705
        %v1712 = vpack.c.bf16 %v1708, %v1707
        %v1713 = vld [vmem:[#allocation3 + $0x118] sm:$0xf]
        %v1714 = vld [vmem:[#allocation3 + $0x11c] sm:$0xf]
        %v1715 = vld [vmem:[#allocation3 + $0x120] sm:$0xf]
        %v1716 = vld [vmem:[#allocation3 + $0x124] sm:$0xf]
        %v1717 = vld [vmem:[#allocation3 + $0x128] sm:$0xf]
        %v1718 = vld [vmem:[#allocation3 + $0x12c] sm:$0xf]
        %v1719 = vld [vmem:[#allocation3 + $0x130] sm:$0xf]
        %v1720 = vld [vmem:[#allocation3 + $0x134] sm:$0xf]
        %v1721 = vld [vmem:[#allocation3 + $0x138] sm:$0xf]
        %v1722 = vld [vmem:[#allocation3 + $0x13c] sm:$0xf]
        %v1723 = vld [vmem:[#allocation3 + $0x140] sm:$0xf]
        %v1724 = vld [vmem:[#allocation3 + $0x144] sm:$0xf]
        %v1725 = vld [vmem:[#allocation3 + $0x148] sm:$0xf]
        %v1726 = vld [vmem:[#allocation3 + $0x14c] sm:$0xf]
        %v1727 = vld [vmem:[#allocation3 + $0x150] sm:$0xf]
        %v1728 = vld [vmem:[#allocation3 + $0x154] sm:$0xf]
        %v1737 = vunpack.c.l.b16 %v1721
        %v1738 = vunpack.c.l.b16 %v1722
        %v1739 = vunpack.c.l.b16 %v1723
        %v1740 = vunpack.c.l.b16 %v1724
        %v1741 = vunpack.c.l.b16 %v1725
        %v1742 = vunpack.c.l.b16 %v1726
        %v1743 = vunpack.c.l.b16 %v1727
        %v1744 = vunpack.c.l.b16 %v1728
        %v1745 = vpack.c.b16 %v1738, %v1737
        %v1746 = vpack.c.b16 %v1740, %v1739
        %v1747 = vpack.c.b16 %v1742, %v1741
        %v1748 = vpack.c.b16 %v1744, %v1743
        %1753 = vrot.lane.b32.xlu0 %v1709, 127
        %v1754 = vpop.permute.xlu0 %1753
        %1755 = vrot.lane.b32.xlu0 %v1710, 127
        %v1756 = vpop.permute.xlu0 %1755
        %1757 = vrot.lane.b32.xlu0 %v1711, 127
        %v1758 = vpop.permute.xlu0 %1757
        %1759 = vrot.lane.b32.xlu0 %v1712, 127
        %v1760 = vpop.permute.xlu0 %1759
        %vm1765 = vcmask 523264
        %v1767 = vsel %vm1765, %v1745, 0
        %v1770 = vsel %vm1765, %v1746, 0
        %v1773 = vsel %vm1765, %v1747, 0
        %v1776 = vsel %vm1765, %v1748, 0
        %1778 = vmatprep.subr.bf16.mxu0 0
        %1779 = vmatpush1.bf16.msra.mxu0 0
        %1780 = vmatprep.subr.bf16.mxu0 0
        %1781 = vmatpush1.bf16.msra.mxu0 0
        %1782 = vmatprep.subr.bf16.mxu0 0
        %1783 = vmatpush1.bf16.msra.mxu0 0
        %1784 = vmatprep.subr.bf16.mxu0 0
        %1785 = vmatpush1.bf16.msra.mxu0 0
        %1786 = vmatprep.subr.bf16.mxu0 0
        %1787 = vmatpush1.bf16.msra.mxu0 %v1760
        %1788 = vmatprep.subr.bf16.mxu0 0
        %1789 = vmatpush1.bf16.msra.mxu0 %v1758
        %1790 = vmatprep.subr.bf16.mxu0 0
        %1791 = vmatpush1.bf16.msra.mxu0 %v1756
        %1792 = vmatprep.subr.bf16.mxu0 0
        %1793 = vmatpush1.bf16.msra.mxu0 %v1754
        %1794 = vmatprep.subr.bf16.mxu0 0
        %1795 = vmatpush2.bf16.msra.mxu0 0
        %1796 = vmatprep.subr.bf16.mxu0 0
        %1797 = vmatpush2.bf16.msra.mxu0 0
        %1798 = vmatprep.subr.bf16.mxu0 0
        %1799 = vmatpush2.bf16.msra.mxu0 0
        %1800 = vmatprep.subr.bf16.mxu0 0
        %1801 = vmatpush2.bf16.msra.mxu0 0
        %1802 = vmatprep.subr.bf16.mxu0 0
        %1803 = vmatpush2.bf16.msra.mxu0 0
        %1804 = vmatprep.subr.bf16.mxu0 0
        %1805 = vmatpush2.bf16.msra.mxu0 0
        %1806 = vmatprep.subr.bf16.mxu0 0
        %1807 = vmatpush2.bf16.msra.mxu0 0
        %1808 = vmatprep.subr.bf16.mxu0 0
        %1809 = vmatpush2.bf16.msra.mxu0 0
        %1810 = vmatprep.mubr.bf16.mxu0 0
        %1811 = vmatmul.mubr.bf16.gmra.mxu0 %v1767
        %v1812 = vpop.f32.mrf.mxu0
        %v1813 = vadd.f32 0.0, %v1812
        %v1814 = vpop.f32.mrf.mxu0
        %v1815 = vpop.f32.mrf.mxu0
        %v1816 = vadd.f32 0.0, %v1815
        %v1817 = vpop.f32.mrf.mxu0
        %1818 = vmatprep.mubr.bf16.mxu0 0
        %1819 = vmatmul.mubr.bf16.gmra.mxu0 %v1770
        %v1820 = vpop.f32.mrf.mxu0
        %v1821 = vadd.f32 0.0, %v1820
        %v1822 = vpop.f32.mrf.mxu0
        %v1823 = vpop.f32.mrf.mxu0
        %v1824 = vadd.f32 0.0, %v1823
        %v1825 = vpop.f32.mrf.mxu0
        %1826 = vmatprep.mubr.bf16.mxu0 0
        %1827 = vmatmul.mubr.bf16.gmra.mxu0 %v1773
        %v1828 = vpop.f32.mrf.mxu0
        %v1829 = vadd.f32 0.0, %v1828
        %v1830 = vpop.f32.mrf.mxu0
        %v1831 = vpop.f32.mrf.mxu0
        %v1832 = vadd.f32 0.0, %v1831
        %v1833 = vpop.f32.mrf.mxu0
        %1834 = vmatprep.mubr.bf16.mxu0 0
        %1835 = vmatmul.mubr.bf16.gmra.mxu0 %v1776
        %v1836 = vpop.f32.mrf.mxu0
        %v1837 = vadd.f32 0.0, %v1836
        %v1838 = vpop.f32.mrf.mxu0
        %v1839 = vpop.f32.mrf.mxu0
        %v1840 = vadd.f32 0.0, %v1839
        %v1841 = vpop.f32.mrf.mxu0
        %1842 = vdwg.mxu0
        %v1851 = vunpack.c.l.b16 %v1713
        %v1852 = vunpack.c.l.b16 %v1714
        %v1853 = vunpack.c.l.b16 %v1715
        %v1854 = vunpack.c.l.b16 %v1716
        %v1855 = vunpack.c.l.b16 %v1717
        %v1856 = vunpack.c.l.b16 %v1718
        %v1857 = vunpack.c.l.b16 %v1719
        %v1858 = vunpack.c.l.b16 %v1720
        %v1859 = vpack.c.b16 %v1852, %v1851
        %v1860 = vpack.c.b16 %v1854, %v1853
        %v1861 = vpack.c.b16 %v1856, %v1855
        %v1862 = vpack.c.b16 %v1858, %v1857
        %v1864 = vsel %vm1765, %v1859, 0
        %v1867 = vsel %vm1765, %v1860, 0
        %v1870 = vsel %vm1765, %v1861, 0
        %v1873 = vsel %vm1765, %v1862, 0
        %1875 = vmatprep.subr.bf16.mxu0 0
        %1876 = vmatpush1.bf16.msra.mxu0 0
        %1877 = vmatprep.subr.bf16.mxu0 0
        %1878 = vmatpush1.bf16.msra.mxu0 0
        %1879 = vmatprep.subr.bf16.mxu0 0
        %1880 = vmatpush1.bf16.msra.mxu0 0
        %1881 = vmatprep.subr.bf16.mxu0 0
        %1882 = vmatpush1.bf16.msra.mxu0 0
        %1883 = vmatprep.subr.bf16.mxu0 0
        %1884 = vmatpush1.bf16.msra.mxu0 %v1712
        %1885 = vmatprep.subr.bf16.mxu0 0
        %1886 = vmatpush1.bf16.msra.mxu0 %v1711
        %1887 = vmatprep.subr.bf16.mxu0 0
        %1888 = vmatpush1.bf16.msra.mxu0 %v1710
        %1889 = vmatprep.subr.bf16.mxu0 0
        %1890 = vmatpush1.bf16.msra.mxu0 %v1709
        %1891 = vmatprep.subr.bf16.mxu0 0
        %1892 = vmatpush2.bf16.msra.mxu0 0
        %1893 = vmatprep.subr.bf16.mxu0 0
        %1894 = vmatpush2.bf16.msra.mxu0 0
        %1895 = vmatprep.subr.bf16.mxu0 0
        %1896 = vmatpush2.bf16.msra.mxu0 0
        %1897 = vmatprep.subr.bf16.mxu0 0
        %1898 = vmatpush2.bf16.msra.mxu0 0
        %1899 = vmatprep.subr.bf16.mxu0 0
        %1900 = vmatpush2.bf16.msra.mxu0 0
        %1901 = vmatprep.subr.bf16.mxu0 0
        %1902 = vmatpush2.bf16.msra.mxu0 0
        %1903 = vmatprep.subr.bf16.mxu0 0
        %1904 = vmatpush2.bf16.msra.mxu0 0
        %1905 = vmatprep.subr.bf16.mxu0 0
        %1906 = vmatpush2.bf16.msra.mxu0 0
        %1907 = vmatprep.mubr.bf16.mxu0 0
        %1908 = vmatmul.mubr.bf16.gmra.mxu0 %v1864
        %v1909 = vpop.f32.mrf.mxu0
        %v1910 = vadd.f32 %v1813, %v1909
        %v1911 = vpop.f32.mrf.mxu0
        %v1912 = vpop.f32.mrf.mxu0
        %v1913 = vadd.f32 %v1816, %v1912
        %v1914 = vpop.f32.mrf.mxu0
        %1915 = vmatprep.mubr.bf16.mxu0 0
        %1916 = vmatmul.mubr.bf16.gmra.mxu0 %v1867
        %v1917 = vpop.f32.mrf.mxu0
        %v1918 = vadd.f32 %v1821, %v1917
        %v1919 = vpop.f32.mrf.mxu0
        %v1920 = vpop.f32.mrf.mxu0
        %v1921 = vadd.f32 %v1824, %v1920
        %v1922 = vpop.f32.mrf.mxu0
        %1923 = vmatprep.mubr.bf16.mxu0 0
        %1924 = vmatmul.mubr.bf16.gmra.mxu0 %v1870
        %v1925 = vpop.f32.mrf.mxu0
        %v1926 = vadd.f32 %v1829, %v1925
        %v1927 = vpop.f32.mrf.mxu0
        %v1928 = vpop.f32.mrf.mxu0
        %v1929 = vadd.f32 %v1832, %v1928
        %v1930 = vpop.f32.mrf.mxu0
        %1931 = vmatprep.mubr.bf16.mxu0 0
        %1932 = vmatmul.mubr.bf16.gmra.mxu0 %v1873
        %v1933 = vpop.f32.mrf.mxu0
        %v1934 = vadd.f32 %v1837, %v1933
        %v1935 = vpop.f32.mrf.mxu0
        %v1936 = vpop.f32.mrf.mxu0
        %v1937 = vadd.f32 %v1840, %v1936
        %v1938 = vpop.f32.mrf.mxu0
        %1939 = vdwg.mxu0
        %v1940 = vld [vmem:[#allocation3 + $0x158] sm:$0xf]
        %v1941 = vld [vmem:[#allocation3 + $0x15c] sm:$0xf]
        %v1942 = vld [vmem:[#allocation3 + $0x160] sm:$0xf]
        %v1943 = vld [vmem:[#allocation3 + $0x164] sm:$0xf]
        %v1944 = vld [vmem:[#allocation3 + $0x168] sm:$0xf]
        %v1945 = vld [vmem:[#allocation3 + $0x16c] sm:$0xf]
        %v1946 = vld [vmem:[#allocation3 + $0x170] sm:$0xf]
        %v1947 = vld [vmem:[#allocation3 + $0x174] sm:$0xf]
        %v1956 = vunpack.c.l.b16 %v1940
        %v1957 = vunpack.c.l.b16 %v1941
        %v1958 = vunpack.c.l.b16 %v1942
        %v1959 = vunpack.c.l.b16 %v1943
        %v1960 = vunpack.c.l.b16 %v1944
        %v1961 = vunpack.c.l.b16 %v1945
        %v1962 = vunpack.c.l.b16 %v1946
        %v1963 = vunpack.c.l.b16 %v1947
        %v1964 = vpack.c.b16 %v1957, %v1956
        %v1965 = vpack.c.b16 %v1959, %v1958
        %v1966 = vpack.c.b16 %v1961, %v1960
        %v1967 = vpack.c.b16 %v1963, %v1962
        %1968 = vrot.lane.b32.xlu0 %v1709, 126
        %v1969 = vpop.permute.xlu0 %1968
        %1970 = vrot.lane.b32.xlu0 %v1710, 126
        %v1971 = vpop.permute.xlu0 %1970
        %1972 = vrot.lane.b32.xlu0 %v1711, 126
        %v1973 = vpop.permute.xlu0 %1972
        %1974 = vrot.lane.b32.xlu0 %v1712, 126
        %v1975 = vpop.permute.xlu0 %1974
        %v1981 = vsel %vm1765, %v1964, 0
        %v1984 = vsel %vm1765, %v1965, 0
        %v1987 = vsel %vm1765, %v1966, 0
        %v1990 = vsel %vm1765, %v1967, 0
        %1992 = vmatprep.subr.bf16.mxu0 0
        %1993 = vmatpush1.bf16.msra.mxu0 0
        %1994 = vmatprep.subr.bf16.mxu0 0
        %1995 = vmatpush1.bf16.msra.mxu0 0
        %1996 = vmatprep.subr.bf16.mxu0 0
        %1997 = vmatpush1.bf16.msra.mxu0 0
        %1998 = vmatprep.subr.bf16.mxu0 0
        %1999 = vmatpush1.bf16.msra.mxu0 0
        %2000 = vmatprep.subr.bf16.mxu0 0
        %2001 = vmatpush1.bf16.msra.mxu0 %v1975
        %2002 = vmatprep.subr.bf16.mxu0 0
        %2003 = vmatpush1.bf16.msra.mxu0 %v1973
        %2004 = vmatprep.subr.bf16.mxu0 0
        %2005 = vmatpush1.bf16.msra.mxu0 %v1971
        %2006 = vmatprep.subr.bf16.mxu0 0
        %2007 = vmatpush1.bf16.msra.mxu0 %v1969
        %2008 = vmatprep.subr.bf16.mxu0 0
        %2009 = vmatpush2.bf16.msra.mxu0 0
        %2010 = vmatprep.subr.bf16.mxu0 0
        %2011 = vmatpush2.bf16.msra.mxu0 0
        %2012 = vmatprep.subr.bf16.mxu0 0
        %2013 = vmatpush2.bf16.msra.mxu0 0
        %2014 = vmatprep.subr.bf16.mxu0 0
        %2015 = vmatpush2.bf16.msra.mxu0 0
        %2016 = vmatprep.subr.bf16.mxu0 0
        %2017 = vmatpush2.bf16.msra.mxu0 0
        %2018 = vmatprep.subr.bf16.mxu0 0
        %2019 = vmatpush2.bf16.msra.mxu0 0
        %2020 = vmatprep.subr.bf16.mxu0 0
        %2021 = vmatpush2.bf16.msra.mxu0 0
        %2022 = vmatprep.subr.bf16.mxu0 0
        %2023 = vmatpush2.bf16.msra.mxu0 0
        %2024 = vmatprep.mubr.bf16.mxu0 0
        %2025 = vmatmul.mubr.bf16.gmra.mxu0 %v1981
        %v2026 = vpop.f32.mrf.mxu0
        %v2027 = vadd.f32 0.0, %v2026
        %v2028 = vpop.f32.mrf.mxu0
        %v2029 = vpop.f32.mrf.mxu0
        %v2030 = vadd.f32 0.0, %v2029
        %v2031 = vpop.f32.mrf.mxu0
        %2032 = vmatprep.mubr.bf16.mxu0 0
        %2033 = vmatmul.mubr.bf16.gmra.mxu0 %v1984
        %v2034 = vpop.f32.mrf.mxu0
        %v2035 = vadd.f32 0.0, %v2034
        %v2036 = vpop.f32.mrf.mxu0
        %v2037 = vpop.f32.mrf.mxu0
        %v2038 = vadd.f32 0.0, %v2037
        %v2039 = vpop.f32.mrf.mxu0
        %2040 = vmatprep.mubr.bf16.mxu0 0
        %2041 = vmatmul.mubr.bf16.gmra.mxu0 %v1987
        %v2042 = vpop.f32.mrf.mxu0
        %v2043 = vadd.f32 0.0, %v2042
        %v2044 = vpop.f32.mrf.mxu0
        %v2045 = vpop.f32.mrf.mxu0
        %v2046 = vadd.f32 0.0, %v2045
        %v2047 = vpop.f32.mrf.mxu0
        %2048 = vmatprep.mubr.bf16.mxu0 0
        %2049 = vmatmul.mubr.bf16.gmra.mxu0 %v1990
        %v2050 = vpop.f32.mrf.mxu0
        %v2051 = vadd.f32 0.0, %v2050
        %v2052 = vpop.f32.mrf.mxu0
        %v2053 = vpop.f32.mrf.mxu0
        %v2054 = vadd.f32 0.0, %v2053
        %v2055 = vpop.f32.mrf.mxu0
        %2056 = vdwg.mxu0
        %v2057 = vadd.f32 %v1910, %v2027
        %v2058 = vadd.f32 %v1913, %v2030
        %v2059 = vadd.f32 %v1918, %v2035
        %v2060 = vadd.f32 %v1921, %v2038
        %v2061 = vadd.f32 %v1926, %v2043
        %v2062 = vadd.f32 %v1929, %v2046
        %v2063 = vadd.f32 %v1934, %v2051
        %v2064 = vadd.f32 %v1937, %v2054
        %v2065 = vld [vmem:[#allocation3 + $0x178] sm:$0xf]
        %v2066 = vld [vmem:[#allocation3 + $0x17c] sm:$0xf]
        %v2067 = vld [vmem:[#allocation3 + $0x180] sm:$0xf]
        %v2068 = vld [vmem:[#allocation3 + $0x184] sm:$0xf]
        %v2069 = vld [vmem:[#allocation3 + $0x188] sm:$0xf]
        %v2070 = vld [vmem:[#allocation3 + $0x18c] sm:$0xf]
        %v2071 = vld [vmem:[#allocation3 + $0x190] sm:$0xf]
        %v2072 = vld [vmem:[#allocation3 + $0x194] sm:$0xf]
        %v2081 = vunpack.c.l.b16 %v2065
        %v2082 = vunpack.c.l.b16 %v2066
        %v2083 = vunpack.c.l.b16 %v2067
        %v2084 = vunpack.c.l.b16 %v2068
        %v2085 = vunpack.c.l.b16 %v2069
        %v2086 = vunpack.c.l.b16 %v2070
        %v2087 = vunpack.c.l.b16 %v2071
        %v2088 = vunpack.c.l.b16 %v2072
        %v2089 = vpack.c.b16 %v2082, %v2081
        %v2090 = vpack.c.b16 %v2084, %v2083
        %v2091 = vpack.c.b16 %v2086, %v2085
        %v2092 = vpack.c.b16 %v2088, %v2087
        %2093 = vrot.lane.b32.xlu0 %v1709, 125
        %v2094 = vpop.permute.xlu0 %2093
        %2095 = vrot.lane.b32.xlu0 %v1710, 125
        %v2096 = vpop.permute.xlu0 %2095
        %2097 = vrot.lane.b32.xlu0 %v1711, 125
        %v2098 = vpop.permute.xlu0 %2097
        %2099 = vrot.lane.b32.xlu0 %v1712, 125
        %v2100 = vpop.permute.xlu0 %2099
        %v2106 = vsel %vm1765, %v2089, 0
        %v2109 = vsel %vm1765, %v2090, 0
        %v2112 = vsel %vm1765, %v2091, 0
        %v2115 = vsel %vm1765, %v2092, 0
        %2117 = vmatprep.subr.bf16.mxu0 0
        %2118 = vmatpush1.bf16.msra.mxu0 0
        %2119 = vmatprep.subr.bf16.mxu0 0
        %2120 = vmatpush1.bf16.msra.mxu0 0
        %2121 = vmatprep.subr.bf16.mxu0 0
        %2122 = vmatpush1.bf16.msra.mxu0 0
        %2123 = vmatprep.subr.bf16.mxu0 0
        %2124 = vmatpush1.bf16.msra.mxu0 0
        %2125 = vmatprep.subr.bf16.mxu0 0
        %2126 = vmatpush1.bf16.msra.mxu0 %v2100
        %2127 = vmatprep.subr.bf16.mxu0 0
        %2128 = vmatpush1.bf16.msra.mxu0 %v2098
        %2129 = vmatprep.subr.bf16.mxu0 0
        %2130 = vmatpush1.bf16.msra.mxu0 %v2096
        %2131 = vmatprep.subr.bf16.mxu0 0
        %2132 = vmatpush1.bf16.msra.mxu0 %v2094
        %2133 = vmatprep.subr.bf16.mxu0 0
        %2134 = vmatpush2.bf16.msra.mxu0 0
        %2135 = vmatprep.subr.bf16.mxu0 0
        %2136 = vmatpush2.bf16.msra.mxu0 0
        %2137 = vmatprep.subr.bf16.mxu0 0
        %2138 = vmatpush2.bf16.msra.mxu0 0
        %2139 = vmatprep.subr.bf16.mxu0 0
        %2140 = vmatpush2.bf16.msra.mxu0 0
        %2141 = vmatprep.subr.bf16.mxu0 0
        %2142 = vmatpush2.bf16.msra.mxu0 0
        %2143 = vmatprep.subr.bf16.mxu0 0
        %2144 = vmatpush2.bf16.msra.mxu0 0
        %2145 = vmatprep.subr.bf16.mxu0 0
        %2146 = vmatpush2.bf16.msra.mxu0 0
        %2147 = vmatprep.subr.bf16.mxu0 0
        %2148 = vmatpush2.bf16.msra.mxu0 0
        %2149 = vmatprep.mubr.bf16.mxu0 0
        %2150 = vmatmul.mubr.bf16.gmra.mxu0 %v2106
        %v2151 = vpop.f32.mrf.mxu0
        %v2152 = vadd.f32 0.0, %v2151
        %v2153 = vpop.f32.mrf.mxu0
        %v2154 = vpop.f32.mrf.mxu0
        %v2155 = vadd.f32 0.0, %v2154
        %v2156 = vpop.f32.mrf.mxu0
        %2157 = vmatprep.mubr.bf16.mxu0 0
        %2158 = vmatmul.mubr.bf16.gmra.mxu0 %v2109
        %v2159 = vpop.f32.mrf.mxu0
        %v2160 = vadd.f32 0.0, %v2159
        %v2161 = vpop.f32.mrf.mxu0
        %v2162 = vpop.f32.mrf.mxu0
        %v2163 = vadd.f32 0.0, %v2162
        %v2164 = vpop.f32.mrf.mxu0
        %2165 = vmatprep.mubr.bf16.mxu0 0
        %2166 = vmatmul.mubr.bf16.gmra.mxu0 %v2112
        %v2167 = vpop.f32.mrf.mxu0
        %v2168 = vadd.f32 0.0, %v2167
        %v2169 = vpop.f32.mrf.mxu0
        %v2170 = vpop.f32.mrf.mxu0
        %v2171 = vadd.f32 0.0, %v2170
        %v2172 = vpop.f32.mrf.mxu0
        %2173 = vmatprep.mubr.bf16.mxu0 0
        %2174 = vmatmul.mubr.bf16.gmra.mxu0 %v2115
        %v2175 = vpop.f32.mrf.mxu0
        %v2176 = vadd.f32 0.0, %v2175
        %v2177 = vpop.f32.mrf.mxu0
        %v2178 = vpop.f32.mrf.mxu0
        %v2179 = vadd.f32 0.0, %v2178
        %v2180 = vpop.f32.mrf.mxu0
        %2181 = vdwg.mxu0
        %v2182 = vadd.f32 %v2057, %v2152
        %v2183 = vadd.f32 %v2058, %v2155
        %v2184 = vadd.f32 %v2059, %v2160
        %v2185 = vadd.f32 %v2060, %v2163
        %v2186 = vadd.f32 %v2061, %v2168
        %v2187 = vadd.f32 %v2062, %v2171
        %v2188 = vadd.f32 %v2063, %v2176
        %v2189 = vadd.f32 %v2064, %v2179
        %v2190 = vld [vmem:[#allocation3 + $0x198] sm:$0xf]
        %v2191 = vld [vmem:[#allocation3 + $0x19c] sm:$0xf]
        %v2192 = vld [vmem:[#allocation3 + $0x1a0] sm:$0xf]
        %v2193 = vld [vmem:[#allocation3 + $0x1a4] sm:$0xf]
        %v2194 = vld [vmem:[#allocation3 + $0x1a8] sm:$0xf]
        %v2195 = vld [vmem:[#allocation3 + $0x1ac] sm:$0xf]
        %v2196 = vld [vmem:[#allocation3 + $0x1b0] sm:$0xf]
        %v2197 = vld [vmem:[#allocation3 + $0x1b4] sm:$0xf]
        %v2206 = vunpack.c.l.b16 %v2190
        %v2207 = vunpack.c.l.b16 %v2191
        %v2208 = vunpack.c.l.b16 %v2192
        %v2209 = vunpack.c.l.b16 %v2193
        %v2210 = vunpack.c.l.b16 %v2194
        %v2211 = vunpack.c.l.b16 %v2195
        %v2212 = vunpack.c.l.b16 %v2196
        %v2213 = vunpack.c.l.b16 %v2197
        %v2214 = vpack.c.b16 %v2207, %v2206
        %v2215 = vpack.c.b16 %v2209, %v2208
        %v2216 = vpack.c.b16 %v2211, %v2210
        %v2217 = vpack.c.b16 %v2213, %v2212
        %2218 = vrot.lane.b32.xlu0 %v1709, 124
        %v2219 = vpop.permute.xlu0 %2218
        %2220 = vrot.lane.b32.xlu0 %v1710, 124
        %v2221 = vpop.permute.xlu0 %2220
        %2222 = vrot.lane.b32.xlu0 %v1711, 124
        %v2223 = vpop.permute.xlu0 %2222
        %2224 = vrot.lane.b32.xlu0 %v1712, 124
        %v2225 = vpop.permute.xlu0 %2224
        %v2231 = vsel %vm1765, %v2214, 0
        %v2234 = vsel %vm1765, %v2215, 0
        %v2237 = vsel %vm1765, %v2216, 0
        %v2240 = vsel %vm1765, %v2217, 0
        %2242 = vmatprep.subr.bf16.mxu0 0
        %2243 = vmatpush1.bf16.msra.mxu0 0
        %2244 = vmatprep.subr.bf16.mxu0 0
        %2245 = vmatpush1.bf16.msra.mxu0 0
        %2246 = vmatprep.subr.bf16.mxu0 0
        %2247 = vmatpush1.bf16.msra.mxu0 0
        %2248 = vmatprep.subr.bf16.mxu0 0
        %2249 = vmatpush1.bf16.msra.mxu0 0
        %2250 = vmatprep.subr.bf16.mxu0 0
        %2251 = vmatpush1.bf16.msra.mxu0 %v2225
        %2252 = vmatprep.subr.bf16.mxu0 0
        %2253 = vmatpush1.bf16.msra.mxu0 %v2223
        %2254 = vmatprep.subr.bf16.mxu0 0
        %2255 = vmatpush1.bf16.msra.mxu0 %v2221
        %2256 = vmatprep.subr.bf16.mxu0 0
        %2257 = vmatpush1.bf16.msra.mxu0 %v2219
        %2258 = vmatprep.subr.bf16.mxu0 0
        %2259 = vmatpush2.bf16.msra.mxu0 0
        %2260 = vmatprep.subr.bf16.mxu0 0
        %2261 = vmatpush2.bf16.msra.mxu0 0
        %2262 = vmatprep.subr.bf16.mxu0 0
        %2263 = vmatpush2.bf16.msra.mxu0 0
        %2264 = vmatprep.subr.bf16.mxu0 0
        %2265 = vmatpush2.bf16.msra.mxu0 0
        %2266 = vmatprep.subr.bf16.mxu0 0
        %2267 = vmatpush2.bf16.msra.mxu0 0
        %2268 = vmatprep.subr.bf16.mxu0 0
        %2269 = vmatpush2.bf16.msra.mxu0 0
        %2270 = vmatprep.subr.bf16.mxu0 0
        %2271 = vmatpush2.bf16.msra.mxu0 0
        %2272 = vmatprep.subr.bf16.mxu0 0
        %2273 = vmatpush2.bf16.msra.mxu0 0
        %2274 = vmatprep.mubr.bf16.mxu0 0
        %2275 = vmatmul.mubr.bf16.gmra.mxu0 %v2231
        %v2276 = vpop.f32.mrf.mxu0
        %v2277 = vadd.f32 0.0, %v2276
        %v2278 = vpop.f32.mrf.mxu0
        %v2279 = vpop.f32.mrf.mxu0
        %v2280 = vadd.f32 0.0, %v2279
        %v2281 = vpop.f32.mrf.mxu0
        %2282 = vmatprep.mubr.bf16.mxu0 0
        %2283 = vmatmul.mubr.bf16.gmra.mxu0 %v2234
        %v2284 = vpop.f32.mrf.mxu0
        %v2285 = vadd.f32 0.0, %v2284
        %v2286 = vpop.f32.mrf.mxu0
        %v2287 = vpop.f32.mrf.mxu0
        %v2288 = vadd.f32 0.0, %v2287
        %v2289 = vpop.f32.mrf.mxu0
        %2290 = vmatprep.mubr.bf16.mxu0 0
        %2291 = vmatmul.mubr.bf16.gmra.mxu0 %v2237
        %v2292 = vpop.f32.mrf.mxu0
        %v2293 = vadd.f32 0.0, %v2292
        %v2294 = vpop.f32.mrf.mxu0
        %v2295 = vpop.f32.mrf.mxu0
        %v2296 = vadd.f32 0.0, %v2295
        %v2297 = vpop.f32.mrf.mxu0
        %2298 = vmatprep.mubr.bf16.mxu0 0
        %2299 = vmatmul.mubr.bf16.gmra.mxu0 %v2240
        %v2300 = vpop.f32.mrf.mxu0
        %v2301 = vadd.f32 0.0, %v2300
        %v2302 = vpop.f32.mrf.mxu0
        %v2303 = vpop.f32.mrf.mxu0
        %v2304 = vadd.f32 0.0, %v2303
        %v2305 = vpop.f32.mrf.mxu0
        %2306 = vdwg.mxu0
        %v2307 = vadd.f32 %v2182, %v2277
        %v2308 = vadd.f32 %v2183, %v2280
        %v2309 = vadd.f32 %v2184, %v2285
        %v2310 = vadd.f32 %v2185, %v2288
        %v2311 = vadd.f32 %v2186, %v2293
        %v2312 = vadd.f32 %v2187, %v2296
        %v2313 = vadd.f32 %v2188, %v2301
        %v2314 = vadd.f32 %v2189, %v2304
        %v2315 = vld [vmem:[#allocation7 + $0x70] sm:$0xff]
        %v2316 = vld [vmem:[#allocation7 + $0x78] sm:$0xff]
        %v2317 = vld [vmem:[#allocation7 + $0x80] sm:$0xff]
        %v2318 = vld [vmem:[#allocation7 + $0x88] sm:$0xff]
        %v2319 = vld [vmem:[#allocation7 + $0x90] sm:$0xff]
        %v2320 = vld [vmem:[#allocation7 + $0x98] sm:$0xff]
        %v2321 = vld [vmem:[#allocation7 + $0xa0] sm:$0xff]
        %v2322 = vld [vmem:[#allocation7 + $0xa8] sm:$0xff]
        %2324 = vset.pattern.permute.xlu0 0
        %2325 = vperm.xlu0 %2324, %v2315
        %v2326 = vpop.permute.xlu0 %2325
        %2329 = vset.pattern.permute.xlu0 0
        %2330 = vperm.xlu0 %2329, %v2316
        %v2331 = vpop.permute.xlu0 %2330
        %2334 = vset.pattern.permute.xlu0 0
        %2335 = vperm.xlu0 %2334, %v2317
        %v2336 = vpop.permute.xlu0 %2335
        %2339 = vset.pattern.permute.xlu0 0
        %2340 = vperm.xlu0 %2339, %v2318
        %v2341 = vpop.permute.xlu0 %2340
        %2344 = vset.pattern.permute.xlu0 0
        %2345 = vperm.xlu0 %2344, %v2319
        %v2346 = vpop.permute.xlu0 %2345
        %2349 = vset.pattern.permute.xlu0 0
        %2350 = vperm.xlu0 %2349, %v2320
        %v2351 = vpop.permute.xlu0 %2350
        %2354 = vset.pattern.permute.xlu0 0
        %2355 = vperm.xlu0 %2354, %v2321
        %v2356 = vpop.permute.xlu0 %2355
        %2359 = vset.pattern.permute.xlu0 0
        %2360 = vperm.xlu0 %2359, %v2322
        %v2361 = vpop.permute.xlu0 %2360
        %v2363 = vadd.f32 %v2307, %v2326
        %v2364 = vadd.f32 %v2308, %v2331
        %v2365 = vadd.f32 %v2309, %v2336
        %v2366 = vadd.f32 %v2310, %v2341
        %v2367 = vadd.f32 %v2311, %v2346
        %v2368 = vadd.f32 %v2312, %v2351
        %v2369 = vadd.f32 %v2313, %v2356
        %v2370 = vadd.f32 %v2314, %v2361
        %vm2371 = vcmp.ge.f32.partialorder %v2363, 0.0
        %vm2372 = vcmp.ge.f32.partialorder %v2364, 0.0
        %vm2373 = vcmp.ge.f32.partialorder %v2365, 0.0
        %vm2374 = vcmp.ge.f32.partialorder %v2366, 0.0
        %vm2375 = vcmp.ge.f32.partialorder %v2367, 0.0
        %vm2376 = vcmp.ge.f32.partialorder %v2368, 0.0
        %vm2377 = vcmp.ge.f32.partialorder %v2369, 0.0
        %vm2378 = vcmp.ge.f32.partialorder %v2370, 0.0
        %v2379 = vmul.f32 %v2363, 0.01
        %v2380 = vmul.f32 %v2364, 0.01
        %v2381 = vmul.f32 %v2365, 0.01
        %v2382 = vmul.f32 %v2366, 0.01
        %v2383 = vmul.f32 %v2367, 0.01
        %v2384 = vmul.f32 %v2368, 0.01
        %v2385 = vmul.f32 %v2369, 0.01
        %v2386 = vmul.f32 %v2370, 0.01
        %v2387 = vsel %vm2371, %v2363, %v2379
        %v2388 = vsel %vm2372, %v2364, %v2380
        %v2389 = vsel %vm2373, %v2365, %v2381
        %v2390 = vsel %vm2374, %v2366, %v2382
        %v2391 = vsel %vm2375, %v2367, %v2383
        %v2392 = vsel %vm2376, %v2368, %v2384
        %v2393 = vsel %vm2377, %v2369, %v2385
        %v2394 = vsel %vm2378, %v2370, %v2386
        %2403 = vrot.lane.b32.xlu0 %v2387, 127
        %v2404 = vpop.permute.xlu0 %2403
        %2405 = vrot.lane.b32.xlu0 %v2388, 127
        %v2406 = vpop.permute.xlu0 %2405
        %2407 = vrot.lane.b32.xlu0 %v2389, 127
        %v2408 = vpop.permute.xlu0 %2407
        %2409 = vrot.lane.b32.xlu0 %v2390, 127
        %v2410 = vpop.permute.xlu0 %2409
        %2411 = vrot.lane.b32.xlu0 %v2391, 127
        %v2412 = vpop.permute.xlu0 %2411
        %2413 = vrot.lane.b32.xlu0 %v2392, 127
        %v2414 = vpop.permute.xlu0 %2413
        %2415 = vrot.lane.b32.xlu0 %v2393, 127
        %v2416 = vpop.permute.xlu0 %2415
        %2417 = vrot.lane.b32.xlu0 %v2394, 127
        %v2418 = vpop.permute.xlu0 %2417
        %v2427 = vmax.f32 %v2387, %v2404
        %v2428 = vmax.f32 %v2388, %v2406
        %v2429 = vmax.f32 %v2389, %v2408
        %v2430 = vmax.f32 %v2390, %v2410
        %v2431 = vmax.f32 %v2391, %v2412
        %v2432 = vmax.f32 %v2392, %v2414
        %v2433 = vmax.f32 %v2393, %v2416
        %v2434 = vmax.f32 %v2394, %v2418
        %v2435 = vpack.c.bf16 %v2428, %v2427
        %v2436 = vpack.c.bf16 %v2430, %v2429
        %v2437 = vpack.c.bf16 %v2432, %v2431
        %v2438 = vpack.c.bf16 %v2434, %v2433
        %v2439 = vld [vmem:[#allocation3 + $0x1b8] sm:$0xf]
        %v2440 = vld [vmem:[#allocation3 + $0x1bc] sm:$0x7]
        %v2443 = vunpack.c.l.b16 %v2439
        %v2444 = vunpack.c.l.b16 %v2440
        %v2445 = vpack.c.b16 %v2444, %v2443
        %vm2446 = vcmask 105472
        %v2448 = vsel %vm2446, %v2435, 0
        %v2451 = vsel %vm2446, %v2436, 0
        %v2454 = vsel %vm2446, %v2437, 0
        %v2457 = vsel %vm2446, %v2438, 0
        %vm2459 = vcmask 1045504
        %v2460 = vsel %vm2459, 4294967295, 65535
        %v2461 = vsel %vm610, %v2460, 0
        %v2463 = vand.u32 %v2445, %v2461
        %2465 = vmatprep.subr.bf16.mxu0 0
        %2466 = vmatpush1.bf16.msra.mxu0 0
        %2467 = vmatprep.subr.bf16.mxu0 0
        %2468 = vmatpush1.bf16.msra.mxu0 0
        %2469 = vmatprep.subr.bf16.mxu0 0
        %2470 = vmatpush1.bf16.msra.mxu0 0
        %2471 = vmatprep.subr.bf16.mxu0 0
        %2472 = vmatpush1.bf16.msra.mxu0 0
        %2473 = vmatprep.subr.bf16.mxu0 0
        %2474 = vmatpush1.bf16.msra.mxu0 0
        %2475 = vmatprep.subr.bf16.mxu0 0
        %2476 = vmatpush1.bf16.msra.mxu0 0
        %2477 = vmatprep.subr.bf16.mxu0 0
        %2478 = vmatpush1.bf16.msra.mxu0 0
        %2479 = vmatprep.subr.bf16.mxu0 0
        %2480 = vmatpush1.bf16.msra.mxu0 %v2463
        %2481 = vmatprep.subr.bf16.mxu0 0
        %2482 = vmatpush2.bf16.msra.mxu0 0
        %2483 = vmatprep.subr.bf16.mxu0 0
        %2484 = vmatpush2.bf16.msra.mxu0 0
        %2485 = vmatprep.subr.bf16.mxu0 0
        %2486 = vmatpush2.bf16.msra.mxu0 0
        %2487 = vmatprep.subr.bf16.mxu0 0
        %2488 = vmatpush2.bf16.msra.mxu0 0
        %2489 = vmatprep.subr.bf16.mxu0 0
        %2490 = vmatpush2.bf16.msra.mxu0 0
        %2491 = vmatprep.subr.bf16.mxu0 0
        %2492 = vmatpush2.bf16.msra.mxu0 0
        %2493 = vmatprep.subr.bf16.mxu0 0
        %2494 = vmatpush2.bf16.msra.mxu0 0
        %2495 = vmatprep.subr.bf16.mxu0 0
        %2496 = vmatpush2.bf16.msra.mxu0 0
        %2497 = vmatprep.mubr.bf16.mxu0 0
        %2498 = vmatmul.mubr.bf16.gmra.mxu0 %v2448
        %v2499 = vpop.f32.mrf.mxu0
        %v2500 = vadd.f32 0.0, %v2499
        %v2501 = vpop.f32.mrf.mxu0
        %v2502 = vpop.f32.mrf.mxu0
        %v2503 = vadd.f32 0.0, %v2502
        %v2504 = vpop.f32.mrf.mxu0
        %2505 = vmatprep.mubr.bf16.mxu0 0
        %2506 = vmatmul.mubr.bf16.gmra.mxu0 %v2451
        %v2507 = vpop.f32.mrf.mxu0
        %v2508 = vadd.f32 0.0, %v2507
        %v2509 = vpop.f32.mrf.mxu0
        %v2510 = vpop.f32.mrf.mxu0
        %v2511 = vadd.f32 0.0, %v2510
        %v2512 = vpop.f32.mrf.mxu0
        %2513 = vmatprep.mubr.bf16.mxu0 0
        %2514 = vmatmul.mubr.bf16.gmra.mxu0 %v2454
        %v2515 = vpop.f32.mrf.mxu0
        %v2516 = vadd.f32 0.0, %v2515
        %v2517 = vpop.f32.mrf.mxu0
        %v2518 = vpop.f32.mrf.mxu0
        %v2519 = vadd.f32 0.0, %v2518
        %v2520 = vpop.f32.mrf.mxu0
        %2521 = vmatprep.mubr.bf16.mxu0 0
        %2522 = vmatmul.mubr.bf16.gmra.mxu0 %v2457
        %v2523 = vpop.f32.mrf.mxu0
        %v2524 = vadd.f32 0.0, %v2523
        %v2525 = vpop.f32.mrf.mxu0
        %v2526 = vpop.f32.mrf.mxu0
        %v2527 = vadd.f32 0.0, %v2526
        %v2528 = vpop.f32.mrf.mxu0
        %2529 = vdwg.mxu0
        %2530 = vst.msk [vmem:[#allocation2] sm:$0xff] %vm658, 0.0
        %2531 = vst.msk [vmem:[#allocation2 + $0x10] sm:$0xff] %vm658, 0.0
        %2532 = vst.msk [vmem:[#allocation2 + $0x20] sm:$0xff] %vm658, 0.0
        %2533 = vst.msk [vmem:[#allocation2 + $0x30] sm:$0xff] %vm658, 0.0
        %2534 = vst.msk [vmem:[#allocation2 + $0x40] sm:$0xff] %vm658, 0.0
        %2535 = vst.msk [vmem:[#allocation2 + $0x50] sm:$0xff] %vm658, 0.0
        %2536 = vst.msk [vmem:[#allocation2 + $0x60] sm:$0xff] %vm658, 0.0
        %2537 = vst.msk [vmem:[#allocation2 + $0x70] sm:$0xff] %vm658, 0.0
        %vm2538 = vcmask 72768
        %2539 = vst.msk [vmem:[#allocation2] sm:$0xff] %vm2538, 0.0
        %2540 = vst.msk [vmem:[#allocation2 + $0x10] sm:$0xff] %vm2538, 0.0
        %2541 = vst.msk [vmem:[#allocation2 + $0x20] sm:$0xff] %vm2538, 0.0
        %2542 = vst.msk [vmem:[#allocation2 + $0x30] sm:$0xff] %vm2538, 0.0
        %2543 = vst.msk [vmem:[#allocation2 + $0x40] sm:$0xff] %vm2538, 0.0
        %2544 = vst.msk [vmem:[#allocation2 + $0x50] sm:$0xff] %vm2538, 0.0
        %2545 = vst.msk [vmem:[#allocation2 + $0x60] sm:$0xff] %vm2538, 0.0
        %2546 = vst.msk [vmem:[#allocation2 + $0x70] sm:$0xff] %vm2538, 0.0
        %2555 = vrot.lane.b32.xlu0 %v2500, 1
        %v2556 = vpop.permute.xlu0 %2555
        %2557 = vrot.lane.b32.xlu0 %v2503, 1
        %v2558 = vpop.permute.xlu0 %2557
        %2559 = vrot.lane.b32.xlu0 %v2508, 1
        %v2560 = vpop.permute.xlu0 %2559
        %2561 = vrot.lane.b32.xlu0 %v2511, 1
        %v2562 = vpop.permute.xlu0 %2561
        %2563 = vrot.lane.b32.xlu0 %v2516, 1
        %v2564 = vpop.permute.xlu0 %2563
        %2565 = vrot.lane.b32.xlu0 %v2519, 1
        %v2566 = vpop.permute.xlu0 %2565
        %2567 = vrot.lane.b32.xlu0 %v2524, 1
        %v2568 = vpop.permute.xlu0 %2567
        %2569 = vrot.lane.b32.xlu0 %v2527, 1
        %v2570 = vpop.permute.xlu0 %2569
        %vm2579 = vcmask 64520
        %2580 = vst.msk [vmem:[#allocation2] sm:$0xff] %vm2579, %v2556
        %2581 = vst.msk [vmem:[#allocation2 + $0x10] sm:$0xff] %vm2579, %v2558
        %2582 = vst.msk [vmem:[#allocation2 + $0x20] sm:$0xff] %vm2579, %v2560
        %2583 = vst.msk [vmem:[#allocation2 + $0x30] sm:$0xff] %vm2579, %v2562
        %2584 = vst.msk [vmem:[#allocation2 + $0x40] sm:$0xff] %vm2579, %v2564
        %2585 = vst.msk [vmem:[#allocation2 + $0x50] sm:$0xff] %vm2579, %v2566
        %2586 = vst.msk [vmem:[#allocation2 + $0x60] sm:$0xff] %vm2579, %v2568
        %2587 = vst.msk [vmem:[#allocation2 + $0x70] sm:$0xff] %vm2579, %v2570
        %v2588 = vld [vmem:[#allocation2] sm:$0xff]
        %v2589 = vld [vmem:[#allocation2 + $0x10] sm:$0xff]
        %v2590 = vld [vmem:[#allocation2 + $0x20] sm:$0xff]
        %v2591 = vld [vmem:[#allocation2 + $0x30] sm:$0xff]
        %v2592 = vld [vmem:[#allocation2 + $0x40] sm:$0xff]
        %v2593 = vld [vmem:[#allocation2 + $0x50] sm:$0xff]
        %v2594 = vld [vmem:[#allocation2 + $0x60] sm:$0xff]
        %v2595 = vld [vmem:[#allocation2 + $0x70] sm:$0xff]
        %v2596 = vpack.c.bf16 %v2589, %v2588
        %v2597 = vpack.c.bf16 %v2591, %v2590
        %v2598 = vpack.c.bf16 %v2593, %v2592
        %v2599 = vpack.c.bf16 %v2595, %v2594
        %v2600 = vld [vmem:[#allocation3 + $0x1c0] sm:$0xf]
        %v2601 = vld [vmem:[#allocation3 + $0x1c4] sm:$0xf]
        %v2602 = vld [vmem:[#allocation3 + $0x1c8] sm:$0xf]
        %v2603 = vld [vmem:[#allocation3 + $0x1cc] sm:$0xf]
        %v2604 = vld [vmem:[#allocation3 + $0x1d0] sm:$0xf]
        %v2605 = vld [vmem:[#allocation3 + $0x1d4] sm:$0xf]
        %v2606 = vld [vmem:[#allocation3 + $0x1d8] sm:$0xf]
        %v2607 = vld [vmem:[#allocation3 + $0x1dc] sm:$0xf]
        %v2608 = vld [vmem:[#allocation3 + $0x1e0] sm:$0xf]
        %v2609 = vld [vmem:[#allocation3 + $0x1e4] sm:$0xf]
        %v2610 = vld [vmem:[#allocation3 + $0x1e8] sm:$0xf]
        %v2611 = vld [vmem:[#allocation3 + $0x1ec] sm:$0xf]
        %v2612 = vld [vmem:[#allocation3 + $0x1f0] sm:$0xf]
        %v2613 = vld [vmem:[#allocation3 + $0x1f4] sm:$0xf]
        %v2614 = vld [vmem:[#allocation3 + $0x1f8] sm:$0xf]
        %v2615 = vld [vmem:[#allocation3 + $0x1fc] sm:$0xf]
        %v2624 = vunpack.c.l.b16 %v2608
        %v2625 = vunpack.c.l.b16 %v2609
        %v2626 = vunpack.c.l.b16 %v2610
        %v2627 = vunpack.c.l.b16 %v2611
        %v2628 = vunpack.c.l.b16 %v2612
        %v2629 = vunpack.c.l.b16 %v2613
        %v2630 = vunpack.c.l.b16 %v2614
        %v2631 = vunpack.c.l.b16 %v2615
        %v2632 = vpack.c.b16 %v2625, %v2624
        %v2633 = vpack.c.b16 %v2627, %v2626
        %v2634 = vpack.c.b16 %v2629, %v2628
        %v2635 = vpack.c.b16 %v2631, %v2630
        %2640 = vrot.lane.b32.xlu0 %v2596, 127
        %v2641 = vpop.permute.xlu0 %2640
        %2642 = vrot.lane.b32.xlu0 %v2597, 127
        %v2643 = vpop.permute.xlu0 %2642
        %2644 = vrot.lane.b32.xlu0 %v2598, 127
        %v2645 = vpop.permute.xlu0 %2644
        %2646 = vrot.lane.b32.xlu0 %v2599, 127
        %v2647 = vpop.permute.xlu0 %2646
        %v2653 = vsel %vm1765, %v2632, 0
        %v2656 = vsel %vm1765, %v2633, 0
        %v2659 = vsel %vm1765, %v2634, 0
        %v2662 = vsel %vm1765, %v2635, 0
        %2664 = vmatprep.subr.bf16.mxu0 0
        %2665 = vmatpush1.bf16.msra.mxu0 0
        %2666 = vmatprep.subr.bf16.mxu0 0
        %2667 = vmatpush1.bf16.msra.mxu0 0
        %2668 = vmatprep.subr.bf16.mxu0 0
        %2669 = vmatpush1.bf16.msra.mxu0 0
        %2670 = vmatprep.subr.bf16.mxu0 0
        %2671 = vmatpush1.bf16.msra.mxu0 0
        %2672 = vmatprep.subr.bf16.mxu0 0
        %2673 = vmatpush1.bf16.msra.mxu0 %v2647
        %2674 = vmatprep.subr.bf16.mxu0 0
        %2675 = vmatpush1.bf16.msra.mxu0 %v2645
        %2676 = vmatprep.subr.bf16.mxu0 0
        %2677 = vmatpush1.bf16.msra.mxu0 %v2643
        %2678 = vmatprep.subr.bf16.mxu0 0
        %2679 = vmatpush1.bf16.msra.mxu0 %v2641
        %2680 = vmatprep.subr.bf16.mxu0 0
        %2681 = vmatpush2.bf16.msra.mxu0 0
        %2682 = vmatprep.subr.bf16.mxu0 0
        %2683 = vmatpush2.bf16.msra.mxu0 0
        %2684 = vmatprep.subr.bf16.mxu0 0
        %2685 = vmatpush2.bf16.msra.mxu0 0
        %2686 = vmatprep.subr.bf16.mxu0 0
        %2687 = vmatpush2.bf16.msra.mxu0 0
        %2688 = vmatprep.subr.bf16.mxu0 0
        %2689 = vmatpush2.bf16.msra.mxu0 0
        %2690 = vmatprep.subr.bf16.mxu0 0
        %2691 = vmatpush2.bf16.msra.mxu0 0
        %2692 = vmatprep.subr.bf16.mxu0 0
        %2693 = vmatpush2.bf16.msra.mxu0 0
        %2694 = vmatprep.subr.bf16.mxu0 0
        %2695 = vmatpush2.bf16.msra.mxu0 0
        %2696 = vmatprep.mubr.bf16.mxu0 0
        %2697 = vmatmul.mubr.bf16.gmra.mxu0 %v2653
        %v2698 = vpop.f32.mrf.mxu0
        %v2699 = vadd.f32 0.0, %v2698
        %v2700 = vpop.f32.mrf.mxu0
        %v2701 = vpop.f32.mrf.mxu0
        %v2702 = vadd.f32 0.0, %v2701
        %v2703 = vpop.f32.mrf.mxu0
        %2704 = vmatprep.mubr.bf16.mxu0 0
        %2705 = vmatmul.mubr.bf16.gmra.mxu0 %v2656
        %v2706 = vpop.f32.mrf.mxu0
        %v2707 = vadd.f32 0.0, %v2706
        %v2708 = vpop.f32.mrf.mxu0
        %v2709 = vpop.f32.mrf.mxu0
        %v2710 = vadd.f32 0.0, %v2709
        %v2711 = vpop.f32.mrf.mxu0
        %2712 = vmatprep.mubr.bf16.mxu0 0
        %2713 = vmatmul.mubr.bf16.gmra.mxu0 %v2659
        %v2714 = vpop.f32.mrf.mxu0
        %v2715 = vadd.f32 0.0, %v2714
        %v2716 = vpop.f32.mrf.mxu0
        %v2717 = vpop.f32.mrf.mxu0
        %v2718 = vadd.f32 0.0, %v2717
        %v2719 = vpop.f32.mrf.mxu0
        %2720 = vmatprep.mubr.bf16.mxu0 0
        %2721 = vmatmul.mubr.bf16.gmra.mxu0 %v2662
        %v2722 = vpop.f32.mrf.mxu0
        %v2723 = vadd.f32 0.0, %v2722
        %v2724 = vpop.f32.mrf.mxu0
        %v2725 = vpop.f32.mrf.mxu0
        %v2726 = vadd.f32 0.0, %v2725
        %v2727 = vpop.f32.mrf.mxu0
        %2728 = vdwg.mxu0
        %v2737 = vunpack.c.l.b16 %v2600
        %v2738 = vunpack.c.l.b16 %v2601
        %v2739 = vunpack.c.l.b16 %v2602
        %v2740 = vunpack.c.l.b16 %v2603
        %v2741 = vunpack.c.l.b16 %v2604
        %v2742 = vunpack.c.l.b16 %v2605
        %v2743 = vunpack.c.l.b16 %v2606
        %v2744 = vunpack.c.l.b16 %v2607
        %v2745 = vpack.c.b16 %v2738, %v2737
        %v2746 = vpack.c.b16 %v2740, %v2739
        %v2747 = vpack.c.b16 %v2742, %v2741
        %v2748 = vpack.c.b16 %v2744, %v2743
        %v2750 = vsel %vm1765, %v2745, 0
        %v2753 = vsel %vm1765, %v2746, 0
        %v2756 = vsel %vm1765, %v2747, 0
        %v2759 = vsel %vm1765, %v2748, 0
        %2761 = vmatprep.subr.bf16.mxu0 0
        %2762 = vmatpush1.bf16.msra.mxu0 0
        %2763 = vmatprep.subr.bf16.mxu0 0
        %2764 = vmatpush1.bf16.msra.mxu0 0
        %2765 = vmatprep.subr.bf16.mxu0 0
        %2766 = vmatpush1.bf16.msra.mxu0 0
        %2767 = vmatprep.subr.bf16.mxu0 0
        %2768 = vmatpush1.bf16.msra.mxu0 0
        %2769 = vmatprep.subr.bf16.mxu0 0
        %2770 = vmatpush1.bf16.msra.mxu0 %v2599
        %2771 = vmatprep.subr.bf16.mxu0 0
        %2772 = vmatpush1.bf16.msra.mxu0 %v2598
        %2773 = vmatprep.subr.bf16.mxu0 0
        %2774 = vmatpush1.bf16.msra.mxu0 %v2597
        %2775 = vmatprep.subr.bf16.mxu0 0
        %2776 = vmatpush1.bf16.msra.mxu0 %v2596
        %2777 = vmatprep.subr.bf16.mxu0 0
        %2778 = vmatpush2.bf16.msra.mxu0 0
        %2779 = vmatprep.subr.bf16.mxu0 0
        %2780 = vmatpush2.bf16.msra.mxu0 0
        %2781 = vmatprep.subr.bf16.mxu0 0
        %2782 = vmatpush2.bf16.msra.mxu0 0
        %2783 = vmatprep.subr.bf16.mxu0 0
        %2784 = vmatpush2.bf16.msra.mxu0 0
        %2785 = vmatprep.subr.bf16.mxu0 0
        %2786 = vmatpush2.bf16.msra.mxu0 0
        %2787 = vmatprep.subr.bf16.mxu0 0
        %2788 = vmatpush2.bf16.msra.mxu0 0
        %2789 = vmatprep.subr.bf16.mxu0 0
        %2790 = vmatpush2.bf16.msra.mxu0 0
        %2791 = vmatprep.subr.bf16.mxu0 0
        %2792 = vmatpush2.bf16.msra.mxu0 0
        %2793 = vmatprep.mubr.bf16.mxu0 0
        %2794 = vmatmul.mubr.bf16.gmra.mxu0 %v2750
        %v2795 = vpop.f32.mrf.mxu0
        %v2796 = vadd.f32 %v2699, %v2795
        %v2797 = vpop.f32.mrf.mxu0
        %v2798 = vpop.f32.mrf.mxu0
        %v2799 = vadd.f32 %v2702, %v2798
        %v2800 = vpop.f32.mrf.mxu0
        %2801 = vmatprep.mubr.bf16.mxu0 0
        %2802 = vmatmul.mubr.bf16.gmra.mxu0 %v2753
        %v2803 = vpop.f32.mrf.mxu0
        %v2804 = vadd.f32 %v2707, %v2803
        %v2805 = vpop.f32.mrf.mxu0
        %v2806 = vpop.f32.mrf.mxu0
        %v2807 = vadd.f32 %v2710, %v2806
        %v2808 = vpop.f32.mrf.mxu0
        %2809 = vmatprep.mubr.bf16.mxu0 0
        %2810 = vmatmul.mubr.bf16.gmra.mxu0 %v2756
        %v2811 = vpop.f32.mrf.mxu0
        %v2812 = vadd.f32 %v2715, %v2811
        %v2813 = vpop.f32.mrf.mxu0
        %v2814 = vpop.f32.mrf.mxu0
        %v2815 = vadd.f32 %v2718, %v2814
        %v2816 = vpop.f32.mrf.mxu0
        %2817 = vmatprep.mubr.bf16.mxu0 0
        %2818 = vmatmul.mubr.bf16.gmra.mxu0 %v2759
        %v2819 = vpop.f32.mrf.mxu0
        %v2820 = vadd.f32 %v2723, %v2819
        %v2821 = vpop.f32.mrf.mxu0
        %v2822 = vpop.f32.mrf.mxu0
        %v2823 = vadd.f32 %v2726, %v2822
        %v2824 = vpop.f32.mrf.mxu0
        %2825 = vdwg.mxu0
        %v2826 = vld [vmem:[#allocation3 + $0x200] sm:$0xf]
        %v2827 = vld [vmem:[#allocation3 + $0x204] sm:$0xf]
        %v2828 = vld [vmem:[#allocation3 + $0x208] sm:$0xf]
        %v2829 = vld [vmem:[#allocation3 + $0x20c] sm:$0xf]
        %v2830 = vld [vmem:[#allocation3 + $0x210] sm:$0xf]
        %v2831 = vld [vmem:[#allocation3 + $0x214] sm:$0xf]
        %v2832 = vld [vmem:[#allocation3 + $0x218] sm:$0xf]
        %v2833 = vld [vmem:[#allocation3 + $0x21c] sm:$0xf]
        %v2842 = vunpack.c.l.b16 %v2826
        %v2843 = vunpack.c.l.b16 %v2827
        %v2844 = vunpack.c.l.b16 %v2828
        %v2845 = vunpack.c.l.b16 %v2829
        %v2846 = vunpack.c.l.b16 %v2830
        %v2847 = vunpack.c.l.b16 %v2831
        %v2848 = vunpack.c.l.b16 %v2832
        %v2849 = vunpack.c.l.b16 %v2833
        %v2850 = vpack.c.b16 %v2843, %v2842
        %v2851 = vpack.c.b16 %v2845, %v2844
        %v2852 = vpack.c.b16 %v2847, %v2846
        %v2853 = vpack.c.b16 %v2849, %v2848
        %2854 = vrot.lane.b32.xlu0 %v2596, 126
        %v2855 = vpop.permute.xlu0 %2854
        %2856 = vrot.lane.b32.xlu0 %v2597, 126
        %v2857 = vpop.permute.xlu0 %2856
        %2858 = vrot.lane.b32.xlu0 %v2598, 126
        %v2859 = vpop.permute.xlu0 %2858
        %2860 = vrot.lane.b32.xlu0 %v2599, 126
        %v2861 = vpop.permute.xlu0 %2860
        %v2867 = vsel %vm1765, %v2850, 0
        %v2870 = vsel %vm1765, %v2851, 0
        %v2873 = vsel %vm1765, %v2852, 0
        %v2876 = vsel %vm1765, %v2853, 0
        %2878 = vmatprep.subr.bf16.mxu0 0
        %2879 = vmatpush1.bf16.msra.mxu0 0
        %2880 = vmatprep.subr.bf16.mxu0 0
        %2881 = vmatpush1.bf16.msra.mxu0 0
        %2882 = vmatprep.subr.bf16.mxu0 0
        %2883 = vmatpush1.bf16.msra.mxu0 0
        %2884 = vmatprep.subr.bf16.mxu0 0
        %2885 = vmatpush1.bf16.msra.mxu0 0
        %2886 = vmatprep.subr.bf16.mxu0 0
        %2887 = vmatpush1.bf16.msra.mxu0 %v2861
        %2888 = vmatprep.subr.bf16.mxu0 0
        %2889 = vmatpush1.bf16.msra.mxu0 %v2859
        %2890 = vmatprep.subr.bf16.mxu0 0
        %2891 = vmatpush1.bf16.msra.mxu0 %v2857
        %2892 = vmatprep.subr.bf16.mxu0 0
        %2893 = vmatpush1.bf16.msra.mxu0 %v2855
        %2894 = vmatprep.subr.bf16.mxu0 0
        %2895 = vmatpush2.bf16.msra.mxu0 0
        %2896 = vmatprep.subr.bf16.mxu0 0
        %2897 = vmatpush2.bf16.msra.mxu0 0
        %2898 = vmatprep.subr.bf16.mxu0 0
        %2899 = vmatpush2.bf16.msra.mxu0 0
        %2900 = vmatprep.subr.bf16.mxu0 0
        %2901 = vmatpush2.bf16.msra.mxu0 0
        %2902 = vmatprep.subr.bf16.mxu0 0
        %2903 = vmatpush2.bf16.msra.mxu0 0
        %2904 = vmatprep.subr.bf16.mxu0 0
        %2905 = vmatpush2.bf16.msra.mxu0 0
        %2906 = vmatprep.subr.bf16.mxu0 0
        %2907 = vmatpush2.bf16.msra.mxu0 0
        %2908 = vmatprep.subr.bf16.mxu0 0
        %2909 = vmatpush2.bf16.msra.mxu0 0
        %2910 = vmatprep.mubr.bf16.mxu0 0
        %2911 = vmatmul.mubr.bf16.gmra.mxu0 %v2867
        %v2912 = vpop.f32.mrf.mxu0
        %v2913 = vadd.f32 0.0, %v2912
        %v2914 = vpop.f32.mrf.mxu0
        %v2915 = vpop.f32.mrf.mxu0
        %v2916 = vadd.f32 0.0, %v2915
        %v2917 = vpop.f32.mrf.mxu0
        %2918 = vmatprep.mubr.bf16.mxu0 0
        %2919 = vmatmul.mubr.bf16.gmra.mxu0 %v2870
        %v2920 = vpop.f32.mrf.mxu0
        %v2921 = vadd.f32 0.0, %v2920
        %v2922 = vpop.f32.mrf.mxu0
        %v2923 = vpop.f32.mrf.mxu0
        %v2924 = vadd.f32 0.0, %v2923
        %v2925 = vpop.f32.mrf.mxu0
        %2926 = vmatprep.mubr.bf16.mxu0 0
        %2927 = vmatmul.mubr.bf16.gmra.mxu0 %v2873
        %v2928 = vpop.f32.mrf.mxu0
        %v2929 = vadd.f32 0.0, %v2928
        %v2930 = vpop.f32.mrf.mxu0
        %v2931 = vpop.f32.mrf.mxu0
        %v2932 = vadd.f32 0.0, %v2931
        %v2933 = vpop.f32.mrf.mxu0
        %2934 = vmatprep.mubr.bf16.mxu0 0
        %2935 = vmatmul.mubr.bf16.gmra.mxu0 %v2876
        %v2936 = vpop.f32.mrf.mxu0
        %v2937 = vadd.f32 0.0, %v2936
        %v2938 = vpop.f32.mrf.mxu0
        %v2939 = vpop.f32.mrf.mxu0
        %v2940 = vadd.f32 0.0, %v2939
        %v2941 = vpop.f32.mrf.mxu0
        %2942 = vdwg.mxu0
        %v2943 = vadd.f32 %v2796, %v2913
        %v2944 = vadd.f32 %v2799, %v2916
        %v2945 = vadd.f32 %v2804, %v2921
        %v2946 = vadd.f32 %v2807, %v2924
        %v2947 = vadd.f32 %v2812, %v2929
        %v2948 = vadd.f32 %v2815, %v2932
        %v2949 = vadd.f32 %v2820, %v2937
        %v2950 = vadd.f32 %v2823, %v2940
        %v2951 = vld [vmem:[#allocation3 + $0x220] sm:$0xf]
        %v2952 = vld [vmem:[#allocation3 + $0x224] sm:$0xf]
        %v2953 = vld [vmem:[#allocation3 + $0x228] sm:$0xf]
        %v2954 = vld [vmem:[#allocation3 + $0x22c] sm:$0xf]
        %v2955 = vld [vmem:[#allocation3 + $0x230] sm:$0xf]
        %v2956 = vld [vmem:[#allocation3 + $0x234] sm:$0xf]
        %v2957 = vld [vmem:[#allocation3 + $0x238] sm:$0xf]
        %v2958 = vld [vmem:[#allocation3 + $0x23c] sm:$0xf]
        %v2967 = vunpack.c.l.b16 %v2951
        %v2968 = vunpack.c.l.b16 %v2952
        %v2969 = vunpack.c.l.b16 %v2953
        %v2970 = vunpack.c.l.b16 %v2954
        %v2971 = vunpack.c.l.b16 %v2955
        %v2972 = vunpack.c.l.b16 %v2956
        %v2973 = vunpack.c.l.b16 %v2957
        %v2974 = vunpack.c.l.b16 %v2958
        %v2975 = vpack.c.b16 %v2968, %v2967
        %v2976 = vpack.c.b16 %v2970, %v2969
        %v2977 = vpack.c.b16 %v2972, %v2971
        %v2978 = vpack.c.b16 %v2974, %v2973
        %2979 = vrot.lane.b32.xlu0 %v2596, 125
        %v2980 = vpop.permute.xlu0 %2979
        %2981 = vrot.lane.b32.xlu0 %v2597, 125
        %v2982 = vpop.permute.xlu0 %2981
        %2983 = vrot.lane.b32.xlu0 %v2598, 125
        %v2984 = vpop.permute.xlu0 %2983
        %2985 = vrot.lane.b32.xlu0 %v2599, 125
        %v2986 = vpop.permute.xlu0 %2985
        %v2992 = vsel %vm1765, %v2975, 0
        %v2995 = vsel %vm1765, %v2976, 0
        %v2998 = vsel %vm1765, %v2977, 0
        %v3001 = vsel %vm1765, %v2978, 0
        %3003 = vmatprep.subr.bf16.mxu0 0
        %3004 = vmatpush1.bf16.msra.mxu0 0
        %3005 = vmatprep.subr.bf16.mxu0 0
        %3006 = vmatpush1.bf16.msra.mxu0 0
        %3007 = vmatprep.subr.bf16.mxu0 0
        %3008 = vmatpush1.bf16.msra.mxu0 0
        %3009 = vmatprep.subr.bf16.mxu0 0
        %3010 = vmatpush1.bf16.msra.mxu0 0
        %3011 = vmatprep.subr.bf16.mxu0 0
        %3012 = vmatpush1.bf16.msra.mxu0 %v2986
        %3013 = vmatprep.subr.bf16.mxu0 0
        %3014 = vmatpush1.bf16.msra.mxu0 %v2984
        %3015 = vmatprep.subr.bf16.mxu0 0
        %3016 = vmatpush1.bf16.msra.mxu0 %v2982
        %3017 = vmatprep.subr.bf16.mxu0 0
        %3018 = vmatpush1.bf16.msra.mxu0 %v2980
        %3019 = vmatprep.subr.bf16.mxu0 0
        %3020 = vmatpush2.bf16.msra.mxu0 0
        %3021 = vmatprep.subr.bf16.mxu0 0
        %3022 = vmatpush2.bf16.msra.mxu0 0
        %3023 = vmatprep.subr.bf16.mxu0 0
        %3024 = vmatpush2.bf16.msra.mxu0 0
        %3025 = vmatprep.subr.bf16.mxu0 0
        %3026 = vmatpush2.bf16.msra.mxu0 0
        %3027 = vmatprep.subr.bf16.mxu0 0
        %3028 = vmatpush2.bf16.msra.mxu0 0
        %3029 = vmatprep.subr.bf16.mxu0 0
        %3030 = vmatpush2.bf16.msra.mxu0 0
        %3031 = vmatprep.subr.bf16.mxu0 0
        %3032 = vmatpush2.bf16.msra.mxu0 0
        %3033 = vmatprep.subr.bf16.mxu0 0
        %3034 = vmatpush2.bf16.msra.mxu0 0
        %3035 = vmatprep.mubr.bf16.mxu0 0
        %3036 = vmatmul.mubr.bf16.gmra.mxu0 %v2992
        %v3037 = vpop.f32.mrf.mxu0
        %v3038 = vadd.f32 0.0, %v3037
        %v3039 = vpop.f32.mrf.mxu0
        %v3040 = vpop.f32.mrf.mxu0
        %v3041 = vadd.f32 0.0, %v3040
        %v3042 = vpop.f32.mrf.mxu0
        %3043 = vmatprep.mubr.bf16.mxu0 0
        %3044 = vmatmul.mubr.bf16.gmra.mxu0 %v2995
        %v3045 = vpop.f32.mrf.mxu0
        %v3046 = vadd.f32 0.0, %v3045
        %v3047 = vpop.f32.mrf.mxu0
        %v3048 = vpop.f32.mrf.mxu0
        %v3049 = vadd.f32 0.0, %v3048
        %v3050 = vpop.f32.mrf.mxu0
        %3051 = vmatprep.mubr.bf16.mxu0 0
        %3052 = vmatmul.mubr.bf16.gmra.mxu0 %v2998
        %v3053 = vpop.f32.mrf.mxu0
        %v3054 = vadd.f32 0.0, %v3053
        %v3055 = vpop.f32.mrf.mxu0
        %v3056 = vpop.f32.mrf.mxu0
        %v3057 = vadd.f32 0.0, %v3056
        %v3058 = vpop.f32.mrf.mxu0
        %3059 = vmatprep.mubr.bf16.mxu0 0
        %3060 = vmatmul.mubr.bf16.gmra.mxu0 %v3001
        %v3061 = vpop.f32.mrf.mxu0
        %v3062 = vadd.f32 0.0, %v3061
        %v3063 = vpop.f32.mrf.mxu0
        %v3064 = vpop.f32.mrf.mxu0
        %v3065 = vadd.f32 0.0, %v3064
        %v3066 = vpop.f32.mrf.mxu0
        %3067 = vdwg.mxu0
        %v3068 = vadd.f32 %v2943, %v3038
        %v3069 = vadd.f32 %v2944, %v3041
        %v3070 = vadd.f32 %v2945, %v3046
        %v3071 = vadd.f32 %v2946, %v3049
        %v3072 = vadd.f32 %v2947, %v3054
        %v3073 = vadd.f32 %v2948, %v3057
        %v3074 = vadd.f32 %v2949, %v3062
        %v3075 = vadd.f32 %v2950, %v3065
        %v3076 = vld [vmem:[#allocation3 + $0x240] sm:$0xf]
        %v3077 = vld [vmem:[#allocation3 + $0x244] sm:$0xf]
        %v3078 = vld [vmem:[#allocation3 + $0x248] sm:$0xf]
        %v3079 = vld [vmem:[#allocation3 + $0x24c] sm:$0xf]
        %v3080 = vld [vmem:[#allocation3 + $0x250] sm:$0xf]
        %v3081 = vld [vmem:[#allocation3 + $0x254] sm:$0xf]
        %v3082 = vld [vmem:[#allocation3 + $0x258] sm:$0xf]
        %v3083 = vld [vmem:[#allocation3 + $0x25c] sm:$0xf]
        %v3092 = vunpack.c.l.b16 %v3076
        %v3093 = vunpack.c.l.b16 %v3077
        %v3094 = vunpack.c.l.b16 %v3078
        %v3095 = vunpack.c.l.b16 %v3079
        %v3096 = vunpack.c.l.b16 %v3080
        %v3097 = vunpack.c.l.b16 %v3081
        %v3098 = vunpack.c.l.b16 %v3082
        %v3099 = vunpack.c.l.b16 %v3083
        %v3100 = vpack.c.b16 %v3093, %v3092
        %v3101 = vpack.c.b16 %v3095, %v3094
        %v3102 = vpack.c.b16 %v3097, %v3096
        %v3103 = vpack.c.b16 %v3099, %v3098
        %3104 = vrot.lane.b32.xlu0 %v2596, 124
        %v3105 = vpop.permute.xlu0 %3104
        %3106 = vrot.lane.b32.xlu0 %v2597, 124
        %v3107 = vpop.permute.xlu0 %3106
        %3108 = vrot.lane.b32.xlu0 %v2598, 124
        %v3109 = vpop.permute.xlu0 %3108
        %3110 = vrot.lane.b32.xlu0 %v2599, 124
        %v3111 = vpop.permute.xlu0 %3110
        %v3117 = vsel %vm1765, %v3100, 0
        %v3120 = vsel %vm1765, %v3101, 0
        %v3123 = vsel %vm1765, %v3102, 0
        %v3126 = vsel %vm1765, %v3103, 0
        %3128 = vmatprep.subr.bf16.mxu0 0
        %3129 = vmatpush1.bf16.msra.mxu0 0
        %3130 = vmatprep.subr.bf16.mxu0 0
        %3131 = vmatpush1.bf16.msra.mxu0 0
        %3132 = vmatprep.subr.bf16.mxu0 0
        %3133 = vmatpush1.bf16.msra.mxu0 0
        %3134 = vmatprep.subr.bf16.mxu0 0
        %3135 = vmatpush1.bf16.msra.mxu0 0
        %3136 = vmatprep.subr.bf16.mxu0 0
        %3137 = vmatpush1.bf16.msra.mxu0 %v3111
        %3138 = vmatprep.subr.bf16.mxu0 0
        %3139 = vmatpush1.bf16.msra.mxu0 %v3109
        %3140 = vmatprep.subr.bf16.mxu0 0
        %3141 = vmatpush1.bf16.msra.mxu0 %v3107
        %3142 = vmatprep.subr.bf16.mxu0 0
        %3143 = vmatpush1.bf16.msra.mxu0 %v3105
        %3144 = vmatprep.subr.bf16.mxu0 0
        %3145 = vmatpush2.bf16.msra.mxu0 0
        %3146 = vmatprep.subr.bf16.mxu0 0
        %3147 = vmatpush2.bf16.msra.mxu0 0
        %3148 = vmatprep.subr.bf16.mxu0 0
        %3149 = vmatpush2.bf16.msra.mxu0 0
        %3150 = vmatprep.subr.bf16.mxu0 0
        %3151 = vmatpush2.bf16.msra.mxu0 0
        %3152 = vmatprep.subr.bf16.mxu0 0
        %3153 = vmatpush2.bf16.msra.mxu0 0
        %3154 = vmatprep.subr.bf16.mxu0 0
        %3155 = vmatpush2.bf16.msra.mxu0 0
        %3156 = vmatprep.subr.bf16.mxu0 0
        %3157 = vmatpush2.bf16.msra.mxu0 0
        %3158 = vmatprep.subr.bf16.mxu0 0
        %3159 = vmatpush2.bf16.msra.mxu0 0
        %3160 = vmatprep.mubr.bf16.mxu0 0
        %3161 = vmatmul.mubr.bf16.gmra.mxu0 %v3117
        %v3162 = vpop.f32.mrf.mxu0
        %v3163 = vadd.f32 0.0, %v3162
        %v3164 = vpop.f32.mrf.mxu0
        %v3165 = vpop.f32.mrf.mxu0
        %v3166 = vadd.f32 0.0, %v3165
        %v3167 = vpop.f32.mrf.mxu0
        %3168 = vmatprep.mubr.bf16.mxu0 0
        %3169 = vmatmul.mubr.bf16.gmra.mxu0 %v3120
        %v3170 = vpop.f32.mrf.mxu0
        %v3171 = vadd.f32 0.0, %v3170
        %v3172 = vpop.f32.mrf.mxu0
        %v3173 = vpop.f32.mrf.mxu0
        %v3174 = vadd.f32 0.0, %v3173
        %v3175 = vpop.f32.mrf.mxu0
        %3176 = vmatprep.mubr.bf16.mxu0 0
        %3177 = vmatmul.mubr.bf16.gmra.mxu0 %v3123
        %v3178 = vpop.f32.mrf.mxu0
        %v3179 = vadd.f32 0.0, %v3178
        %v3180 = vpop.f32.mrf.mxu0
        %v3181 = vpop.f32.mrf.mxu0
        %v3182 = vadd.f32 0.0, %v3181
        %v3183 = vpop.f32.mrf.mxu0
        %3184 = vmatprep.mubr.bf16.mxu0 0
        %3185 = vmatmul.mubr.bf16.gmra.mxu0 %v3126
        %v3186 = vpop.f32.mrf.mxu0
        %v3187 = vadd.f32 0.0, %v3186
        %v3188 = vpop.f32.mrf.mxu0
        %v3189 = vpop.f32.mrf.mxu0
        %v3190 = vadd.f32 0.0, %v3189
        %v3191 = vpop.f32.mrf.mxu0
        %3192 = vdwg.mxu0
        %v3193 = vadd.f32 %v3068, %v3163
        %v3194 = vadd.f32 %v3069, %v3166
        %v3195 = vadd.f32 %v3070, %v3171
        %v3196 = vadd.f32 %v3071, %v3174
        %v3197 = vadd.f32 %v3072, %v3179
        %v3198 = vadd.f32 %v3073, %v3182
        %v3199 = vadd.f32 %v3074, %v3187
        %v3200 = vadd.f32 %v3075, %v3190
        %v3201 = vld [vmem:[#allocation7 + $0xb0] sm:$0xff]
        %v3202 = vld [vmem:[#allocation7 + $0xb8] sm:$0xff]
        %v3203 = vld [vmem:[#allocation7 + $0xc0] sm:$0xff]
        %v3204 = vld [vmem:[#allocation7 + $0xc8] sm:$0xff]
        %v3205 = vld [vmem:[#allocation7 + $0xd0] sm:$0xff]
        %v3206 = vld [vmem:[#allocation7 + $0xd8] sm:$0xff]
        %v3207 = vld [vmem:[#allocation7 + $0xe0] sm:$0xff]
        %v3208 = vld [vmem:[#allocation7 + $0xe8] sm:$0xff]
        %3210 = vset.pattern.permute.xlu0 0
        %3211 = vperm.xlu0 %3210, %v3201
        %v3212 = vpop.permute.xlu0 %3211
        %3215 = vset.pattern.permute.xlu0 0
        %3216 = vperm.xlu0 %3215, %v3202
        %v3217 = vpop.permute.xlu0 %3216
        %3220 = vset.pattern.permute.xlu0 0
        %3221 = vperm.xlu0 %3220, %v3203
        %v3222 = vpop.permute.xlu0 %3221
        %3225 = vset.pattern.permute.xlu0 0
        %3226 = vperm.xlu0 %3225, %v3204
        %v3227 = vpop.permute.xlu0 %3226
        %3230 = vset.pattern.permute.xlu0 0
        %3231 = vperm.xlu0 %3230, %v3205
        %v3232 = vpop.permute.xlu0 %3231
        %3235 = vset.pattern.permute.xlu0 0
        %3236 = vperm.xlu0 %3235, %v3206
        %v3237 = vpop.permute.xlu0 %3236
        %3240 = vset.pattern.permute.xlu0 0
        %3241 = vperm.xlu0 %3240, %v3207
        %v3242 = vpop.permute.xlu0 %3241
        %3245 = vset.pattern.permute.xlu0 0
        %3246 = vperm.xlu0 %3245, %v3208
        %v3247 = vpop.permute.xlu0 %3246
        %v3249 = vadd.f32 %v3193, %v3212
        %v3250 = vadd.f32 %v3194, %v3217
        %v3251 = vadd.f32 %v3195, %v3222
        %v3252 = vadd.f32 %v3196, %v3227
        %v3253 = vadd.f32 %v3197, %v3232
        %v3254 = vadd.f32 %v3198, %v3237
        %v3255 = vadd.f32 %v3199, %v3242
        %v3256 = vadd.f32 %v3200, %v3247
        %vm3257 = vcmp.ge.f32.partialorder %v3249, 0.0
        %vm3258 = vcmp.ge.f32.partialorder %v3250, 0.0
        %vm3259 = vcmp.ge.f32.partialorder %v3251, 0.0
        %vm3260 = vcmp.ge.f32.partialorder %v3252, 0.0
        %vm3261 = vcmp.ge.f32.partialorder %v3253, 0.0
        %vm3262 = vcmp.ge.f32.partialorder %v3254, 0.0
        %vm3263 = vcmp.ge.f32.partialorder %v3255, 0.0
        %vm3264 = vcmp.ge.f32.partialorder %v3256, 0.0
        %v3265 = vmul.f32 %v3249, 0.01
        %v3266 = vmul.f32 %v3250, 0.01
        %v3267 = vmul.f32 %v3251, 0.01
        %v3268 = vmul.f32 %v3252, 0.01
        %v3269 = vmul.f32 %v3253, 0.01
        %v3270 = vmul.f32 %v3254, 0.01
        %v3271 = vmul.f32 %v3255, 0.01
        %v3272 = vmul.f32 %v3256, 0.01
        %v3273 = vsel %vm3257, %v3249, %v3265
        %v3274 = vsel %vm3258, %v3250, %v3266
        %v3275 = vsel %vm3259, %v3251, %v3267
        %v3276 = vsel %vm3260, %v3252, %v3268
        %v3277 = vsel %vm3261, %v3253, %v3269
        %v3278 = vsel %vm3262, %v3254, %v3270
        %v3279 = vsel %vm3263, %v3255, %v3271
        %v3280 = vsel %vm3264, %v3256, %v3272
        %3289 = vrot.lane.b32.xlu0 %v3273, 127
        %v3290 = vpop.permute.xlu0 %3289
        %3291 = vrot.lane.b32.xlu0 %v3274, 127
        %v3292 = vpop.permute.xlu0 %3291
        %3293 = vrot.lane.b32.xlu0 %v3275, 127
        %v3294 = vpop.permute.xlu0 %3293
        %3295 = vrot.lane.b32.xlu0 %v3276, 127
        %v3296 = vpop.permute.xlu0 %3295
        %3297 = vrot.lane.b32.xlu0 %v3277, 127
        %v3298 = vpop.permute.xlu0 %3297
        %3299 = vrot.lane.b32.xlu0 %v3278, 127
        %v3300 = vpop.permute.xlu0 %3299
        %3301 = vrot.lane.b32.xlu0 %v3279, 127
        %v3302 = vpop.permute.xlu0 %3301
        %3303 = vrot.lane.b32.xlu0 %v3280, 127
        %v3304 = vpop.permute.xlu0 %3303
        %v3313 = vmax.f32 %v3273, %v3290
        %v3314 = vmax.f32 %v3274, %v3292
        %v3315 = vmax.f32 %v3275, %v3294
        %v3316 = vmax.f32 %v3276, %v3296
        %v3317 = vmax.f32 %v3277, %v3298
        %v3318 = vmax.f32 %v3278, %v3300
        %v3319 = vmax.f32 %v3279, %v3302
        %v3320 = vmax.f32 %v3280, %v3304
        %v3321 = vpack.c.bf16 %v3314, %v3313
        %v3322 = vpack.c.bf16 %v3316, %v3315
        %v3323 = vpack.c.bf16 %v3318, %v3317
        %v3324 = vpack.c.bf16 %v3320, %v3319
        %v3325 = vld [vmem:[#allocation3 + $0x260] sm:$0x3]
        %vm3326 = vcmask 31744
        %v3328 = vsel %vm3326, %v3321, 0
        %v3331 = vsel %vm3326, %v3322, 0
        %v3334 = vsel %vm3326, %v3323, 0
        %v3337 = vsel %vm3326, %v3324, 0
        %vm3339 = vcmask 1041408
        %v3341 = vsel %vm3339, %v3325, 0
        %3343 = vmatprep.subr.bf16.mxu0 0
        %3344 = vmatpush1.bf16.msra.mxu0 0
        %3345 = vmatprep.subr.bf16.mxu0 0
        %3346 = vmatpush1.bf16.msra.mxu0 0
        %3347 = vmatprep.subr.bf16.mxu0 0
        %3348 = vmatpush1.bf16.msra.mxu0 0
        %3349 = vmatprep.subr.bf16.mxu0 0
        %3350 = vmatpush1.bf16.msra.mxu0 0
        %3351 = vmatprep.subr.bf16.mxu0 0
        %3352 = vmatpush1.bf16.msra.mxu0 0
        %3353 = vmatprep.subr.bf16.mxu0 0
        %3354 = vmatpush1.bf16.msra.mxu0 0
        %3355 = vmatprep.subr.bf16.mxu0 0
        %3356 = vmatpush1.bf16.msra.mxu0 0
        %3357 = vmatprep.subr.bf16.mxu0 0
        %3358 = vmatpush1.bf16.msra.mxu0 %v3341
        %3359 = vmatprep.subr.bf16.mxu0 0
        %3360 = vmatpush2.bf16.msra.mxu0 0
        %3361 = vmatprep.subr.bf16.mxu0 0
        %3362 = vmatpush2.bf16.msra.mxu0 0
        %3363 = vmatprep.subr.bf16.mxu0 0
        %3364 = vmatpush2.bf16.msra.mxu0 0
        %3365 = vmatprep.subr.bf16.mxu0 0
        %3366 = vmatpush2.bf16.msra.mxu0 0
        %3367 = vmatprep.subr.bf16.mxu0 0
        %3368 = vmatpush2.bf16.msra.mxu0 0
        %3369 = vmatprep.subr.bf16.mxu0 0
        %3370 = vmatpush2.bf16.msra.mxu0 0
        %3371 = vmatprep.subr.bf16.mxu0 0
        %3372 = vmatpush2.bf16.msra.mxu0 0
        %3373 = vmatprep.subr.bf16.mxu0 0
        %3374 = vmatpush2.bf16.msra.mxu0 0
        %3375 = vmatprep.mubr.bf16.mxu0 0
        %3376 = vmatmul.mubr.bf16.gmra.mxu0 %v3328
        %v3377 = vpop.f32.mrf.mxu0
        %v3378 = vadd.f32 0.0, %v3377
        %v3379 = vpop.f32.mrf.mxu0
        %v3380 = vpop.f32.mrf.mxu0
        %v3381 = vadd.f32 0.0, %v3380
        %v3382 = vpop.f32.mrf.mxu0
        %3383 = vmatprep.mubr.bf16.mxu0 0
        %3384 = vmatmul.mubr.bf16.gmra.mxu0 %v3331
        %v3385 = vpop.f32.mrf.mxu0
        %v3386 = vadd.f32 0.0, %v3385
        %v3387 = vpop.f32.mrf.mxu0
        %v3388 = vpop.f32.mrf.mxu0
        %v3389 = vadd.f32 0.0, %v3388
        %v3390 = vpop.f32.mrf.mxu0
        %3391 = vmatprep.mubr.bf16.mxu0 0
        %3392 = vmatmul.mubr.bf16.gmra.mxu0 %v3334
        %v3393 = vpop.f32.mrf.mxu0
        %v3394 = vadd.f32 0.0, %v3393
        %v3395 = vpop.f32.mrf.mxu0
        %v3396 = vpop.f32.mrf.mxu0
        %v3397 = vadd.f32 0.0, %v3396
        %v3398 = vpop.f32.mrf.mxu0
        %3399 = vmatprep.mubr.bf16.mxu0 0
        %3400 = vmatmul.mubr.bf16.gmra.mxu0 %v3337
        %v3401 = vpop.f32.mrf.mxu0
        %v3402 = vadd.f32 0.0, %v3401
        %v3403 = vpop.f32.mrf.mxu0
        %v3404 = vpop.f32.mrf.mxu0
        %v3405 = vadd.f32 0.0, %v3404
        %v3406 = vpop.f32.mrf.mxu0
        %3407 = vdwg.mxu0
        %v3408 = vld [vmem:[#allocation3 + $0x268] sm:$0xf]
        %v3409 = vld [vmem:[#allocation3 + $0x26c] sm:$0xf]
        %v3410 = vld [vmem:[#allocation3 + $0x270] sm:$0xf]
        %v3411 = vld [vmem:[#allocation3 + $0x274] sm:$0xf]
        %v3412 = vpack.c.bf16 %v3381, %v3378
        %v3413 = vpack.c.bf16 %v3389, %v3386
        %v3414 = vpack.c.bf16 %v3397, %v3394
        %v3415 = vpack.c.bf16 %v3405, %v3402
        %v3416 = vld [vmem:[#allocation3 + $0x278] sm:$0xf]
        %v3417 = vld [vmem:[#allocation3 + $0x27c] sm:$0xf]
        %v3418 = vld [vmem:[#allocation3 + $0x280] sm:$0xf]
        %v3419 = vld [vmem:[#allocation3 + $0x284] sm:$0xf]
        %v3424 = vunpack.c.l.b16 %v3416
        %v3425 = vunpack.c.l.b16 %v3417
        %v3426 = vunpack.c.l.b16 %v3418
        %v3427 = vunpack.c.l.b16 %v3419
        %v3428 = vpack.c.b16 %v3425, %v3424
        %v3429 = vpack.c.b16 %v3427, %v3426
        %3434 = vrot.lane.b32.xlu0 %v3412, 127
        %v3435 = vpop.permute.xlu0 %3434
        %3436 = vrot.lane.b32.xlu0 %v3413, 127
        %v3437 = vpop.permute.xlu0 %3436
        %3438 = vrot.lane.b32.xlu0 %v3414, 127
        %v3439 = vpop.permute.xlu0 %3438
        %3440 = vrot.lane.b32.xlu0 %v3415, 127
        %v3441 = vpop.permute.xlu0 %3440
        %v3447 = vsel %vm1765, %v3428, 0
        %v3450 = vsel %vm1765, %v3429, 0
        %3452 = vmatprep.subr.bf16.mxu0 0
        %3453 = vmatpush1.bf16.msra.mxu0 0
        %3454 = vmatprep.subr.bf16.mxu0 0
        %3455 = vmatpush1.bf16.msra.mxu0 0
        %3456 = vmatprep.subr.bf16.mxu0 0
        %3457 = vmatpush1.bf16.msra.mxu0 0
        %3458 = vmatprep.subr.bf16.mxu0 0
        %3459 = vmatpush1.bf16.msra.mxu0 0
        %3460 = vmatprep.subr.bf16.mxu0 0
        %3461 = vmatpush1.bf16.msra.mxu0 %v3441
        %3462 = vmatprep.subr.bf16.mxu0 0
        %3463 = vmatpush1.bf16.msra.mxu0 %v3439
        %3464 = vmatprep.subr.bf16.mxu0 0
        %3465 = vmatpush1.bf16.msra.mxu0 %v3437
        %3466 = vmatprep.subr.bf16.mxu0 0
        %3467 = vmatpush1.bf16.msra.mxu0 %v3435
        %3468 = vmatprep.subr.bf16.mxu0 0
        %3469 = vmatpush2.bf16.msra.mxu0 0
        %3470 = vmatprep.subr.bf16.mxu0 0
        %3471 = vmatpush2.bf16.msra.mxu0 0
        %3472 = vmatprep.subr.bf16.mxu0 0
        %3473 = vmatpush2.bf16.msra.mxu0 0
        %3474 = vmatprep.subr.bf16.mxu0 0
        %3475 = vmatpush2.bf16.msra.mxu0 0
        %3476 = vmatprep.subr.bf16.mxu0 0
        %3477 = vmatpush2.bf16.msra.mxu0 0
        %3478 = vmatprep.subr.bf16.mxu0 0
        %3479 = vmatpush2.bf16.msra.mxu0 0
        %3480 = vmatprep.subr.bf16.mxu0 0
        %3481 = vmatpush2.bf16.msra.mxu0 0
        %3482 = vmatprep.subr.bf16.mxu0 0
        %3483 = vmatpush2.bf16.msra.mxu0 0
        %3484 = vmatprep.mubr.bf16.mxu0 0
        %3485 = vmatmul.mubr.bf16.gmra.mxu0 %v3447
        %v3486 = vpop.f32.mrf.mxu0
        %v3487 = vadd.f32 0.0, %v3486
        %v3488 = vpop.f32.mrf.mxu0
        %v3489 = vpop.f32.mrf.mxu0
        %v3490 = vadd.f32 0.0, %v3489
        %v3491 = vpop.f32.mrf.mxu0
        %3492 = vmatprep.mubr.bf16.mxu0 0
        %3493 = vmatmul.mubr.bf16.gmra.mxu0 %v3450
        %v3494 = vpop.f32.mrf.mxu0
        %v3495 = vadd.f32 0.0, %v3494
        %v3496 = vpop.f32.mrf.mxu0
        %v3497 = vpop.f32.mrf.mxu0
        %v3498 = vadd.f32 0.0, %v3497
        %v3499 = vpop.f32.mrf.mxu0
        %3500 = vdwg.mxu0
        %v3505 = vunpack.c.l.b16 %v3408
        %v3506 = vunpack.c.l.b16 %v3409
        %v3507 = vunpack.c.l.b16 %v3410
        %v3508 = vunpack.c.l.b16 %v3411
        %v3509 = vpack.c.b16 %v3506, %v3505
        %v3510 = vpack.c.b16 %v3508, %v3507
        %v3512 = vsel %vm1765, %v3509, 0
        %v3515 = vsel %vm1765, %v3510, 0
        %3517 = vmatprep.subr.bf16.mxu0 0
        %3518 = vmatpush1.bf16.msra.mxu0 0
        %3519 = vmatprep.subr.bf16.mxu0 0
        %3520 = vmatpush1.bf16.msra.mxu0 0
        %3521 = vmatprep.subr.bf16.mxu0 0
        %3522 = vmatpush1.bf16.msra.mxu0 0
        %3523 = vmatprep.subr.bf16.mxu0 0
        %3524 = vmatpush1.bf16.msra.mxu0 0
        %3525 = vmatprep.subr.bf16.mxu0 0
        %3526 = vmatpush1.bf16.msra.mxu0 %v3415
        %3527 = vmatprep.subr.bf16.mxu0 0
        %3528 = vmatpush1.bf16.msra.mxu0 %v3414
        %3529 = vmatprep.subr.bf16.mxu0 0
        %3530 = vmatpush1.bf16.msra.mxu0 %v3413
        %3531 = vmatprep.subr.bf16.mxu0 0
        %3532 = vmatpush1.bf16.msra.mxu0 %v3412
        %3533 = vmatprep.subr.bf16.mxu0 0
        %3534 = vmatpush2.bf16.msra.mxu0 0
        %3535 = vmatprep.subr.bf16.mxu0 0
        %3536 = vmatpush2.bf16.msra.mxu0 0
        %3537 = vmatprep.subr.bf16.mxu0 0
        %3538 = vmatpush2.bf16.msra.mxu0 0
        %3539 = vmatprep.subr.bf16.mxu0 0
        %3540 = vmatpush2.bf16.msra.mxu0 0
        %3541 = vmatprep.subr.bf16.mxu0 0
        %3542 = vmatpush2.bf16.msra.mxu0 0
        %3543 = vmatprep.subr.bf16.mxu0 0
        %3544 = vmatpush2.bf16.msra.mxu0 0
        %3545 = vmatprep.subr.bf16.mxu0 0
        %3546 = vmatpush2.bf16.msra.mxu0 0
        %3547 = vmatprep.subr.bf16.mxu0 0
        %3548 = vmatpush2.bf16.msra.mxu0 0
        %3549 = vmatprep.mubr.bf16.mxu0 0
        %3550 = vmatmul.mubr.bf16.gmra.mxu0 %v3512
        %v3551 = vpop.f32.mrf.mxu0
        %v3552 = vadd.f32 %v3487, %v3551
        %v3553 = vpop.f32.mrf.mxu0
        %v3554 = vpop.f32.mrf.mxu0
        %v3555 = vadd.f32 %v3490, %v3554
        %v3556 = vpop.f32.mrf.mxu0
        %3557 = vmatprep.mubr.bf16.mxu0 0
        %3558 = vmatmul.mubr.bf16.gmra.mxu0 %v3515
        %v3559 = vpop.f32.mrf.mxu0
        %v3560 = vadd.f32 %v3495, %v3559
        %v3561 = vpop.f32.mrf.mxu0
        %v3562 = vpop.f32.mrf.mxu0
        %v3563 = vadd.f32 %v3498, %v3562
        %v3564 = vpop.f32.mrf.mxu0
        %3565 = vdwg.mxu0
        %v3566 = vld [vmem:[#allocation7 + $0xf0] sm:$0xff]
        %v3567 = vld [vmem:[#allocation7 + $0xf8] sm:$0xff]
        %v3568 = vld [vmem:[#allocation7 + $0x100] sm:$0xff]
        %v3569 = vld [vmem:[#allocation7 + $0x108] sm:$0xff]
        %v3570 = vadd.f32 %v3552, %v3566
        %v3571 = vadd.f32 %v3555, %v3567
        %v3572 = vadd.f32 %v3560, %v3568
        %v3573 = vadd.f32 %v3563, %v3569
        %v3574 = vld [vmem:[#allocation3 + $0x288] sm:$0xf]
        %v3575 = vld [vmem:[#allocation3 + $0x28c] sm:$0xf]
        %v3576 = vld [vmem:[#allocation3 + $0x290] sm:$0xf]
        %v3577 = vld [vmem:[#allocation3 + $0x294] sm:$0xf]
        %v3578 = vunpack.c.l.bf16 %v3574
        %v3579 = vunpack.c.l.bf16 %v3575
        %v3580 = vunpack.c.l.bf16 %v3576
        %v3581 = vunpack.c.l.bf16 %v3577
        %3583 = vset.pattern.permute.xlu0 0
        %3584 = vperm.xlu0 %3583, %v3570
        %v3585 = vpop.permute.xlu0 %3584
        %3588 = vset.pattern.permute.xlu0 0
        %3589 = vperm.xlu0 %3588, %v3571
        %v3590 = vpop.permute.xlu0 %3589
        %3593 = vset.pattern.permute.xlu0 0
        %3594 = vperm.xlu0 %3593, %v3572
        %v3595 = vpop.permute.xlu0 %3594
        %3598 = vset.pattern.permute.xlu0 0
        %3599 = vperm.xlu0 %3598, %v3573
        %v3600 = vpop.permute.xlu0 %3599
        %v3602 = vmul.f32 %v3578, %v3585
        %v3603 = vmul.f32 %v3579, %v3590
        %v3604 = vmul.f32 %v3580, %v3595
        %v3605 = vmul.f32 %v3581, %v3600
        %v3606 = vsel %vm1129, %v3602, 0.0
        %v3607 = vsel %vm1129, %v3603, 0.0
        %v3608 = vadd.f32 %v3606, %v3607
        %v3609 = vsel %vm1129, %v3604, 0.0
        %v3610 = vadd.f32 %v3608, %v3609
        %v3611 = vsel %vm1129, %v3605, 0.0
        %v3612 = vadd.f32 %v3610, %v3611
        %v3613 = vrot.slane %v3612, 4
        %v3614 = vadd.f32 %v3612, %v3613
        %v3615 = vrot.slane %v3614, 2
        %v3616 = vadd.f32 %v3614, %v3615
        %v3617 = vrot.slane %v3616, 1
        %v3618 = vadd.f32 %v3616, %v3617
        %v3619 = vmul.f32 %v3618, 0.5
        %v3620 = vmul.f32 %v3619, 1.442695
        %v3621 = vpow.pop %v3620
        %v3624 = vunpack.c.l.s4 1966171168
        %v3625 = vunpack.c.0.s8 %v3624
        %v3626 = vlaneseq
        %v3627 = vshrl.u32 %v3626, 7
        %v3628 = vsub.s32 %v3625, %v3627
        %v3629 = vrot.slane %v3621, %v3628
        %v3631 = vunpack.c.l.s4 1966171168
        %v3632 = vunpack.c.0.s8 %v3631
        %v3633 = vlaneseq
        %v3634 = vshrl.u32 %v3633, 7
        %v3635 = vsub.s32 %v3632, %v3634
        %v3636 = vrot.slane %v3629, %v3635
        %3637 = vrot.lane.b32.xlu0 %v3636, 112
        %v3638 = vpop.permute.xlu0 %3637
        %v3640 = vmul.f32 %v316, %v3638
        %v3641 = vadd.f32 %v3618, %v3640
        %v3642 = vpack.c.bf16 %v3641, %v3641
        %v3643 = vld [vmem:[#allocation5] sm:$0xff]
        %v3644 = vld [vmem:[#allocation5 + $0x8] sm:$0xf]
        %v3645 = vld [vmem:[#allocation5 + $0xc] sm:$0xff]
        %v3646 = vld [vmem:[#allocation5 + $0x14] sm:$0xf]
        %v3651 = vunpack.c.l.b16 %v3643
        %v3652 = vunpack.c.h.b16 %v3643
        %v3653 = vunpack.c.l.b16 %v3644
        %v3654 = vunpack.c.l.b16 %v3645
        %v3655 = vunpack.c.h.b16 %v3645
        %v3656 = vunpack.c.l.b16 %v3646
        %v3657 = vpack.c.b16 %v3654, %v3651
        %v3658 = vpack.c.b16 %v3655, %v3652
        %v3659 = vpack.c.b16 %v3656, %v3653
        %v3664 = vsel %vm700, %v3642, 0
        %3666 = vmatprep.subr.bf16.mxu0 0
        %3667 = vmatpush1.bf16.msra.mxu0 0
        %3668 = vmatprep.subr.bf16.mxu0 0
        %3669 = vmatpush1.bf16.msra.mxu0 0
        %3670 = vmatprep.subr.bf16.mxu0 0
        %3671 = vmatpush1.bf16.msra.mxu0 0
        %3672 = vmatprep.subr.bf16.mxu0 0
        %3673 = vmatpush1.bf16.msra.mxu0 0
        %3674 = vmatprep.subr.bf16.mxu0 0
        %3675 = vmatpush1.bf16.msra.mxu0 0
        %3676 = vmatprep.subr.bf16.mxu0 0
        %3677 = vmatpush1.bf16.msra.mxu0 0
        %3678 = vmatprep.subr.bf16.mxu0 0
        %3679 = vmatpush1.bf16.msra.mxu0 0
        %3680 = vmatprep.subr.bf16.mxu0 %v3658
        %3681 = vmatpush1.bf16.msra.mxu0 %v3657
        %3682 = vmatprep.subr.bf16.mxu0 0
        %3683 = vmatpush2.bf16.msra.mxu0 0
        %3684 = vmatprep.subr.bf16.mxu0 0
        %3685 = vmatpush2.bf16.msra.mxu0 0
        %3686 = vmatprep.subr.bf16.mxu0 0
        %3687 = vmatpush2.bf16.msra.mxu0 0
        %3688 = vmatprep.subr.bf16.mxu0 0
        %3689 = vmatpush2.bf16.msra.mxu0 0
        %3690 = vmatprep.subr.bf16.mxu0 0
        %3691 = vmatpush2.bf16.msra.mxu0 0
        %3692 = vmatprep.subr.bf16.mxu0 0
        %3693 = vmatpush2.bf16.msra.mxu0 0
        %3694 = vmatprep.subr.bf16.mxu0 0
        %3695 = vmatpush2.bf16.msra.mxu0 0
        %3696 = vmatprep.subr.bf16.mxu0 0
        %3697 = vmatpush2.bf16.msra.mxu0 0
        %3698 = vmatprep.mubr.bf16.mxu0 0
        %3699 = vmatmul.mubr.bf16.gmra.mxu0 %v3664
        %v3700 = vpop.f32.mrf.mxu0
        %v3701 = vadd.f32 0.0, %v3700
        %v3702 = vpop.f32.mrf.mxu0
        %v3703 = vadd.f32 0.0, %v3702
        %v3704 = vpop.f32.mrf.mxu0
        %v3705 = vpop.f32.mrf.mxu0
        %3706 = vdwg.mxu0
        %3707 = vmatprep.subr.bf16.mxu0 0
        %3708 = vmatpush1.bf16.msra.mxu0 0
        %3709 = vmatprep.subr.bf16.mxu0 0
        %3710 = vmatpush1.bf16.msra.mxu0 0
        %3711 = vmatprep.subr.bf16.mxu0 0
        %3712 = vmatpush1.bf16.msra.mxu0 0
        %3713 = vmatprep.subr.bf16.mxu0 0
        %3714 = vmatpush1.bf16.msra.mxu0 0
        %3715 = vmatprep.subr.bf16.mxu0 0
        %3716 = vmatpush1.bf16.msra.mxu0 0
        %3717 = vmatprep.subr.bf16.mxu0 0
        %3718 = vmatpush1.bf16.msra.mxu0 0
        %3719 = vmatprep.subr.bf16.mxu0 0
        %3720 = vmatpush1.bf16.msra.mxu0 0
        %3721 = vmatprep.subr.bf16.mxu0 0
        %3722 = vmatpush1.bf16.msra.mxu0 %v3659
        %3723 = vmatprep.subr.bf16.mxu0 0
        %3724 = vmatpush2.bf16.msra.mxu0 0
        %3725 = vmatprep.subr.bf16.mxu0 0
        %3726 = vmatpush2.bf16.msra.mxu0 0
        %3727 = vmatprep.subr.bf16.mxu0 0
        %3728 = vmatpush2.bf16.msra.mxu0 0
        %3729 = vmatprep.subr.bf16.mxu0 0
        %3730 = vmatpush2.bf16.msra.mxu0 0
        %3731 = vmatprep.subr.bf16.mxu0 0
        %3732 = vmatpush2.bf16.msra.mxu0 0
        %3733 = vmatprep.subr.bf16.mxu0 0
        %3734 = vmatpush2.bf16.msra.mxu0 0
        %3735 = vmatprep.subr.bf16.mxu0 0
        %3736 = vmatpush2.bf16.msra.mxu0 0
        %3737 = vmatprep.subr.bf16.mxu0 0
        %3738 = vmatpush2.bf16.msra.mxu0 0
        %3739 = vmatprep.mubr.bf16.mxu0 0
        %3740 = vmatmul.mubr.bf16.gmra.mxu0 %v3664
        %v3741 = vpop.f32.mrf.mxu0
        %v3742 = vadd.f32 0.0, %v3741
        %v3743 = vpop.f32.mrf.mxu0
        %v3744 = vpop.f32.mrf.mxu0
        %v3745 = vpop.f32.mrf.mxu0
        %3746 = vdwg.mxu0
        %v3747 = vld [vmem:[#allocation5 + $0x18] sm:$0xff]
        %v3748 = vld [vmem:[#allocation5 + $0x20] sm:$0xf]
        %v3749 = vld [vmem:[#allocation5 + $0x24] sm:$0xff]
        %v3750 = vld [vmem:[#allocation5 + $0x2c] sm:$0xf]
        %v3751 = vunpack.c.l.bf16 %v3747
        %v3752 = vunpack.c.h.bf16 %v3747
        %v3753 = vunpack.c.l.bf16 %v3748
        %v3754 = vunpack.c.l.bf16 %v3749
        %v3755 = vunpack.c.h.bf16 %v3749
        %v3756 = vunpack.c.l.bf16 %v3750
        %v3757 = vlaneseq
        %v3758 = vshrl.u32 %v3757, 7
        %v3759 = vsub.s32 0, %v3758
        %v3760 = vrot.slane %v3701, %v3759
        %v3761 = vlaneseq
        %v3762 = vshrl.u32 %v3761, 7
        %v3763 = vsub.s32 0, %v3762
        %v3764 = vrot.slane %v3703, %v3763
        %v3765 = vlaneseq
        %v3766 = vshrl.u32 %v3765, 7
        %v3767 = vsub.s32 0, %v3766
        %v3768 = vrot.slane %v3742, %v3767
        %v3769 = vmul.f32 %v3751, %v3760
        %v3770 = vmul.f32 %v3752, %v3764
        %v3771 = vmul.f32 %v3753, %v3768
        %v3772 = vmul.f32 %v3754, %v3760
        %v3773 = vmul.f32 %v3755, %v3764
        %v3774 = vmul.f32 %v3756, %v3768
        %v3775 = vpack.c.bf16 %v3772, %v3769
        %v3776 = vpack.c.bf16 %v3773, %v3770
        %v3777 = vpack.c.bf16 %v3774, %v3771
        %v3778 = vld [vmem:[#allocation3 + $0x298] sm:$0xf]
        %v3779 = vld [vmem:[#allocation3 + $0x29c] sm:$0xf]
        %v3780 = vld [vmem:[#allocation3 + $0x2a0] sm:$0xf]
        %v3781 = vld [vmem:[#allocation3 + $0x2a4] sm:$0xf]
        %v3782 = vld [vmem:[#allocation3 + $0x2a8] sm:$0xf]
        %v3783 = vld [vmem:[#allocation3 + $0x2ac] sm:$0xf]
        %v3784 = vld [vmem:[#allocation3 + $0x2b0] sm:$0xf]
        %v3785 = vld [vmem:[#allocation3 + $0x2b4] sm:$0xf]
        %v3786 = vld [vmem:[#allocation3 + $0x2b8] sm:$0xf]
        %v3787 = vld [vmem:[#allocation3 + $0x2bc] sm:$0xf]
        %v3788 = vld [vmem:[#allocation3 + $0x2c0] sm:$0xf]
        %v3789 = vld [vmem:[#allocation3 + $0x2c4] sm:$0xf]
        %v3790 = vld [vmem:[#allocation3 + $0x2c8] sm:$0xf]
        %v3791 = vld [vmem:[#allocation3 + $0x2cc] sm:$0xf]
        %v3792 = vld [vmem:[#allocation3 + $0x2d0] sm:$0xf]
        %v3793 = vld [vmem:[#allocation3 + $0x2d4] sm:$0xf]
        %v3794 = vld [vmem:[#allocation3 + $0x2d8] sm:$0xf]
        %v3795 = vld [vmem:[#allocation3 + $0x2dc] sm:$0xf]
        %v3796 = vld [vmem:[#allocation3 + $0x2e0] sm:$0xf]
        %v3797 = vld [vmem:[#allocation3 + $0x2e4] sm:$0xf]
        %v3798 = vld [vmem:[#allocation3 + $0x2e8] sm:$0xf]
        %v3799 = vld [vmem:[#allocation3 + $0x2ec] sm:$0xf]
        %v3800 = vld [vmem:[#allocation3 + $0x2f0] sm:$0xf]
        %v3801 = vld [vmem:[#allocation3 + $0x2f4] sm:$0xf]
        %v3802 = vld [vmem:[#allocation3 + $0x2f8] sm:$0xf]
        %v3803 = vld [vmem:[#allocation3 + $0x2fc] sm:$0xf]
        %v3804 = vld [vmem:[#allocation3 + $0x300] sm:$0xf]
        %v3805 = vld [vmem:[#allocation3 + $0x304] sm:$0xf]
        %v3806 = vld [vmem:[#allocation3 + $0x308] sm:$0xf]
        %v3807 = vld [vmem:[#allocation3 + $0x30c] sm:$0xf]
        %v3808 = vld [vmem:[#allocation3 + $0x310] sm:$0xf]
        %v3809 = vld [vmem:[#allocation3 + $0x314] sm:$0xf]
        %v3810 = vld [vmem:[#allocation3 + $0x318] sm:$0xf]
        %v3811 = vld [vmem:[#allocation3 + $0x31c] sm:$0xf]
        %v3812 = vld [vmem:[#allocation3 + $0x320] sm:$0xf]
        %v3813 = vld [vmem:[#allocation3 + $0x324] sm:$0xf]
        %v3814 = vld [vmem:[#allocation3 + $0x328] sm:$0xf]
        %v3815 = vld [vmem:[#allocation3 + $0x32c] sm:$0xf]
        %v3816 = vld [vmem:[#allocation3 + $0x330] sm:$0xf]
        %v3817 = vld [vmem:[#allocation3 + $0x334] sm:$0xf]
        %v3818 = vld [vmem:[#allocation3 + $0x338] sm:$0xf]
        %v3819 = vld [vmem:[#allocation3 + $0x33c] sm:$0xf]
        %v3820 = vld [vmem:[#allocation3 + $0x340] sm:$0xf]
        %v3821 = vld [vmem:[#allocation3 + $0x344] sm:$0xf]
        %v3822 = vld [vmem:[#allocation3 + $0x348] sm:$0xf]
        %v3823 = vld [vmem:[#allocation3 + $0x34c] sm:$0xf]
        %v3824 = vld [vmem:[#allocation3 + $0x350] sm:$0xf]
        %v3825 = vld [vmem:[#allocation3 + $0x354] sm:$0xf]
        %v3826 = vld [vmem:[#allocation7 + $0x110] sm:$0xff]
        %v3827 = vld [vmem:[#allocation7 + $0x118] sm:$0xff]
        %v3876 = vunpack.c.l.b16 %v3778
        %v3877 = vunpack.c.l.b16 %v3779
        %v3878 = vunpack.c.l.b16 %v3780
        %v3879 = vunpack.c.l.b16 %v3781
        %v3880 = vunpack.c.l.b16 %v3782
        %v3881 = vunpack.c.l.b16 %v3783
        %v3882 = vunpack.c.l.b16 %v3784
        %v3883 = vunpack.c.l.b16 %v3785
        %v3884 = vunpack.c.l.b16 %v3786
        %v3885 = vunpack.c.l.b16 %v3787
        %v3886 = vunpack.c.l.b16 %v3788
        %v3887 = vunpack.c.l.b16 %v3789
        %v3888 = vunpack.c.l.b16 %v3790
        %v3889 = vunpack.c.l.b16 %v3791
        %v3890 = vunpack.c.l.b16 %v3792
        %v3891 = vunpack.c.l.b16 %v3793
        %v3892 = vunpack.c.l.b16 %v3794
        %v3893 = vunpack.c.l.b16 %v3795
        %v3894 = vunpack.c.l.b16 %v3796
        %v3895 = vunpack.c.l.b16 %v3797
        %v3896 = vunpack.c.l.b16 %v3798
        %v3897 = vunpack.c.l.b16 %v3799
        %v3898 = vunpack.c.l.b16 %v3800
        %v3899 = vunpack.c.l.b16 %v3801
        %v3900 = vunpack.c.l.b16 %v3802
        %v3901 = vunpack.c.l.b16 %v3803
        %v3902 = vunpack.c.l.b16 %v3804
        %v3903 = vunpack.c.l.b16 %v3805
        %v3904 = vunpack.c.l.b16 %v3806
        %v3905 = vunpack.c.l.b16 %v3807
        %v3906 = vunpack.c.l.b16 %v3808
        %v3907 = vunpack.c.l.b16 %v3809
        %v3908 = vunpack.c.l.b16 %v3810
        %v3909 = vunpack.c.l.b16 %v3811
        %v3910 = vunpack.c.l.b16 %v3812
        %v3911 = vunpack.c.l.b16 %v3813
        %v3912 = vunpack.c.l.b16 %v3814
        %v3913 = vunpack.c.l.b16 %v3815
        %v3914 = vunpack.c.l.b16 %v3816
        %v3915 = vunpack.c.l.b16 %v3817
        %v3916 = vunpack.c.l.b16 %v3818
        %v3917 = vunpack.c.l.b16 %v3819
        %v3918 = vunpack.c.l.b16 %v3820
        %v3919 = vunpack.c.l.b16 %v3821
        %v3920 = vunpack.c.l.b16 %v3822
        %v3921 = vunpack.c.l.b16 %v3823
        %v3922 = vunpack.c.l.b16 %v3824
        %v3923 = vunpack.c.l.b16 %v3825
        %v3924 = vpack.c.b16 %v3877, %v3876
        %v3925 = vpack.c.b16 %v3879, %v3878
        %v3926 = vpack.c.b16 %v3881, %v3880
        %v3927 = vpack.c.b16 %v3883, %v3882
        %v3928 = vpack.c.b16 %v3885, %v3884
        %v3929 = vpack.c.b16 %v3887, %v3886
        %v3930 = vpack.c.b16 %v3889, %v3888
        %v3931 = vpack.c.b16 %v3891, %v3890
        %v3932 = vpack.c.b16 %v3893, %v3892
        %v3933 = vpack.c.b16 %v3895, %v3894
        %v3934 = vpack.c.b16 %v3897, %v3896
        %v3935 = vpack.c.b16 %v3899, %v3898
        %v3936 = vpack.c.b16 %v3901, %v3900
        %v3937 = vpack.c.b16 %v3903, %v3902
        %v3938 = vpack.c.b16 %v3905, %v3904
        %v3939 = vpack.c.b16 %v3907, %v3906
        %v3940 = vpack.c.b16 %v3909, %v3908
        %v3941 = vpack.c.b16 %v3911, %v3910
        %v3942 = vpack.c.b16 %v3913, %v3912
        %v3943 = vpack.c.b16 %v3915, %v3914
        %v3944 = vpack.c.b16 %v3917, %v3916
        %v3945 = vpack.c.b16 %v3919, %v3918
        %v3946 = vpack.c.b16 %v3921, %v3920
        %v3947 = vpack.c.b16 %v3923, %v3922
        %3972 = vmatprep.subr.bf16.mxu0 0
        %3973 = vmatpush1.bf16.msra.mxu0 %v3931
        %3974 = vmatprep.subr.bf16.mxu0 0
        %3975 = vmatpush1.bf16.msra.mxu0 %v3930
        %3976 = vmatprep.subr.bf16.mxu0 0
        %3977 = vmatpush1.bf16.msra.mxu0 %v3929
        %3978 = vmatprep.subr.bf16.mxu0 0
        %3979 = vmatpush1.bf16.msra.mxu0 %v3928
        %3980 = vmatprep.subr.bf16.mxu0 0
        %3981 = vmatpush1.bf16.msra.mxu0 %v3927
        %3982 = vmatprep.subr.bf16.mxu0 0
        %3983 = vmatpush1.bf16.msra.mxu0 %v3926
        %3984 = vmatprep.subr.bf16.mxu0 0
        %3985 = vmatpush1.bf16.msra.mxu0 %v3925
        %3986 = vmatprep.subr.bf16.mxu0 0
        %3987 = vmatpush1.bf16.msra.mxu0 %v3924
        %3988 = vmatprep.subr.bf16.mxu0 0
        %3989 = vmatpush2.bf16.msra.mxu0 %v3939
        %3990 = vmatprep.subr.bf16.mxu0 0
        %3991 = vmatpush2.bf16.msra.mxu0 %v3938
        %3992 = vmatprep.subr.bf16.mxu0 0
        %3993 = vmatpush2.bf16.msra.mxu0 %v3937
        %3994 = vmatprep.subr.bf16.mxu0 0
        %3995 = vmatpush2.bf16.msra.mxu0 %v3936
        %3996 = vmatprep.subr.bf16.mxu0 0
        %3997 = vmatpush2.bf16.msra.mxu0 %v3935
        %3998 = vmatprep.subr.bf16.mxu0 0
        %3999 = vmatpush2.bf16.msra.mxu0 %v3934
        %4000 = vmatprep.subr.bf16.mxu0 0
        %4001 = vmatpush2.bf16.msra.mxu0 %v3933
        %4002 = vmatprep.subr.bf16.mxu0 0
        %4003 = vmatpush2.bf16.msra.mxu0 %v3932
        %4004 = vmatprep.mubr.bf16.mxu0 %v3776
        %4005 = vmatmul.mubr.bf16.gmra.mxu0 %v3775
        %v4006 = vpop.f32.mrf.mxu0
        %v4007 = vadd.f32 %v3826, %v4006
        %v4008 = vpop.f32.mrf.mxu0
        %v4009 = vpop.f32.mrf.mxu0
        %v4010 = vadd.f32 %v3827, %v4009
        %v4011 = vpop.f32.mrf.mxu0
        %4012 = vdwg.mxu0
        %4013 = vmatprep.subr.bf16.mxu0 0
        %4014 = vmatpush1.bf16.msra.mxu0 %v3947
        %4015 = vmatprep.subr.bf16.mxu0 0
        %4016 = vmatpush1.bf16.msra.mxu0 %v3946
        %4017 = vmatprep.subr.bf16.mxu0 0
        %4018 = vmatpush1.bf16.msra.mxu0 %v3945
        %4019 = vmatprep.subr.bf16.mxu0 0
        %4020 = vmatpush1.bf16.msra.mxu0 %v3944
        %4021 = vmatprep.subr.bf16.mxu0 0
        %4022 = vmatpush1.bf16.msra.mxu0 %v3943
        %4023 = vmatprep.subr.bf16.mxu0 0
        %4024 = vmatpush1.bf16.msra.mxu0 %v3942
        %4025 = vmatprep.subr.bf16.mxu0 0
        %4026 = vmatpush1.bf16.msra.mxu0 %v3941
        %4027 = vmatprep.subr.bf16.mxu0 0
        %4028 = vmatpush1.bf16.msra.mxu0 %v3940
        %4029 = vmatprep.subr.bf16.mxu0 0
        %4030 = vmatpush2.bf16.msra.mxu0 0
        %4031 = vmatprep.subr.bf16.mxu0 0
        %4032 = vmatpush2.bf16.msra.mxu0 0
        %4033 = vmatprep.subr.bf16.mxu0 0
        %4034 = vmatpush2.bf16.msra.mxu0 0
        %4035 = vmatprep.subr.bf16.mxu0 0
        %4036 = vmatpush2.bf16.msra.mxu0 0
        %4037 = vmatprep.subr.bf16.mxu0 0
        %4038 = vmatpush2.bf16.msra.mxu0 0
        %4039 = vmatprep.subr.bf16.mxu0 0
        %4040 = vmatpush2.bf16.msra.mxu0 0
        %4041 = vmatprep.subr.bf16.mxu0 0
        %4042 = vmatpush2.bf16.msra.mxu0 0
        %4043 = vmatprep.subr.bf16.mxu0 0
        %4044 = vmatpush2.bf16.msra.mxu0 0
        %4045 = vmatprep.mubr.bf16.mxu0 0
        %4046 = vmatmul.mubr.bf16.gmra.mxu0 %v3777
        %v4047 = vpop.f32.mrf.mxu0
        %v4048 = vadd.f32 %v4007, %v4047
        %v4049 = vpop.f32.mrf.mxu0
        %v4050 = vpop.f32.mrf.mxu0
        %v4051 = vadd.f32 %v4010, %v4050
        %v4052 = vpop.f32.mrf.mxu0
        %4053 = vdwg.mxu0
        %v4054 = vpack.c.bf16 %v4051, %v4048
        %v4055 = vld [vmem:[#allocation3 + $0x358] sm:$0xf]
        %v4056 = vld [vmem:[#allocation3 + $0x35c] sm:$0xf]
        %v4057 = vld [vmem:[#allocation3 + $0x360] sm:$0xf]
        %v4061 = vunpack.c.l.b16 %v4055
        %v4062 = vunpack.c.l.b16 %v4056
        %v4063 = vunpack.c.l.b16 %v4057
        %v4064 = vpack.c.b16 %v4062, %v4061
        %v4065 = vpack.c.b16 %v4063, %v4063
        %vm4067 = vcmask 195584
        %v4069 = vsel %vm4067, %v4054, 0
        %vm4071 = vcmask 1043456
        %v4073 = vsel %vm4071, %v4065, 0
        %4075 = vmatprep.subr.bf16.mxu0 0
        %4076 = vmatpush1.bf16.msra.mxu0 0
        %4077 = vmatprep.subr.bf16.mxu0 0
        %4078 = vmatpush1.bf16.msra.mxu0 0
        %4079 = vmatprep.subr.bf16.mxu0 0
        %4080 = vmatpush1.bf16.msra.mxu0 0
        %4081 = vmatprep.subr.bf16.mxu0 0
        %4082 = vmatpush1.bf16.msra.mxu0 0
        %4083 = vmatprep.subr.bf16.mxu0 0
        %4084 = vmatpush1.bf16.msra.mxu0 0
        %4085 = vmatprep.subr.bf16.mxu0 0
        %4086 = vmatpush1.bf16.msra.mxu0 0
        %4087 = vmatprep.subr.bf16.mxu0 0
        %4088 = vmatpush1.bf16.msra.mxu0 %v4073
        %4089 = vmatprep.subr.bf16.mxu0 0
        %4090 = vmatpush1.bf16.msra.mxu0 %v4064
        %4091 = vmatprep.subr.bf16.mxu0 0
        %4092 = vmatpush2.bf16.msra.mxu0 0
        %4093 = vmatprep.subr.bf16.mxu0 0
        %4094 = vmatpush2.bf16.msra.mxu0 0
        %4095 = vmatprep.subr.bf16.mxu0 0
        %4096 = vmatpush2.bf16.msra.mxu0 0
        %4097 = vmatprep.subr.bf16.mxu0 0
        %4098 = vmatpush2.bf16.msra.mxu0 0
        %4099 = vmatprep.subr.bf16.mxu0 0
        %4100 = vmatpush2.bf16.msra.mxu0 0
        %4101 = vmatprep.subr.bf16.mxu0 0
        %4102 = vmatpush2.bf16.msra.mxu0 0
        %4103 = vmatprep.subr.bf16.mxu0 0
        %4104 = vmatpush2.bf16.msra.mxu0 0
        %4105 = vmatprep.subr.bf16.mxu0 0
        %4106 = vmatpush2.bf16.msra.mxu0 0
        %4107 = vmatprep.mubr.bf16.mxu0 0
        %4108 = vmatmul.mubr.bf16.gmra.mxu0 %v4069
        %v4109 = vpop.f32.mrf.mxu0
        %v4110 = vadd.f32 0.0, %v4109
        %v4111 = vpop.f32.mrf.mxu0
        %v4112 = vpop.f32.mrf.mxu0
        %v4113 = vadd.f32 0.0, %v4112
        %v4114 = vpop.f32.mrf.mxu0
        %4115 = vdwg.mxu0
        %vm4116 = vcmask 23552
        %4117 = vst.msk [vmem:[#allocation2] sm:$0xff] %vm4116, 0.0
        %4118 = vst.msk [vmem:[#allocation2 + $0x10] sm:$0xff] %vm4116, 0.0
        %vm4119 = vcmask 31752
        %4120 = vst.msk [vmem:[#allocation2 + $0x8] sm:$0xff] %vm4119, 0.0
        %4121 = vst.msk [vmem:[#allocation2 + $0x18] sm:$0xff] %vm4119, 0.0
        %4124 = vrot.lane.b32.xlu0 %v4110, 3
        %v4125 = vpop.permute.xlu0 %4124
        %4126 = vrot.lane.b32.xlu0 %v4113, 3
        %v4127 = vpop.permute.xlu0 %4126
        %vm4130 = vcmask 1047576
        %4131 = vst.msk [vmem:[#allocation2] sm:$0xff] %vm4130, %v4125
        %4132 = vst.msk [vmem:[#allocation2 + $0x8] sm:$0xff] %vm658, %v4125
        %4133 = vst.msk [vmem:[#allocation2 + $0x10] sm:$0xff] %vm4130, %v4127
        %4134 = vst.msk [vmem:[#allocation2 + $0x18] sm:$0xff] %vm658, %v4127
        %v4135 = vld [vmem:[#allocation2] sm:$0xff]
        %v4136 = vld [vmem:[#allocation2 + $0x10] sm:$0xff]
        %v4137 = vpack.c.bf16 %v4136, %v4135
        %v4138 = vld [vmem:[#allocation3 + $0x368] sm:$0xf]
        %v4139 = vld [vmem:[#allocation3 + $0x36c] sm:$0xf]
        %v4140 = vld [vmem:[#allocation2 + $0x8] sm:$0xff]
        %v4141 = vld [vmem:[#allocation2 + $0x18] sm:$0xff]
        %v4142 = vpack.c.bf16 %v4141, %v4140
        %v4143 = vld [vmem:[#allocation3 + $0x370] sm:$0xf]
        %v4144 = vld [vmem:[#allocation3 + $0x374] sm:$0xf]
        %v4147 = vunpack.c.l.b16 %v4143
        %v4148 = vunpack.c.l.b16 %v4144
        %v4149 = vpack.c.b16 %v4148, %v4147
        %4152 = vrot.lane.b32.xlu0 %v4137, 127
        %v4153 = vpop.permute.xlu0 %4152
        %4154 = vrot.lane.b32.xlu0 %v4142, 127
        %v4155 = vpop.permute.xlu0 %4154
        %v4156 = vsel %vm347, %v4153, %v4155
        %v4159 = vsel %vm700, %v4149, 0
        %4161 = vmatprep.subr.bf16.mxu0 0
        %4162 = vmatpush1.bf16.msra.mxu0 0
        %4163 = vmatprep.subr.bf16.mxu0 0
        %4164 = vmatpush1.bf16.msra.mxu0 0
        %4165 = vmatprep.subr.bf16.mxu0 0
        %4166 = vmatpush1.bf16.msra.mxu0 0
        %4167 = vmatprep.subr.bf16.mxu0 0
        %4168 = vmatpush1.bf16.msra.mxu0 0
        %4169 = vmatprep.subr.bf16.mxu0 0
        %4170 = vmatpush1.bf16.msra.mxu0 0
        %4171 = vmatprep.subr.bf16.mxu0 0
        %4172 = vmatpush1.bf16.msra.mxu0 0
        %4173 = vmatprep.subr.bf16.mxu0 0
        %4174 = vmatpush1.bf16.msra.mxu0 0
        %4175 = vmatprep.subr.bf16.mxu0 0
        %4176 = vmatpush1.bf16.msra.mxu0 %v4156
        %4177 = vmatprep.subr.bf16.mxu0 0
        %4178 = vmatpush2.bf16.msra.mxu0 0
        %4179 = vmatprep.subr.bf16.mxu0 0
        %4180 = vmatpush2.bf16.msra.mxu0 0
        %4181 = vmatprep.subr.bf16.mxu0 0
        %4182 = vmatpush2.bf16.msra.mxu0 0
        %4183 = vmatprep.subr.bf16.mxu0 0
        %4184 = vmatpush2.bf16.msra.mxu0 0
        %4185 = vmatprep.subr.bf16.mxu0 0
        %4186 = vmatpush2.bf16.msra.mxu0 0
        %4187 = vmatprep.subr.bf16.mxu0 0
        %4188 = vmatpush2.bf16.msra.mxu0 0
        %4189 = vmatprep.subr.bf16.mxu0 0
        %4190 = vmatpush2.bf16.msra.mxu0 0
        %4191 = vmatprep.subr.bf16.mxu0 0
        %4192 = vmatpush2.bf16.msra.mxu0 0
        %4193 = vmatprep.mubr.bf16.mxu0 0
        %4194 = vmatmul.mubr.bf16.gmra.mxu0 %v4159
        %v4195 = vpop.f32.mrf.mxu0
        %v4196 = vadd.f32 0.0, %v4195
        %v4197 = vpop.f32.mrf.mxu0
        %v4198 = vpop.f32.mrf.mxu0
        %v4199 = vadd.f32 0.0, %v4198
        %v4200 = vpop.f32.mrf.mxu0
        %4201 = vdwg.mxu0
        %v4204 = vunpack.c.l.b16 %v4138
        %v4205 = vunpack.c.l.b16 %v4139
        %v4206 = vpack.c.b16 %v4205, %v4204
        %v4208 = vsel %vm700, %v4206, 0
        %4210 = vmatprep.subr.bf16.mxu0 0
        %4211 = vmatpush1.bf16.msra.mxu0 0
        %4212 = vmatprep.subr.bf16.mxu0 0
        %4213 = vmatpush1.bf16.msra.mxu0 0
        %4214 = vmatprep.subr.bf16.mxu0 0
        %4215 = vmatpush1.bf16.msra.mxu0 0
        %4216 = vmatprep.subr.bf16.mxu0 0
        %4217 = vmatpush1.bf16.msra.mxu0 0
        %4218 = vmatprep.subr.bf16.mxu0 0
        %4219 = vmatpush1.bf16.msra.mxu0 0
        %4220 = vmatprep.subr.bf16.mxu0 0
        %4221 = vmatpush1.bf16.msra.mxu0 0
        %4222 = vmatprep.subr.bf16.mxu0 0
        %4223 = vmatpush1.bf16.msra.mxu0 0
        %4224 = vmatprep.subr.bf16.mxu0 0
        %4225 = vmatpush1.bf16.msra.mxu0 %v4137
        %4226 = vmatprep.subr.bf16.mxu0 0
        %4227 = vmatpush2.bf16.msra.mxu0 0
        %4228 = vmatprep.subr.bf16.mxu0 0
        %4229 = vmatpush2.bf16.msra.mxu0 0
        %4230 = vmatprep.subr.bf16.mxu0 0
        %4231 = vmatpush2.bf16.msra.mxu0 0
        %4232 = vmatprep.subr.bf16.mxu0 0
        %4233 = vmatpush2.bf16.msra.mxu0 0
        %4234 = vmatprep.subr.bf16.mxu0 0
        %4235 = vmatpush2.bf16.msra.mxu0 0
        %4236 = vmatprep.subr.bf16.mxu0 0
        %4237 = vmatpush2.bf16.msra.mxu0 0
        %4238 = vmatprep.subr.bf16.mxu0 0
        %4239 = vmatpush2.bf16.msra.mxu0 0
        %4240 = vmatprep.subr.bf16.mxu0 0
        %4241 = vmatpush2.bf16.msra.mxu0 0
        %4242 = vmatprep.mubr.bf16.mxu0 0
        %4243 = vmatmul.mubr.bf16.gmra.mxu0 %v4208
        %v4244 = vpop.f32.mrf.mxu0
        %v4245 = vadd.f32 %v4196, %v4244
        %v4246 = vpop.f32.mrf.mxu0
        %v4247 = vpop.f32.mrf.mxu0
        %v4248 = vadd.f32 %v4199, %v4247
        %v4249 = vpop.f32.mrf.mxu0
        %4250 = vdwg.mxu0
        %v4251 = vld [vmem:[#allocation3 + $0x378] sm:$0xf]
        %v4252 = vld [vmem:[#allocation3 + $0x37c] sm:$0xf]
        %v4255 = vunpack.c.l.b16 %v4251
        %v4256 = vunpack.c.l.b16 %v4252
        %v4257 = vpack.c.b16 %v4256, %v4255
        %4258 = vrot.lane.b32.xlu0 %v4137, 126
        %v4259 = vpop.permute.xlu0 %4258
        %4260 = vrot.lane.b32.xlu0 %v4142, 126
        %v4261 = vpop.permute.xlu0 %4260
        %v4262 = vsel %vm461, %v4259, %v4261
        %v4265 = vsel %vm700, %v4257, 0
        %4267 = vmatprep.subr.bf16.mxu0 0
        %4268 = vmatpush1.bf16.msra.mxu0 0
        %4269 = vmatprep.subr.bf16.mxu0 0
        %4270 = vmatpush1.bf16.msra.mxu0 0
        %4271 = vmatprep.subr.bf16.mxu0 0
        %4272 = vmatpush1.bf16.msra.mxu0 0
        %4273 = vmatprep.subr.bf16.mxu0 0
        %4274 = vmatpush1.bf16.msra.mxu0 0
        %4275 = vmatprep.subr.bf16.mxu0 0
        %4276 = vmatpush1.bf16.msra.mxu0 0
        %4277 = vmatprep.subr.bf16.mxu0 0
        %4278 = vmatpush1.bf16.msra.mxu0 0
        %4279 = vmatprep.subr.bf16.mxu0 0
        %4280 = vmatpush1.bf16.msra.mxu0 0
        %4281 = vmatprep.subr.bf16.mxu0 0
        %4282 = vmatpush1.bf16.msra.mxu0 %v4262
        %4283 = vmatprep.subr.bf16.mxu0 0
        %4284 = vmatpush2.bf16.msra.mxu0 0
        %4285 = vmatprep.subr.bf16.mxu0 0
        %4286 = vmatpush2.bf16.msra.mxu0 0
        %4287 = vmatprep.subr.bf16.mxu0 0
        %4288 = vmatpush2.bf16.msra.mxu0 0
        %4289 = vmatprep.subr.bf16.mxu0 0
        %4290 = vmatpush2.bf16.msra.mxu0 0
        %4291 = vmatprep.subr.bf16.mxu0 0
        %4292 = vmatpush2.bf16.msra.mxu0 0
        %4293 = vmatprep.subr.bf16.mxu0 0
        %4294 = vmatpush2.bf16.msra.mxu0 0
        %4295 = vmatprep.subr.bf16.mxu0 0
        %4296 = vmatpush2.bf16.msra.mxu0 0
        %4297 = vmatprep.subr.bf16.mxu0 0
        %4298 = vmatpush2.bf16.msra.mxu0 0
        %4299 = vmatprep.mubr.bf16.mxu0 0
        %4300 = vmatmul.mubr.bf16.gmra.mxu0 %v4265
        %v4301 = vpop.f32.mrf.mxu0
        %v4302 = vadd.f32 0.0, %v4301
        %v4303 = vpop.f32.mrf.mxu0
        %v4304 = vpop.f32.mrf.mxu0
        %v4305 = vadd.f32 0.0, %v4304
        %v4306 = vpop.f32.mrf.mxu0
        %4307 = vdwg.mxu0
        %v4308 = vadd.f32 %v4245, %v4302
        %v4309 = vadd.f32 %v4248, %v4305
        %v4310 = vld [vmem:[#allocation3 + $0x380] sm:$0xf]
        %v4311 = vld [vmem:[#allocation3 + $0x384] sm:$0xf]
        %v4314 = vunpack.c.l.b16 %v4310
        %v4315 = vunpack.c.l.b16 %v4311
        %v4316 = vpack.c.b16 %v4315, %v4314
        %4317 = vrot.lane.b32.xlu0 %v4137, 125
        %v4318 = vpop.permute.xlu0 %4317
        %4319 = vrot.lane.b32.xlu0 %v4142, 125
        %v4320 = vpop.permute.xlu0 %4319
        %vm4321 = vcmask 1022976
        %v4322 = vsel %vm4321, %v4318, %v4320
        %v4325 = vsel %vm700, %v4316, 0
        %4327 = vmatprep.subr.bf16.mxu0 0
        %4328 = vmatpush1.bf16.msra.mxu0 0
        %4329 = vmatprep.subr.bf16.mxu0 0
        %4330 = vmatpush1.bf16.msra.mxu0 0
        %4331 = vmatprep.subr.bf16.mxu0 0
        %4332 = vmatpush1.bf16.msra.mxu0 0
        %4333 = vmatprep.subr.bf16.mxu0 0
        %4334 = vmatpush1.bf16.msra.mxu0 0
        %4335 = vmatprep.subr.bf16.mxu0 0
        %4336 = vmatpush1.bf16.msra.mxu0 0
        %4337 = vmatprep.subr.bf16.mxu0 0
        %4338 = vmatpush1.bf16.msra.mxu0 0
        %4339 = vmatprep.subr.bf16.mxu0 0
        %4340 = vmatpush1.bf16.msra.mxu0 0
        %4341 = vmatprep.subr.bf16.mxu0 0
        %4342 = vmatpush1.bf16.msra.mxu0 %v4322
        %4343 = vmatprep.subr.bf16.mxu0 0
        %4344 = vmatpush2.bf16.msra.mxu0 0
        %4345 = vmatprep.subr.bf16.mxu0 0
        %4346 = vmatpush2.bf16.msra.mxu0 0
        %4347 = vmatprep.subr.bf16.mxu0 0
        %4348 = vmatpush2.bf16.msra.mxu0 0
        %4349 = vmatprep.subr.bf16.mxu0 0
        %4350 = vmatpush2.bf16.msra.mxu0 0
        %4351 = vmatprep.subr.bf16.mxu0 0
        %4352 = vmatpush2.bf16.msra.mxu0 0
        %4353 = vmatprep.subr.bf16.mxu0 0
        %4354 = vmatpush2.bf16.msra.mxu0 0
        %4355 = vmatprep.subr.bf16.mxu0 0
        %4356 = vmatpush2.bf16.msra.mxu0 0
        %4357 = vmatprep.subr.bf16.mxu0 0
        %4358 = vmatpush2.bf16.msra.mxu0 0
        %4359 = vmatprep.mubr.bf16.mxu0 0
        %4360 = vmatmul.mubr.bf16.gmra.mxu0 %v4325
        %v4361 = vpop.f32.mrf.mxu0
        %v4362 = vadd.f32 0.0, %v4361
        %v4363 = vpop.f32.mrf.mxu0
        %v4364 = vpop.f32.mrf.mxu0
        %v4365 = vadd.f32 0.0, %v4364
        %v4366 = vpop.f32.mrf.mxu0
        %4367 = vdwg.mxu0
        %v4368 = vadd.f32 %v4308, %v4362
        %v4369 = vadd.f32 %v4309, %v4365
        %v4370 = vld [vmem:[#allocation3 + $0x388] sm:$0xf]
        %v4371 = vld [vmem:[#allocation3 + $0x38c] sm:$0xf]
        %v4374 = vunpack.c.l.b16 %v4370
        %v4375 = vunpack.c.l.b16 %v4371
        %v4376 = vpack.c.b16 %v4375, %v4374
        %4377 = vrot.lane.b32.xlu0 %v4137, 124
        %v4378 = vpop.permute.xlu0 %4377
        %4379 = vrot.lane.b32.xlu0 %v4142, 124
        %v4380 = vpop.permute.xlu0 %4379
        %vm4381 = vcmask 1014784
        %v4382 = vsel %vm4381, %v4378, %v4380
        %v4385 = vsel %vm700, %v4376, 0
        %4387 = vmatprep.subr.bf16.mxu0 0
        %4388 = vmatpush1.bf16.msra.mxu0 0
        %4389 = vmatprep.subr.bf16.mxu0 0
        %4390 = vmatpush1.bf16.msra.mxu0 0
        %4391 = vmatprep.subr.bf16.mxu0 0
        %4392 = vmatpush1.bf16.msra.mxu0 0
        %4393 = vmatprep.subr.bf16.mxu0 0
        %4394 = vmatpush1.bf16.msra.mxu0 0
        %4395 = vmatprep.subr.bf16.mxu0 0
        %4396 = vmatpush1.bf16.msra.mxu0 0
        %4397 = vmatprep.subr.bf16.mxu0 0
        %4398 = vmatpush1.bf16.msra.mxu0 0
        %4399 = vmatprep.subr.bf16.mxu0 0
        %4400 = vmatpush1.bf16.msra.mxu0 0
        %4401 = vmatprep.subr.bf16.mxu0 0
        %4402 = vmatpush1.bf16.msra.mxu0 %v4382
        %4403 = vmatprep.subr.bf16.mxu0 0
        %4404 = vmatpush2.bf16.msra.mxu0 0
        %4405 = vmatprep.subr.bf16.mxu0 0
        %4406 = vmatpush2.bf16.msra.mxu0 0
        %4407 = vmatprep.subr.bf16.mxu0 0
        %4408 = vmatpush2.bf16.msra.mxu0 0
        %4409 = vmatprep.subr.bf16.mxu0 0
        %4410 = vmatpush2.bf16.msra.mxu0 0
        %4411 = vmatprep.subr.bf16.mxu0 0
        %4412 = vmatpush2.bf16.msra.mxu0 0
        %4413 = vmatprep.subr.bf16.mxu0 0
        %4414 = vmatpush2.bf16.msra.mxu0 0
        %4415 = vmatprep.subr.bf16.mxu0 0
        %4416 = vmatpush2.bf16.msra.mxu0 0
        %4417 = vmatprep.subr.bf16.mxu0 0
        %4418 = vmatpush2.bf16.msra.mxu0 0
        %4419 = vmatprep.mubr.bf16.mxu0 0
        %4420 = vmatmul.mubr.bf16.gmra.mxu0 %v4385
        %v4421 = vpop.f32.mrf.mxu0
        %v4422 = vadd.f32 0.0, %v4421
        %v4423 = vpop.f32.mrf.mxu0
        %v4424 = vpop.f32.mrf.mxu0
        %v4425 = vadd.f32 0.0, %v4424
        %v4426 = vpop.f32.mrf.mxu0
        %4427 = vdwg.mxu0
        %v4428 = vadd.f32 %v4368, %v4422
        %v4429 = vadd.f32 %v4369, %v4425
        %v4430 = vld [vmem:[#allocation7 + $0x120] sm:$0xff]
        %v4431 = vld [vmem:[#allocation7 + $0x128] sm:$0xff]
        %4433 = vset.pattern.permute.xlu0 0
        %4434 = vperm.xlu0 %4433, %v4430
        %v4435 = vpop.permute.xlu0 %4434
        %4438 = vset.pattern.permute.xlu0 0
        %4439 = vperm.xlu0 %4438, %v4431
        %v4440 = vpop.permute.xlu0 %4439
        %v4442 = vadd.f32 %v4428, %v4435
        %v4443 = vadd.f32 %v4429, %v4440
        %vm4444 = vcmp.ge.f32.partialorder %v4442, 0.0
        %vm4445 = vcmp.ge.f32.partialorder %v4443, 0.0
        %v4446 = vmul.f32 %v4442, 0.01
        %v4447 = vmul.f32 %v4443, 0.01
        %v4448 = vsel %vm4444, %v4442, %v4446
        %v4449 = vsel %vm4445, %v4443, %v4447
        %4450 = vst.msk [vmem:[#allocation2] sm:$0xff] %vm658, 0.0
        %4451 = vst.msk [vmem:[#allocation2 + $0x10] sm:$0xff] %vm658, 0.0
        %vm4452 = vcmask 15368
        %4453 = vst.msk [vmem:[#allocation2 + $0x8] sm:$0xff] %vm4452, 0.0
        %4454 = vst.msk [vmem:[#allocation2 + $0x18] sm:$0xff] %vm4452, 0.0
        %4457 = vrot.lane.b32.xlu0 %v4448, 1
        %v4458 = vpop.permute.xlu0 %4457
        %4459 = vrot.lane.b32.xlu0 %v4449, 1
        %v4460 = vpop.permute.xlu0 %4459
        %vm4463 = vcmask 1047560
        %4464 = vst.msk [vmem:[#allocation2] sm:$0xff] %vm4463, %v4458
        %4465 = vst.msk [vmem:[#allocation2 + $0x8] sm:$0xff] %vm658, %v4458
        %4466 = vst.msk [vmem:[#allocation2 + $0x10] sm:$0xff] %vm4463, %v4460
        %4467 = vst.msk [vmem:[#allocation2 + $0x18] sm:$0xff] %vm658, %v4460
        %v4468 = vld [vmem:[#allocation2] sm:$0xff]
        %v4469 = vld [vmem:[#allocation2 + $0x10] sm:$0xff]
        %v4470 = vpack.c.bf16 %v4469, %v4468
        %v4471 = vld [vmem:[#allocation3 + $0x390] sm:$0xf]
        %v4472 = vld [vmem:[#allocation3 + $0x394] sm:$0xf]
        %v4473 = vld [vmem:[#allocation2 + $0x8] sm:$0xff]
        %v4474 = vld [vmem:[#allocation2 + $0x18] sm:$0xff]
        %v4475 = vpack.c.bf16 %v4474, %v4473
        %v4476 = vld [vmem:[#allocation3 + $0x398] sm:$0xf]
        %v4477 = vld [vmem:[#allocation3 + $0x39c] sm:$0xf]
        %v4480 = vunpack.c.l.b16 %v4476
        %v4481 = vunpack.c.l.b16 %v4477
        %v4482 = vpack.c.b16 %v4481, %v4480
        %4485 = vrot.lane.b32.xlu0 %v4470, 127
        %v4486 = vpop.permute.xlu0 %4485
        %4487 = vrot.lane.b32.xlu0 %v4475, 127
        %v4488 = vpop.permute.xlu0 %4487
        %v4489 = vsel %vm347, %v4486, %v4488
        %v4492 = vsel %vm700, %v4482, 0
        %4494 = vmatprep.subr.bf16.mxu0 0
        %4495 = vmatpush1.bf16.msra.mxu0 0
        %4496 = vmatprep.subr.bf16.mxu0 0
        %4497 = vmatpush1.bf16.msra.mxu0 0
        %4498 = vmatprep.subr.bf16.mxu0 0
        %4499 = vmatpush1.bf16.msra.mxu0 0
        %4500 = vmatprep.subr.bf16.mxu0 0
        %4501 = vmatpush1.bf16.msra.mxu0 0
        %4502 = vmatprep.subr.bf16.mxu0 0
        %4503 = vmatpush1.bf16.msra.mxu0 0
        %4504 = vmatprep.subr.bf16.mxu0 0
        %4505 = vmatpush1.bf16.msra.mxu0 0
        %4506 = vmatprep.subr.bf16.mxu0 0
        %4507 = vmatpush1.bf16.msra.mxu0 0
        %4508 = vmatprep.subr.bf16.mxu0 0
        %4509 = vmatpush1.bf16.msra.mxu0 %v4489
        %4510 = vmatprep.subr.bf16.mxu0 0
        %4511 = vmatpush2.bf16.msra.mxu0 0
        %4512 = vmatprep.subr.bf16.mxu0 0
        %4513 = vmatpush2.bf16.msra.mxu0 0
        %4514 = vmatprep.subr.bf16.mxu0 0
        %4515 = vmatpush2.bf16.msra.mxu0 0
        %4516 = vmatprep.subr.bf16.mxu0 0
        %4517 = vmatpush2.bf16.msra.mxu0 0
        %4518 = vmatprep.subr.bf16.mxu0 0
        %4519 = vmatpush2.bf16.msra.mxu0 0
        %4520 = vmatprep.subr.bf16.mxu0 0
        %4521 = vmatpush2.bf16.msra.mxu0 0
        %4522 = vmatprep.subr.bf16.mxu0 0
        %4523 = vmatpush2.bf16.msra.mxu0 0
        %4524 = vmatprep.subr.bf16.mxu0 0
        %4525 = vmatpush2.bf16.msra.mxu0 0
        %4526 = vmatprep.mubr.bf16.mxu0 0
        %4527 = vmatmul.mubr.bf16.gmra.mxu0 %v4492
        %v4528 = vpop.f32.mrf.mxu0
        %v4529 = vadd.f32 0.0, %v4528
        %v4530 = vpop.f32.mrf.mxu0
        %v4531 = vpop.f32.mrf.mxu0
        %v4532 = vadd.f32 0.0, %v4531
        %v4533 = vpop.f32.mrf.mxu0
        %4534 = vdwg.mxu0
        %v4537 = vunpack.c.l.b16 %v4471
        %v4538 = vunpack.c.l.b16 %v4472
        %v4539 = vpack.c.b16 %v4538, %v4537
        %v4541 = vsel %vm700, %v4539, 0
        %4543 = vmatprep.subr.bf16.mxu0 0
        %4544 = vmatpush1.bf16.msra.mxu0 0
        %4545 = vmatprep.subr.bf16.mxu0 0
        %4546 = vmatpush1.bf16.msra.mxu0 0
        %4547 = vmatprep.subr.bf16.mxu0 0
        %4548 = vmatpush1.bf16.msra.mxu0 0
        %4549 = vmatprep.subr.bf16.mxu0 0
        %4550 = vmatpush1.bf16.msra.mxu0 0
        %4551 = vmatprep.subr.bf16.mxu0 0
        %4552 = vmatpush1.bf16.msra.mxu0 0
        %4553 = vmatprep.subr.bf16.mxu0 0
        %4554 = vmatpush1.bf16.msra.mxu0 0
        %4555 = vmatprep.subr.bf16.mxu0 0
        %4556 = vmatpush1.bf16.msra.mxu0 0
        %4557 = vmatprep.subr.bf16.mxu0 0
        %4558 = vmatpush1.bf16.msra.mxu0 %v4470
        %4559 = vmatprep.subr.bf16.mxu0 0
        %4560 = vmatpush2.bf16.msra.mxu0 0
        %4561 = vmatprep.subr.bf16.mxu0 0
        %4562 = vmatpush2.bf16.msra.mxu0 0
        %4563 = vmatprep.subr.bf16.mxu0 0
        %4564 = vmatpush2.bf16.msra.mxu0 0
        %4565 = vmatprep.subr.bf16.mxu0 0
        %4566 = vmatpush2.bf16.msra.mxu0 0
        %4567 = vmatprep.subr.bf16.mxu0 0
        %4568 = vmatpush2.bf16.msra.mxu0 0
        %4569 = vmatprep.subr.bf16.mxu0 0
        %4570 = vmatpush2.bf16.msra.mxu0 0
        %4571 = vmatprep.subr.bf16.mxu0 0
        %4572 = vmatpush2.bf16.msra.mxu0 0
        %4573 = vmatprep.subr.bf16.mxu0 0
        %4574 = vmatpush2.bf16.msra.mxu0 0
        %4575 = vmatprep.mubr.bf16.mxu0 0
        %4576 = vmatmul.mubr.bf16.gmra.mxu0 %v4541
        %v4577 = vpop.f32.mrf.mxu0
        %v4578 = vadd.f32 %v4529, %v4577
        %v4579 = vpop.f32.mrf.mxu0
        %v4580 = vpop.f32.mrf.mxu0
        %v4581 = vadd.f32 %v4532, %v4580
        %v4582 = vpop.f32.mrf.mxu0
        %4583 = vdwg.mxu0
        %v4584 = vld [vmem:[#allocation3 + $0x3a0] sm:$0xf]
        %v4585 = vld [vmem:[#allocation3 + $0x3a4] sm:$0xf]
        %v4588 = vunpack.c.l.b16 %v4584
        %v4589 = vunpack.c.l.b16 %v4585
        %v4590 = vpack.c.b16 %v4589, %v4588
        %4591 = vrot.lane.b32.xlu0 %v4470, 126
        %v4592 = vpop.permute.xlu0 %4591
        %4593 = vrot.lane.b32.xlu0 %v4475, 126
        %v4594 = vpop.permute.xlu0 %4593
        %v4595 = vsel %vm461, %v4592, %v4594
        %v4598 = vsel %vm700, %v4590, 0
        %4600 = vmatprep.subr.bf16.mxu0 0
        %4601 = vmatpush1.bf16.msra.mxu0 0
        %4602 = vmatprep.subr.bf16.mxu0 0
        %4603 = vmatpush1.bf16.msra.mxu0 0
        %4604 = vmatprep.subr.bf16.mxu0 0
        %4605 = vmatpush1.bf16.msra.mxu0 0
        %4606 = vmatprep.subr.bf16.mxu0 0
        %4607 = vmatpush1.bf16.msra.mxu0 0
        %4608 = vmatprep.subr.bf16.mxu0 0
        %4609 = vmatpush1.bf16.msra.mxu0 0
        %4610 = vmatprep.subr.bf16.mxu0 0
        %4611 = vmatpush1.bf16.msra.mxu0 0
        %4612 = vmatprep.subr.bf16.mxu0 0
        %4613 = vmatpush1.bf16.msra.mxu0 0
        %4614 = vmatprep.subr.bf16.mxu0 0
        %4615 = vmatpush1.bf16.msra.mxu0 %v4595
        %4616 = vmatprep.subr.bf16.mxu0 0
        %4617 = vmatpush2.bf16.msra.mxu0 0
        %4618 = vmatprep.subr.bf16.mxu0 0
        %4619 = vmatpush2.bf16.msra.mxu0 0
        %4620 = vmatprep.subr.bf16.mxu0 0
        %4621 = vmatpush2.bf16.msra.mxu0 0
        %4622 = vmatprep.subr.bf16.mxu0 0
        %4623 = vmatpush2.bf16.msra.mxu0 0
        %4624 = vmatprep.subr.bf16.mxu0 0
        %4625 = vmatpush2.bf16.msra.mxu0 0
        %4626 = vmatprep.subr.bf16.mxu0 0
        %4627 = vmatpush2.bf16.msra.mxu0 0
        %4628 = vmatprep.subr.bf16.mxu0 0
        %4629 = vmatpush2.bf16.msra.mxu0 0
        %4630 = vmatprep.subr.bf16.mxu0 0
        %4631 = vmatpush2.bf16.msra.mxu0 0
        %4632 = vmatprep.mubr.bf16.mxu0 0
        %4633 = vmatmul.mubr.bf16.gmra.mxu0 %v4598
        %v4634 = vpop.f32.mrf.mxu0
        %v4635 = vadd.f32 0.0, %v4634
        %v4636 = vpop.f32.mrf.mxu0
        %v4637 = vpop.f32.mrf.mxu0
        %v4638 = vadd.f32 0.0, %v4637
        %v4639 = vpop.f32.mrf.mxu0
        %4640 = vdwg.mxu0
        %v4641 = vadd.f32 %v4578, %v4635
        %v4642 = vadd.f32 %v4581, %v4638
        %v4643 = vld [vmem:[#allocation7 + $0x130] sm:$0xff]
        %v4644 = vld [vmem:[#allocation7 + $0x138] sm:$0xff]
        %4646 = vset.pattern.permute.xlu0 0
        %4647 = vperm.xlu0 %4646, %v4643
        %v4648 = vpop.permute.xlu0 %4647
        %4651 = vset.pattern.permute.xlu0 0
        %4652 = vperm.xlu0 %4651, %v4644
        %v4653 = vpop.permute.xlu0 %4652
        %v4655 = vadd.f32 %v4641, %v4648
        %v4656 = vadd.f32 %v4642, %v4653
        %vm4657 = vcmp.ge.f32.partialorder %v4655, 0.0
        %vm4658 = vcmp.ge.f32.partialorder %v4656, 0.0
        %v4659 = vmul.f32 %v4655, 0.01
        %v4660 = vmul.f32 %v4656, 0.01
        %v4661 = vsel %vm4657, %v4655, %v4659
        %v4662 = vsel %vm4658, %v4656, %v4660
        %4663 = vst.msk [vmem:[#allocation2] sm:$0xff] %vm658, 0.0
        %4664 = vst.msk [vmem:[#allocation2 + $0x10] sm:$0xff] %vm658, 0.0
        %4665 = vst.msk [vmem:[#allocation2 + $0x8] sm:$0xff] %vm4452, 0.0
        %4666 = vst.msk [vmem:[#allocation2 + $0x18] sm:$0xff] %vm4452, 0.0
        %4669 = vrot.lane.b32.xlu0 %v4661, 1
        %v4670 = vpop.permute.xlu0 %4669
        %4671 = vrot.lane.b32.xlu0 %v4662, 1
        %v4672 = vpop.permute.xlu0 %4671
        %4675 = vst.msk [vmem:[#allocation2] sm:$0xff] %vm4463, %v4670
        %4676 = vst.msk [vmem:[#allocation2 + $0x8] sm:$0xff] %vm658, %v4670
        %4677 = vst.msk [vmem:[#allocation2 + $0x10] sm:$0xff] %vm4463, %v4672
        %4678 = vst.msk [vmem:[#allocation2 + $0x18] sm:$0xff] %vm658, %v4672
        %v4679 = vld [vmem:[#allocation2] sm:$0xff]
        %v4680 = vld [vmem:[#allocation2 + $0x10] sm:$0xff]
        %v4681 = vpack.c.bf16 %v4680, %v4679
        %v4682 = vld [vmem:[#allocation3 + $0x3a8] sm:$0x7]
        %v4683 = vld [vmem:[#allocation2 + $0x8] sm:$0xff]
        %v4684 = vld [vmem:[#allocation2 + $0x18] sm:$0xff]
        %v4685 = vpack.c.bf16 %v4684, %v4683
        %v4686 = vld [vmem:[#allocation3 + $0x3b0] sm:$0x7]
        %4689 = vrot.lane.b32.xlu0 %v4681, 127
        %v4690 = vpop.permute.xlu0 %4689
        %4691 = vrot.lane.b32.xlu0 %v4685, 127
        %v4692 = vpop.permute.xlu0 %4691
        %v4693 = vsel %vm347, %v4690, %v4692
        %v4696 = vsel %vm700, %v4686, 0
        %4698 = vmatprep.subr.bf16.mxu0 0
        %4699 = vmatpush1.bf16.msra.mxu0 0
        %4700 = vmatprep.subr.bf16.mxu0 0
        %4701 = vmatpush1.bf16.msra.mxu0 0
        %4702 = vmatprep.subr.bf16.mxu0 0
        %4703 = vmatpush1.bf16.msra.mxu0 0
        %4704 = vmatprep.subr.bf16.mxu0 0
        %4705 = vmatpush1.bf16.msra.mxu0 0
        %4706 = vmatprep.subr.bf16.mxu0 0
        %4707 = vmatpush1.bf16.msra.mxu0 0
        %4708 = vmatprep.subr.bf16.mxu0 0
        %4709 = vmatpush1.bf16.msra.mxu0 0
        %4710 = vmatprep.subr.bf16.mxu0 0
        %4711 = vmatpush1.bf16.msra.mxu0 0
        %4712 = vmatprep.subr.bf16.mxu0 0
        %4713 = vmatpush1.bf16.msra.mxu0 %v4693
        %4714 = vmatprep.subr.bf16.mxu0 0
        %4715 = vmatpush2.bf16.msra.mxu0 0
        %4716 = vmatprep.subr.bf16.mxu0 0
        %4717 = vmatpush2.bf16.msra.mxu0 0
        %4718 = vmatprep.subr.bf16.mxu0 0
        %4719 = vmatpush2.bf16.msra.mxu0 0
        %4720 = vmatprep.subr.bf16.mxu0 0
        %4721 = vmatpush2.bf16.msra.mxu0 0
        %4722 = vmatprep.subr.bf16.mxu0 0
        %4723 = vmatpush2.bf16.msra.mxu0 0
        %4724 = vmatprep.subr.bf16.mxu0 0
        %4725 = vmatpush2.bf16.msra.mxu0 0
        %4726 = vmatprep.subr.bf16.mxu0 0
        %4727 = vmatpush2.bf16.msra.mxu0 0
        %4728 = vmatprep.subr.bf16.mxu0 0
        %4729 = vmatpush2.bf16.msra.mxu0 0
        %4730 = vmatprep.mubr.bf16.mxu0 0
        %4731 = vmatmul.mubr.bf16.gmra.mxu0 %v4696
        %v4732 = vpop.f32.mrf.mxu0
        %v4733 = vadd.f32 0.0, %v4732
        %v4734 = vpop.f32.mrf.mxu0
        %v4735 = vpop.f32.mrf.mxu0
        %v4736 = vpop.f32.mrf.mxu0
        %4737 = vdwg.mxu0
        %v4739 = vsel %vm700, %v4682, 0
        %4741 = vmatprep.subr.bf16.mxu0 0
        %4742 = vmatpush1.bf16.msra.mxu0 0
        %4743 = vmatprep.subr.bf16.mxu0 0
        %4744 = vmatpush1.bf16.msra.mxu0 0
        %4745 = vmatprep.subr.bf16.mxu0 0
        %4746 = vmatpush1.bf16.msra.mxu0 0
        %4747 = vmatprep.subr.bf16.mxu0 0
        %4748 = vmatpush1.bf16.msra.mxu0 0
        %4749 = vmatprep.subr.bf16.mxu0 0
        %4750 = vmatpush1.bf16.msra.mxu0 0
        %4751 = vmatprep.subr.bf16.mxu0 0
        %4752 = vmatpush1.bf16.msra.mxu0 0
        %4753 = vmatprep.subr.bf16.mxu0 0
        %4754 = vmatpush1.bf16.msra.mxu0 0
        %4755 = vmatprep.subr.bf16.mxu0 0
        %4756 = vmatpush1.bf16.msra.mxu0 %v4681
        %4757 = vmatprep.subr.bf16.mxu0 0
        %4758 = vmatpush2.bf16.msra.mxu0 0
        %4759 = vmatprep.subr.bf16.mxu0 0
        %4760 = vmatpush2.bf16.msra.mxu0 0
        %4761 = vmatprep.subr.bf16.mxu0 0
        %4762 = vmatpush2.bf16.msra.mxu0 0
        %4763 = vmatprep.subr.bf16.mxu0 0
        %4764 = vmatpush2.bf16.msra.mxu0 0
        %4765 = vmatprep.subr.bf16.mxu0 0
        %4766 = vmatpush2.bf16.msra.mxu0 0
        %4767 = vmatprep.subr.bf16.mxu0 0
        %4768 = vmatpush2.bf16.msra.mxu0 0
        %4769 = vmatprep.subr.bf16.mxu0 0
        %4770 = vmatpush2.bf16.msra.mxu0 0
        %4771 = vmatprep.subr.bf16.mxu0 0
        %4772 = vmatpush2.bf16.msra.mxu0 0
        %4773 = vmatprep.mubr.bf16.mxu0 0
        %4774 = vmatmul.mubr.bf16.gmra.mxu0 %v4739
        %v4775 = vpop.f32.mrf.mxu0
        %v4776 = vadd.f32 %v4733, %v4775
        %v4777 = vpop.f32.mrf.mxu0
        %v4778 = vpop.f32.mrf.mxu0
        %v4779 = vpop.f32.mrf.mxu0
        %4780 = vdwg.mxu0
        %v4781 = vld [vmem:[#allocation3 + $0x3b8] sm:$0x7]
        %4782 = vrot.lane.b32.xlu0 %v4681, 126
        %v4783 = vpop.permute.xlu0 %4782
        %4784 = vrot.lane.b32.xlu0 %v4685, 126
        %v4785 = vpop.permute.xlu0 %4784
        %v4786 = vsel %vm461, %v4783, %v4785
        %v4789 = vsel %vm700, %v4781, 0
        %4791 = vmatprep.subr.bf16.mxu0 0
        %4792 = vmatpush1.bf16.msra.mxu0 0
        %4793 = vmatprep.subr.bf16.mxu0 0
        %4794 = vmatpush1.bf16.msra.mxu0 0
        %4795 = vmatprep.subr.bf16.mxu0 0
        %4796 = vmatpush1.bf16.msra.mxu0 0
        %4797 = vmatprep.subr.bf16.mxu0 0
        %4798 = vmatpush1.bf16.msra.mxu0 0
        %4799 = vmatprep.subr.bf16.mxu0 0
        %4800 = vmatpush1.bf16.msra.mxu0 0
        %4801 = vmatprep.subr.bf16.mxu0 0
        %4802 = vmatpush1.bf16.msra.mxu0 0
        %4803 = vmatprep.subr.bf16.mxu0 0
        %4804 = vmatpush1.bf16.msra.mxu0 0
        %4805 = vmatprep.subr.bf16.mxu0 0
        %4806 = vmatpush1.bf16.msra.mxu0 %v4786
        %4807 = vmatprep.subr.bf16.mxu0 0
        %4808 = vmatpush2.bf16.msra.mxu0 0
        %4809 = vmatprep.subr.bf16.mxu0 0
        %4810 = vmatpush2.bf16.msra.mxu0 0
        %4811 = vmatprep.subr.bf16.mxu0 0
        %4812 = vmatpush2.bf16.msra.mxu0 0
        %4813 = vmatprep.subr.bf16.mxu0 0
        %4814 = vmatpush2.bf16.msra.mxu0 0
        %4815 = vmatprep.subr.bf16.mxu0 0
        %4816 = vmatpush2.bf16.msra.mxu0 0
        %4817 = vmatprep.subr.bf16.mxu0 0
        %4818 = vmatpush2.bf16.msra.mxu0 0
        %4819 = vmatprep.subr.bf16.mxu0 0
        %4820 = vmatpush2.bf16.msra.mxu0 0
        %4821 = vmatprep.subr.bf16.mxu0 0
        %4822 = vmatpush2.bf16.msra.mxu0 0
        %4823 = vmatprep.mubr.bf16.mxu0 0
        %4824 = vmatmul.mubr.bf16.gmra.mxu0 %v4789
        %v4825 = vpop.f32.mrf.mxu0
        %v4826 = vadd.f32 0.0, %v4825
        %v4827 = vpop.f32.mrf.mxu0
        %v4828 = vpop.f32.mrf.mxu0
        %v4829 = vpop.f32.mrf.mxu0
        %4830 = vdwg.mxu0
        %v4831 = vadd.f32 %v4776, %v4826
        %v4832 = vld [vmem:[#allocation7 + $0x140] sm:$0x3f]
        %4834 = vset.pattern.permute.xlu0 0
        %4835 = vperm.xlu0 %4834, %v4832
        %v4836 = vpop.permute.xlu0 %4835
        %v4838 = vadd.f32 %v4831, %v4836
        %4839 = vst [vmem:[%s310] sm:$0x3f] %v4838
        %v4840 = vld [vmem:[#allocation3 + $0x3c0] sm:$0xf]
        %v4841 = vld [vmem:[#allocation3 + $0x3c4] sm:$0xf]
        %v4842 = vld [vmem:[#allocation7 + $0x148] sm:$0x1]
        %v4845 = vunpack.c.l.b16 %v4840
        %v4846 = vunpack.c.l.b16 %v4841
        %v4847 = vpack.c.b16 %v4846, %v4845
        %4849 = vmatprep.subr.bf16.mxu0 0
        %4850 = vmatpush1.bf16.msra.mxu0 0
        %4851 = vmatprep.subr.bf16.mxu0 0
        %4852 = vmatpush1.bf16.msra.mxu0 0
        %4853 = vmatprep.subr.bf16.mxu0 0
        %4854 = vmatpush1.bf16.msra.mxu0 0
        %4855 = vmatprep.subr.bf16.mxu0 0
        %4856 = vmatpush1.bf16.msra.mxu0 0
        %4857 = vmatprep.subr.bf16.mxu0 0
        %4858 = vmatpush1.bf16.msra.mxu0 0
        %4859 = vmatprep.subr.bf16.mxu0 0
        %4860 = vmatpush1.bf16.msra.mxu0 0
        %4861 = vmatprep.subr.bf16.mxu0 0
        %4862 = vmatpush1.bf16.msra.mxu0 0
        %4863 = vmatprep.subr.bf16.mxu0 0
        %4864 = vmatpush1.bf16.msra.mxu0 %v4847
        %4865 = vmatprep.subr.bf16.mxu0 0
        %4866 = vmatpush2.bf16.msra.mxu0 0
        %4867 = vmatprep.subr.bf16.mxu0 0
        %4868 = vmatpush2.bf16.msra.mxu0 0
        %4869 = vmatprep.subr.bf16.mxu0 0
        %4870 = vmatpush2.bf16.msra.mxu0 0
        %4871 = vmatprep.subr.bf16.mxu0 0
        %4872 = vmatpush2.bf16.msra.mxu0 0
        %4873 = vmatprep.subr.bf16.mxu0 0
        %4874 = vmatpush2.bf16.msra.mxu0 0
        %4875 = vmatprep.subr.bf16.mxu0 0
        %4876 = vmatpush2.bf16.msra.mxu0 0
        %4877 = vmatprep.subr.bf16.mxu0 0
        %4878 = vmatpush2.bf16.msra.mxu0 0
        %4879 = vmatprep.subr.bf16.mxu0 0
        %4880 = vmatpush2.bf16.msra.mxu0 0
        %4881 = vmatprep.mubr.bf16.mxu0 0
        %4882 = vmatmul.mubr.bf16.gmra.mxu0 %v3664
        %v4883 = vpop.f32.mrf.mxu0
        %v4884 = vadd.f32 %v4842, %v4883
        %v4885 = vpop.f32.mrf.mxu0
        %v4886 = vpop.f32.mrf.mxu0
        %v4887 = vpop.f32.mrf.mxu0
        %4888 = vdwg.mxu0
        %vm4889 = vcmp.ge.f32.partialorder %v4884, 0.0
        %v4890 = vmul.f32 %v4884, 0.01
        %v4891 = vsel %vm4889, %v4884, %v4890
        %v4892 = vpack.c.bf16 %v4891, %v4891
        %v4893 = vld [vmem:[#allocation3 + $0x3c8] sm:$0xf]
        %v4894 = vld [vmem:[#allocation3 + $0x3cc] sm:$0xf]
        %v4895 = vld [vmem:[#allocation3 + $0x3d0] sm:$0xf]
        %v4896 = vld [vmem:[#allocation3 + $0x3d4] sm:$0xf]
        %v4897 = vld [vmem:[#allocation7 + $0x150] sm:$0x1]
        %v4902 = vunpack.c.l.b16 %v4893
        %v4903 = vunpack.c.l.b16 %v4894
        %v4904 = vunpack.c.l.b16 %v4895
        %v4905 = vunpack.c.l.b16 %v4896
        %v4906 = vpack.c.b16 %v4903, %v4902
        %v4907 = vpack.c.b16 %v4905, %v4904
        %v4911 = vsel %vm1129, %v4892, 0
        %4913 = vmatprep.subr.bf16.mxu0 0
        %4914 = vmatpush1.bf16.msra.mxu0 0
        %4915 = vmatprep.subr.bf16.mxu0 0
        %4916 = vmatpush1.bf16.msra.mxu0 0
        %4917 = vmatprep.subr.bf16.mxu0 0
        %4918 = vmatpush1.bf16.msra.mxu0 0
        %4919 = vmatprep.subr.bf16.mxu0 0
        %4920 = vmatpush1.bf16.msra.mxu0 0
        %4921 = vmatprep.subr.bf16.mxu0 0
        %4922 = vmatpush1.bf16.msra.mxu0 0
        %4923 = vmatprep.subr.bf16.mxu0 0
        %4924 = vmatpush1.bf16.msra.mxu0 0
        %4925 = vmatprep.subr.bf16.mxu0 0
        %4926 = vmatpush1.bf16.msra.mxu0 %v4907
        %4927 = vmatprep.subr.bf16.mxu0 0
        %4928 = vmatpush1.bf16.msra.mxu0 %v4906
        %4929 = vmatprep.subr.bf16.mxu0 0
        %4930 = vmatpush2.bf16.msra.mxu0 0
        %4931 = vmatprep.subr.bf16.mxu0 0
        %4932 = vmatpush2.bf16.msra.mxu0 0
        %4933 = vmatprep.subr.bf16.mxu0 0
        %4934 = vmatpush2.bf16.msra.mxu0 0
        %4935 = vmatprep.subr.bf16.mxu0 0
        %4936 = vmatpush2.bf16.msra.mxu0 0
        %4937 = vmatprep.subr.bf16.mxu0 0
        %4938 = vmatpush2.bf16.msra.mxu0 0
        %4939 = vmatprep.subr.bf16.mxu0 0
        %4940 = vmatpush2.bf16.msra.mxu0 0
        %4941 = vmatprep.subr.bf16.mxu0 0
        %4942 = vmatpush2.bf16.msra.mxu0 0
        %4943 = vmatprep.subr.bf16.mxu0 0
        %4944 = vmatpush2.bf16.msra.mxu0 0
        %4945 = vmatprep.mubr.bf16.mxu0 0
        %4946 = vmatmul.mubr.bf16.gmra.mxu0 %v4911
        %v4947 = vpop.f32.mrf.mxu0
        %v4948 = vadd.f32 %v4897, %v4947
        %v4949 = vpop.f32.mrf.mxu0
        %v4950 = vpop.f32.mrf.mxu0
        %v4951 = vpop.f32.mrf.mxu0
        %4952 = vdwg.mxu0
        %vm4953 = vcmask 57344
        %v4954 = vsel %vm4953, %v4948, -inf
        %4955 = vmax.xlane.f32.xlu0 %v4954
        %v4956 = vpop.xlane.xlu0 %4955
        %v4957 = vsub.f32 %v4948, %v4956
        %v4958 = vmul.f32 %v4957, 1.442695
        %v4959 = vpow.pop %v4958
        %v4960 = vsel %vm4953, %v4959, 0.0
        %4961 = vadd.xlane.f32.xlu0 %v4960
        %v4962 = vpop.xlane.xlu0 %4961
        %v4963 = vrcp.pop %v4962
        %v4964 = vmul.f32 %v4959, %v4963
        %4965 = vst [vmem:[%s313] sm:$0x1] 0.0
        %vm4966 = vcmask 122880
        %4967 = vst.msk [vmem:[%s313] sm:$0x1] %vm4966, %v3618
        %vm4968 = vcmask 254080
        %4969 = vst.msk [vmem:[%s313] sm:$0x1] %vm4968, %v3618
        %4971 = vrot.lane.b32.xlu0 %v4964, 32
        %v4972 = vpop.permute.xlu0 %4971
        %vm4974 = vcmask 319744
        %4975 = vst.msk [vmem:[%s313] sm:$0x1] %vm4974, %v4972
        %p4976 = scmp.lt.s32.totalorder %s20, 1
        %s4977 = scalar_select %p4976, %s20, 1
        %s4978 = smul.addr %s4977, 8
        %s4979 = scalar_lea.vmem %s5, %s4978
        %p4980 = scmp.lt.s32.totalorder %s20, 1
        %s4981 = scalar_select %p4980, %s20, 1
        %s4982 = scalar_lea.vmem %s6, %s4981
        // Predicated region
        $region53: #{forward.1} parent=39 // pred_check
          %p4983 = pneg %p153
        $region54: #{forward.1} parent=39 // pred_check_branch
          %4985 = sbr.rel (%p4983) target = $region56
        $region55: #{forward.1} parent=39 // pred_region
          _
        $region56: #{forward.1} parent=39 // pred_fallthru
          _
        // Predicated region
        $region57: #{forward.1} parent=39 // pred_check
          %p4986 = pneg %p179
        $region58: #{forward.1} parent=39 // pred_check_branch
          %4988 = sbr.rel (%p4986) target = $region60
        $region59: #{forward.1} parent=39 // pred_region
          _
        $region60: #{forward.1} parent=39 // pred_fallthru
          _
      $region40: #{forward.1} parent=5 // pred_fallthru
        _
      %p4989 = scmp.le.s32.totalorder 2, %s15
      // Predicated region
      $region61: #{forward.1} parent=5 // pred_check
        %p4990 = pneg %p4989
      $region62: #{forward.1} parent=5 // pred_check_branch
        %4992 = sbr.rel (%p4990) target = $region64
      $region63: #{forward.1} parent=5 // pred_region
        %s4993 = ssub.s32 %s15, 2
        // Predicated region
        $region65: #{forward.1} parent=63 // pred_check
          %p4994 = pneg %p159
        $region66: #{forward.1} parent=63 // pred_check_branch
          %4996 = sbr.rel (%p4994) target = $region68
        $region67: #{forward.1} parent=63 // pred_region
          %p4997 = scmp.lt.s32.totalorder %s21, 1
          %s4998 = scalar_select %p4997, %s21, 1
          %s4999 = smul.addr %s4998, 8
          %s5000 = scalar_lea.vmem %s5, %s4999
        $region68: #{forward.1} parent=63 // pred_fallthru
          _
        // Predicated region
        $region69: #{forward.1} parent=63 // pred_check
          %p5001 = pneg %p185
        $region70: #{forward.1} parent=63 // pred_check_branch
          %5003 = sbr.rel (%p5001) target = $region72
        $region71: #{forward.1} parent=63 // pred_region
          %p5004 = scmp.lt.s32.totalorder %s21, 1
          %s5005 = scalar_select %p5004, %s21, 1
          %s5006 = scalar_lea.vmem %s6, %s5005
        $region72: #{forward.1} parent=63 // pred_fallthru
          _
      $region64: #{forward.1} parent=5 // pred_fallthru
        _
    $region6: #{forward.1} parent=1 // loop_footer
      %s19 = sadd.s32 1, %s15
    $region7: #{forward.1} parent=1 // loop_footer_branch
      %14 = sbr.rel target = $region3
    $region8: #{forward.1} parent=1 // loop_exit
      _
    %5007 = vsyncpa [#allocation4], 1
    %s5008 = scalar_lea.sflag [#allocation4], 1
    %5009 = vsyncpa %s5008, 1
    %5010 = vsyncpa [#allocation6], 1

</llo_original>
